<compile_context>
chip_gen: v7x
topology: tpu7x:2x2x1
jax: 0.10.0
libtpu: 0.0.40
codegen_flags: <defaults>
</compile_context>

<pallas_src>
import math
import numpy as np
import jax
import jax.numpy as jnp
from jax.experimental import pallas as pl
from jax.experimental.pallas import tpu as pltpu

# ----------------------------- small ViT-MAE config -----------------------------
IMG = 16
PATCH = 4
CHANNELS = 3
HIDDEN = 32
HEADS = 4
HEAD_DIM = HIDDEN // HEADS
LAYERS = 2
INTERMEDIATE = 64
N_CLASS = 5
BATCH = 2
LN_EPS = 1e-12                         # ViTMAEConfig default layer_norm_eps

GRID_SZ = IMG // PATCH
NUM_PATCHES = GRID_SZ * GRID_SZ        # 16
SEQ = NUM_PATCHES + 1                  # 17 (CLS + patches)
SEQ_P = 24                             # padded sequence (sublane multiple of 8)
PAD_TOKENS = SEQ_P - SEQ               # 7
ROWS = BATCH * SEQ_P                   # 48 (batch folded onto sublanes)
PATCH_DIM = CHANNELS * PATCH * PATCH   # 48
LANES = 128                            # slab / output lane width
NEG_INF = -1e9

F32 = jnp.float32
BF16 = jnp.bfloat16


# ----------------------------- parameter slab layouts -----------------------------
def _build_layout(entries):
    """entries: (name, n_rows, n_cols, row_align) -> dict name -> (row_off, nr, nc)."""
    layout, off = {}, 0
    for name, nrows, ncols, align in entries:
        off = ((off + align - 1) // align) * align
        layout[name] = (off, nrows, ncols)
        off += nrows
    total = ((off + 7) // 8) * 8
    return layout, total


_W_ENTRIES = [("patch_w", PATCH_DIM, HIDDEN, 16)]
for _l in range(LAYERS):
    _W_ENTRIES += [
        (f"wqv_{_l}", HIDDEN, 2 * HIDDEN, 16),        # [Wq*scale | Wv], head-major cols
        (f"wkT_{_l}", HIDDEN, HIDDEN, 16),            # Wk^T (pre-transposed K proj)
        (f"wo_{_l}", HIDDEN, HIDDEN, 16),
        (f"wi_{_l}", HIDDEN, INTERMEDIATE, 16),
        (f"wp_{_l}", INTERMEDIATE, HIDDEN, 16),
    ]
_W_ENTRIES += [("out_w", HIDDEN, LANES, 16)]          # head weights zero-padded to 128 lanes
W_LAYOUT, W_ROWS = _build_layout(_W_ENTRIES)

_V_ENTRIES = []
for _l in range(LAYERS):
    _V_ENTRIES += [
        (f"ln1_g_{_l}", 1, HIDDEN, 1), (f"ln1_b_{_l}", 1, HIDDEN, 1),
        (f"bqv_{_l}", 1, 2 * HIDDEN, 1),
        (f"bo_{_l}", 1, HIDDEN, 1),
        (f"ln2_g_{_l}", 1, HIDDEN, 1), (f"ln2_b_{_l}", 1, HIDDEN, 1),
        (f"bi_{_l}", 1, INTERMEDIATE, 1),
        (f"bp_{_l}", 1, HIDDEN, 1),
    ]
_V_ENTRIES += [
    ("final_ln_g", 1, HIDDEN, 1), ("final_ln_b", 1, HIDDEN, 1),
    ("out_b", 1, LANES, 1),
    ("bk_cols", HIDDEN, LAYERS, 8),                   # column l = layer-l K bias (as a column)
    ("pool", BATCH, ROWS, 8),                         # masked mean-pool matrix
    ("biaspos", ROWS, HIDDEN, 8),                     # CLS token + sin-cos pos (batch-tiled)
    ("attn_mask", ROWS, ROWS, 8),                     # block-diagonal + pad-key mask
]
V_LAYOUT, V_ROWS = _build_layout(_V_ENTRIES)


def _w(ref, name):
    off, nr, nc = W_LAYOUT[name]
    return ref[off:off + nr, 0:nc]


def _v(ref, name):
    off, nr, nc = V_LAYOUT[name]
    return ref[off:off + nr, 0:nc]


# ----------------------------- in-kernel helpers -----------------------------
def _layernorm(x, g, b):
    mu = jnp.mean(x, axis=-1, keepdims=True)
    var = jnp.mean((x - mu) ** 2, axis=-1, keepdims=True)
    return (x - mu) * jax.lax.rsqrt(var + LN_EPS) * g + b


# ----------------------------- fused kernel -----------------------------
def fused_vit_kernel(patches_ref, w_ref, v_ref, out_ref):
    # Patch embedding (pad/CLS rows of `patches` are zero; biaspos supplies CLS token,
    # positional embeddings and zeros for pad rows).
    x = jnp.dot(patches_ref[...].astype(BF16), _w(w_ref, "patch_w"),
                preferred_element_type=F32) + _v(v_ref, "biaspos")       # (48, 32) f32

    mask = _v(v_ref, "attn_mask")                                        # (48, 48) f32
    bk_off = V_LAYOUT["bk_cols"][0]

    for l in range(LAYERS):                                   # static layer loop
        # ---------------- attention (pre-LN) ----------------
        h1 = _layernorm(x, _v(v_ref, f"ln1_g_{l}"), _v(v_ref, f"ln1_b_{l}"))
        h1b = h1.astype(BF16)

        # fused Q/V projection: one 64-wide dot (1/sqrt(Dh) folded into Wq, bq)
        qv = jnp.dot(h1b, _w(w_ref, f"wqv_{l}"),
                     preferred_element_type=F32) + _v(v_ref, f"bqv_{l}")  # (48, 64)

        # K emitted pre-transposed: kT = Wk^T @ h1^T  -> (HIDDEN, ROWS)
        h1t = jnp.transpose(h1).astype(BF16)                              # (32, 48)
        kt = jnp.dot(_w(w_ref, f"wkT_{l}"), h1t,
                     preferred_element_type=F32) \
             + v_ref[bk_off:bk_off + HIDDEN, l:l + 1]                     # (32, 48)

        ctx_heads = []
        for h in range(HEADS):                                # static head loop
            q_h = qv[:, h * HEAD_DIM:(h + 1) * HEAD_DIM]                  # (48, 8)
            v_h = qv[:, HIDDEN + h * HEAD_DIM:HIDDEN + (h + 1) * HEAD_DIM]
            kt_h = kt[h * HEAD_DIM:(h + 1) * HEAD_DIM, :]                 # (8, 48)

            s = jnp.dot(q_h.astype(BF16), kt_h.astype(BF16),
                        preferred_element_type=F32) + mask                # (48, 48)
            s = s - jnp.max(s, axis=-1, keepdims=True)
            p = jnp.exp(s)
            p = p * pl.reciprocal(jnp.sum(p, axis=-1, keepdims=True), approx=False)
            ctx_heads.append(jnp.dot(p.astype(BF16), v_h.astype(BF16),
                                     preferred_element_type=F32))         # (48, 8)

        ctx = jnp.concatenate(ctx_heads, axis=1)                          # (48, 32)
        attn = jnp.dot(ctx.astype(BF16), _w(w_ref, f"wo_{l}"),
                       preferred_element_type=F32) + _v(v_ref, f"bo_{l}")
        x = x + attn                                                      # residual 1

        # ---------------- MLP (pre-LN) ----------------
        h2 = _layernorm(x, _v(v_ref, f"ln2_g_{l}"), _v(v_ref, f"ln2_b_{l}"))
        m = jnp.dot(h2.astype(BF16), _w(w_ref, f"wi_{l}"),
                    preferred_element_type=F32) + _v(v_ref, f"bi_{l}")
        m = jax.nn.gelu(m, approximate=True)
        m = jnp.dot(m.astype(BF16), _w(w_ref, f"wp_{l}"),
                    preferred_element_type=F32) + _v(v_ref, f"bp_{l}")
        x = x + m                                                         # residual 2

    # final LayerNorm -> masked mean-pool over real patch rows -> lane-dense head
    hN = _layernorm(x, _v(v_ref, "final_ln_g"), _v(v_ref, "final_ln_b"))  # (48, 32)
    pooled = jnp.dot(_v(v_ref, "pool"), hN, preferred_element_type=F32)   # (B, 32)
    out_ref[...] = (jnp.dot(pooled.astype(BF16), _w(w_ref, "out_w"),
                            preferred_element_type=F32) + _v(v_ref, "out_b"))  # (B, 128)


# ----------------------------- pallas_call wrapper -----------------------------
def fused_forward(patch_tokens, w_slab, v_slab):
    out = pl.pallas_call(
        fused_vit_kernel,
        out_shape=jax.ShapeDtypeStruct((BATCH, LANES), jnp.float32),
        in_specs=[pl.BlockSpec(memory_space=pltpu.MemorySpace.VMEM)] * 3,
        out_specs=pl.BlockSpec(memory_space=pltpu.MemorySpace.VMEM),
    )(patch_tokens, w_slab, v_slab)
    return out[:, :N_CLASS]                                               # (B, n_class)


# ----------------------------- JAX / host glue -----------------------------
def extract_patches(x):
    """NCHW -> (B, num_patches, C*ph*pw) with torch-Conv2d (c, ph, pw) flattening order."""
    B = x.shape[0]
    x = x.reshape(B, CHANNELS, GRID_SZ, PATCH, GRID_SZ, PATCH)
    x = x.transpose(0, 2, 4, 1, 3, 5)                       # (B, gh, gw, C, ph, pw)
    return x.reshape(B, NUM_PATCHES, PATCH_DIM)


def make_padded_tokens(patches):
    """Prepend a zero CLS row and append zero pad rows, flatten batch onto sublanes."""
    B = patches.shape[0]
    tok = jnp.concatenate([jnp.zeros((B, 1, PATCH_DIM), patches.dtype),
                           patches,
                           jnp.zeros((B, PAD_TOKENS, PATCH_DIM), patches.dtype)], axis=1)
    return tok.reshape(B * SEQ_P, PATCH_DIM)                              # (48, 48)


def get_2d_sincos_pos_embed(embed_dim, grid_size):
    """MAE-style fixed 2D sin-cos positional embedding (no CLS row; CLS pos = 0)."""
    def get_1d(dim, pos):
        omega = np.arange(dim // 2, dtype=np.float64) / (dim / 2.0)
        omega = 1.0 / (10000.0 ** omega)
        out = np.einsum("m,d->md", pos.reshape(-1), omega)
        return np.concatenate([np.sin(out), np.cos(out)], axis=1)
    gh = np.arange(grid_size, dtype=np.float64)
    gw = np.arange(grid_size, dtype=np.float64)
    grid = np.stack(np.meshgrid(gw, gh), axis=0).reshape(2, -1)
    emb = np.concatenate([get_1d(embed_dim // 2, grid[0]),
                          get_1d(embed_dim // 2, grid[1])], axis=1)
    return emb.astype(np.float32)                            # (num_patches, embed_dim)


def _pack_slab(layout, total_rows, values):
    slab = np.zeros((total_rows, LANES), dtype=np.float32)
    for name, (off, nr, nc) in layout.items():
        v = np.asarray(values[name], dtype=np.float32)
        assert v.shape == (nr, nc), (name, v.shape, (nr, nc))
        slab[off:off + nr, :nc] = v
    return slab


def init_params(key):
    keys = iter(jax.random.split(key, 32))
    std = 0.02

    def rnd(shape, scale=1.0):
        return np.asarray((std * scale) *
                          jax.random.normal(next(keys), shape, dtype=jnp.float32))

    qk_scale = 1.0 / math.sqrt(HEAD_DIM)

    # ---- bf16 weight slab ----
    w_vals = {"patch_w": rnd((PATCH_DIM, HIDDEN))}
    for l in range(LAYERS):
        wq = rnd((HIDDEN, HIDDEN)) * qk_scale            # 1/sqrt(Dh) folded in
        wv = rnd((HIDDEN, HIDDEN))
        w_vals[f"wqv_{l}"] = np.concatenate([wq, wv], axis=1)
        w_vals[f"wkT_{l}"] = rnd((HIDDEN, HIDDEN))        # stored transposed
        w_vals[f"wo_{l}"] = rnd((HIDDEN, HIDDEN))
        w_vals[f"wi_{l}"] = rnd((HIDDEN, INTERMEDIATE))
        w_vals[f"wp_{l}"] = rnd((INTERMEDIATE, HIDDEN))
    out_w = np.zeros((HIDDEN, LANES), dtype=np.float32)
    out_w[:, :N_CLASS] = rnd((HIDDEN, N_CLASS))
    w_vals["out_w"] = out_w
    w_slab = jnp.asarray(_pack_slab(W_LAYOUT, W_ROWS, w_vals)).astype(BF16)

    # ---- f32 vector / table slab ----
    v_vals = {}
    for l in range(LAYERS):
        v_vals[f"ln1_g_{l}"] = np.ones((1, HIDDEN), np.float32)
        v_vals[f"ln1_b_{l}"] = np.zeros((1, HIDDEN), np.float32)
        v_vals[f"bqv_{l}"] = np.zeros((1, 2 * HIDDEN), np.float32)  # [bq*scale | bv]
        v_vals[f"bo_{l}"] = np.zeros((1, HIDDEN), np.float32)
        v_vals[f"ln2_g_{l}"] = np.ones((1, HIDDEN), np.float32)
        v_vals[f"ln2_b_{l}"] = np.zeros((1, HIDDEN), np.float32)
        v_vals[f"bi_{l}"] = np.zeros((1, INTERMEDIATE), np.float32)
        v_vals[f"bp_{l}"] = np.zeros((1, HIDDEN), np.float32)
    v_vals["final_ln_g"] = np.ones((1, HIDDEN), np.float32)
    v_vals["final_ln_b"] = np.zeros((1, HIDDEN), np.float32)
    v_vals["out_b"] = np.zeros((1, LANES), np.float32)
    v_vals["bk_cols"] = np.zeros((HIDDEN, LAYERS), np.float32)

    pool = np.zeros((BATCH, ROWS), np.float32)
    for b in range(BATCH):
        pool[b, b * SEQ_P + 1:b * SEQ_P + SEQ] = 1.0 / NUM_PATCHES        # skip CLS & pads
    v_vals["pool"] = pool

    pos = get_2d_sincos_pos_embed(HIDDEN, GRID_SZ)                        # (16, 32)
    cls_tok = rnd((1, HIDDEN))                                            # CLS (pos emb = 0)
    block = np.zeros((SEQ_P, HIDDEN), np.float32)
    block[0:1, :] = cls_tok
    block[1:SEQ, :] = pos                                                 # patch bias = 0
    v_vals["biaspos"] = np.tile(block, (BATCH, 1))                        # (48, 32)

    attn_mask = np.full((ROWS, ROWS), NEG_INF, dtype=np.float32)
    for b in range(BATCH):
        r0 = b * SEQ_P
        attn_mask[r0:r0 + SEQ_P, r0:r0 + SEQ] = 0.0      # same sample, real key only
    v_vals["attn_mask"] = attn_mask

    v_slab = jnp.asarray(_pack_slab(V_LAYOUT, V_ROWS, v_vals))
    return w_slab, v_slab


@jax.jit
def custom_model_forward(x, w_slab, v_slab):
    """Equivalent of CustomModel.forward in the 'finetune' stage."""
    patches = extract_patches(x)                                          # (B, P, C*p*p)
    # ViTMAE random_masking with mask_ratio=0.0 only permutes patch tokens; identity
    # permutation used (mean-pooled logits are permutation-invariant).
    tokens = make_padded_tokens(patches)                                  # (B*SEQ_P, C*p*p)
    return fused_forward(tokens, w_slab, v_slab)                          # (B, n_class)


if __name__ == "__main__":
    key = jax.random.PRNGKey(0)
    pkey, xkey = jax.random.split(key)
    w_slab, v_slab = init_params(pkey)
    x = jax.random.normal(xkey, (BATCH, CHANNELS, IMG, IMG), dtype=jnp.float32)

    logits = custom_model_forward(x, w_slab, v_slab)
    jax.block_until_ready(logits)
    assert logits.shape == (BATCH, N_CLASS) and logits.dtype == jnp.float32
    assert bool(jnp.all(jnp.isfinite(logits)))
    print("KERNEL_OK")
</pallas_src>

<mosaic_0001>
module attributes {stable_mosaic.version = 11 : i64} {
  func.func @fused_vit_kernel(%arg0: memref<48x48xf32, #tpu.memory_space<vmem>>, %arg1: memref<464x128xbf16, #tpu.memory_space<vmem>>, %arg2: memref<160x128xf32, #tpu.memory_space<vmem>>, %arg3: memref<2x128xf32, #tpu.memory_space<vmem>>) attributes {dimension_semantics = [], scalar_prefetch = 0 : i64, scratch_operands = 0 : i64, tpu.core_type = #tpu.core_type<tc>} {
    %c0 = arith.constant 0 : index
    %c0_0 = arith.constant 0 : index
    %0 = vector.load %arg0[%c0, %c0_0] : memref<48x48xf32, #tpu.memory_space<vmem>>, vector<48x48xf32>
    %1 = arith.truncf %0 : vector<48x48xf32> to vector<48x48xbf16>
    %c0_1 = arith.constant 0 : index
    %c0_2 = arith.constant 0 : index
    %2 = vector.load %arg1[%c0_1, %c0_2] : memref<464x128xbf16, #tpu.memory_space<vmem>>, vector<48x32xbf16>
    %cst = arith.constant dense<0.000000e+00> : vector<48x32xf32>
    %3 = tpu.matmul %1, %2, %cst {dimension_numbers = #tpu.dot_dimension_numbers<[1], [0], [0], [1], [0, 0, 1, 1], [], []>} : vector<48x48xbf16>, vector<48x32xbf16>, vector<48x32xf32> -> vector<48x32xf32>
    %c64 = arith.constant 64 : index
    %c0_3 = arith.constant 0 : index
    %4 = vector.load %arg2[%c64, %c0_3] : memref<160x128xf32, #tpu.memory_space<vmem>>, vector<48x32xf32>
    %5 = arith.addf %3, %4 : vector<48x32xf32>
    %c112 = arith.constant 112 : index
    %c0_4 = arith.constant 0 : index
    %6 = vector.load %arg2[%c112, %c0_4] : memref<160x128xf32, #tpu.memory_space<vmem>>, vector<48x48xf32>
    %c0_5 = arith.constant 0 : index
    %c0_6 = arith.constant 0 : index
    %7 = vector.load %arg2[%c0_5, %c0_6] : memref<160x128xf32, #tpu.memory_space<vmem>>, vector<1x32xf32>
    %c1 = arith.constant 1 : index
    %c0_7 = arith.constant 0 : index
    %8 = vector.load %arg2[%c1, %c0_7] : memref<160x128xf32, #tpu.memory_space<vmem>>, vector<1x32xf32>
    %cst_8 = arith.constant dense<0.000000e+00> : vector<48xf32>
    %9 = vector.multi_reduction <add>, %5, %cst_8 [1] : vector<48x32xf32> to vector<48xf32>
    %10 = vector.shape_cast %9 : vector<48xf32> to vector<48x1xf32>
    %cst_9 = arith.constant 3.200000e+01 : f32
    %11 = vector.broadcast %cst_9 : f32 to vector<48x1xf32>
    %12 = arith.divf %10, %11 : vector<48x1xf32>
    %13 = vector.broadcast %12 : vector<48x1xf32> to vector<48x32xf32>
    %14 = arith.subf %5, %13 : vector<48x32xf32>
    %15 = arith.mulf %14, %14 : vector<48x32xf32>
    %cst_10 = arith.constant dense<0.000000e+00> : vector<48xf32>
    %16 = vector.multi_reduction <add>, %15, %cst_10 [1] : vector<48x32xf32> to vector<48xf32>
    %17 = vector.shape_cast %16 : vector<48xf32> to vector<48x1xf32>
    %cst_11 = arith.constant 3.200000e+01 : f32
    %18 = vector.broadcast %cst_11 : f32 to vector<48x1xf32>
    %19 = arith.divf %17, %18 : vector<48x1xf32>
    %20 = vector.broadcast %12 : vector<48x1xf32> to vector<48x32xf32>
    %21 = arith.subf %5, %20 : vector<48x32xf32>
    %cst_12 = arith.constant 9.99999996E-13 : f32
    %22 = vector.broadcast %cst_12 : f32 to vector<48x1xf32>
    %23 = arith.addf %19, %22 : vector<48x1xf32>
    %24 = math.rsqrt %23 : vector<48x1xf32>
    %25 = vector.broadcast %24 : vector<48x1xf32> to vector<48x32xf32>
    %26 = arith.mulf %21, %25 : vector<48x32xf32>
    %27 = vector.broadcast %7 : vector<1x32xf32> to vector<48x32xf32>
    %28 = arith.mulf %26, %27 : vector<48x32xf32>
    %29 = vector.broadcast %8 : vector<1x32xf32> to vector<48x32xf32>
    %30 = arith.addf %28, %29 : vector<48x32xf32>
    %31 = arith.truncf %30 : vector<48x32xf32> to vector<48x32xbf16>
    %c48 = arith.constant 48 : index
    %c0_13 = arith.constant 0 : index
    %32 = vector.load %arg1[%c48, %c0_13] : memref<464x128xbf16, #tpu.memory_space<vmem>>, vector<32x64xbf16>
    %cst_14 = arith.constant dense<0.000000e+00> : vector<48x64xf32>
    %33 = tpu.matmul %31, %32, %cst_14 {dimension_numbers = #tpu.dot_dimension_numbers<[1], [0], [0], [1], [0, 0, 1, 1], [], []>} : vector<48x32xbf16>, vector<32x64xbf16>, vector<48x64xf32> -> vector<48x64xf32>
    %c2 = arith.constant 2 : index
    %c0_15 = arith.constant 0 : index
    %34 = vector.load %arg2[%c2, %c0_15] : memref<160x128xf32, #tpu.memory_space<vmem>>, vector<1x64xf32>
    %35 = vector.broadcast %34 : vector<1x64xf32> to vector<48x64xf32>
    %36 = arith.addf %33, %35 : vector<48x64xf32>
    %37 = tpu.transpose %30, [1, 0] : vector<48x32xf32> -> vector<32x48xf32>
    %38 = arith.truncf %37 : vector<32x48xf32> to vector<32x48xbf16>
    %c80 = arith.constant 80 : index
    %c0_16 = arith.constant 0 : index
    %39 = vector.load %arg1[%c80, %c0_16] : memref<464x128xbf16, #tpu.memory_space<vmem>>, vector<32x32xbf16>
    %cst_17 = arith.constant dense<0.000000e+00> : vector<32x48xf32>
    %40 = tpu.matmul %39, %38, %cst_17 {dimension_numbers = #tpu.dot_dimension_numbers<[1], [0], [0], [1], [0, 0, 1, 1], [], []>} : vector<32x32xbf16>, vector<32x48xbf16>, vector<32x48xf32> -> vector<32x48xf32>
    %c24 = arith.constant 24 : index
    %c0_18 = arith.constant 0 : index
    %41 = vector.load %arg2[%c24, %c0_18] : memref<160x128xf32, #tpu.memory_space<vmem>>, vector<32x1xf32>
    %42 = vector.broadcast %41 : vector<32x1xf32> to vector<32x48xf32>
    %43 = arith.addf %40, %42 : vector<32x48xf32>
    %44 = vector.extract_strided_slice %36 {offsets = [0, 0], sizes = [48, 8], strides = [1, 1]} : vector<48x64xf32> to vector<48x8xf32>
    %45 = vector.extract_strided_slice %36 {offsets = [0, 32], sizes = [48, 8], strides = [1, 1]} : vector<48x64xf32> to vector<48x8xf32>
    %46 = vector.extract_strided_slice %43 {offsets = [0, 0], sizes = [8, 48], strides = [1, 1]} : vector<32x48xf32> to vector<8x48xf32>
    %47 = arith.truncf %44 : vector<48x8xf32> to vector<48x8xbf16>
    %48 = arith.truncf %46 : vector<8x48xf32> to vector<8x48xbf16>
    %cst_19 = arith.constant dense<0.000000e+00> : vector<48x48xf32>
    %49 = tpu.matmul %47, %48, %cst_19 {dimension_numbers = #tpu.dot_dimension_numbers<[1], [0], [0], [1], [0, 0, 1, 1], [], []>} : vector<48x8xbf16>, vector<8x48xbf16>, vector<48x48xf32> -> vector<48x48xf32>
    %50 = arith.addf %49, %6 : vector<48x48xf32>
    %cst_20 = arith.constant dense<0xFF800000> : vector<48xf32>
    %51 = vector.multi_reduction <maximumf>, %50, %cst_20 [1] : vector<48x48xf32> to vector<48xf32>
    %52 = vector.shape_cast %51 : vector<48xf32> to vector<48x1xf32>
    %53 = vector.broadcast %52 : vector<48x1xf32> to vector<48x48xf32>
    %54 = arith.subf %50, %53 : vector<48x48xf32>
    %55 = math.exp %54 : vector<48x48xf32>
    %cst_21 = arith.constant dense<0.000000e+00> : vector<48xf32>
    %56 = vector.multi_reduction <add>, %55, %cst_21 [1] : vector<48x48xf32> to vector<48xf32>
    %57 = vector.shape_cast %56 : vector<48xf32> to vector<48x1xf32>
    %58 = tpu.reciprocal %57 : vector<48x1xf32> -> vector<48x1xf32>
    %59 = vector.broadcast %58 : vector<48x1xf32> to vector<48x48xf32>
    %60 = arith.mulf %55, %59 : vector<48x48xf32>
    %61 = arith.truncf %60 : vector<48x48xf32> to vector<48x48xbf16>
    %62 = arith.truncf %45 : vector<48x8xf32> to vector<48x8xbf16>
    %cst_22 = arith.constant dense<0.000000e+00> : vector<48x8xf32>
    %63 = tpu.matmul %61, %62, %cst_22 {dimension_numbers = #tpu.dot_dimension_numbers<[1], [0], [0], [1], [0, 0, 1, 1], [], []>} : vector<48x48xbf16>, vector<48x8xbf16>, vector<48x8xf32> -> vector<48x8xf32>
    %64 = vector.extract_strided_slice %36 {offsets = [0, 8], sizes = [48, 8], strides = [1, 1]} : vector<48x64xf32> to vector<48x8xf32>
    %65 = vector.extract_strided_slice %36 {offsets = [0, 40], sizes = [48, 8], strides = [1, 1]} : vector<48x64xf32> to vector<48x8xf32>
    %66 = vector.extract_strided_slice %43 {offsets = [8, 0], sizes = [8, 48], strides = [1, 1]} : vector<32x48xf32> to vector<8x48xf32>
    %67 = arith.truncf %64 : vector<48x8xf32> to vector<48x8xbf16>
    %68 = arith.truncf %66 : vector<8x48xf32> to vector<8x48xbf16>
    %cst_23 = arith.constant dense<0.000000e+00> : vector<48x48xf32>
    %69 = tpu.matmul %67, %68, %cst_23 {dimension_numbers = #tpu.dot_dimension_numbers<[1], [0], [0], [1], [0, 0, 1, 1], [], []>} : vector<48x8xbf16>, vector<8x48xbf16>, vector<48x48xf32> -> vector<48x48xf32>
    %70 = arith.addf %69, %6 : vector<48x48xf32>
    %cst_24 = arith.constant dense<0xFF800000> : vector<48xf32>
    %71 = vector.multi_reduction <maximumf>, %70, %cst_24 [1] : vector<48x48xf32> to vector<48xf32>
    %72 = vector.shape_cast %71 : vector<48xf32> to vector<48x1xf32>
    %73 = vector.broadcast %72 : vector<48x1xf32> to vector<48x48xf32>
    %74 = arith.subf %70, %73 : vector<48x48xf32>
    %75 = math.exp %74 : vector<48x48xf32>
    %cst_25 = arith.constant dense<0.000000e+00> : vector<48xf32>
    %76 = vector.multi_reduction <add>, %75, %cst_25 [1] : vector<48x48xf32> to vector<48xf32>
    %77 = vector.shape_cast %76 : vector<48xf32> to vector<48x1xf32>
    %78 = tpu.reciprocal %77 : vector<48x1xf32> -> vector<48x1xf32>
    %79 = vector.broadcast %78 : vector<48x1xf32> to vector<48x48xf32>
    %80 = arith.mulf %75, %79 : vector<48x48xf32>
    %81 = arith.truncf %80 : vector<48x48xf32> to vector<48x48xbf16>
    %82 = arith.truncf %65 : vector<48x8xf32> to vector<48x8xbf16>
    %cst_26 = arith.constant dense<0.000000e+00> : vector<48x8xf32>
    %83 = tpu.matmul %81, %82, %cst_26 {dimension_numbers = #tpu.dot_dimension_numbers<[1], [0], [0], [1], [0, 0, 1, 1], [], []>} : vector<48x48xbf16>, vector<48x8xbf16>, vector<48x8xf32> -> vector<48x8xf32>
    %84 = vector.extract_strided_slice %36 {offsets = [0, 16], sizes = [48, 8], strides = [1, 1]} : vector<48x64xf32> to vector<48x8xf32>
    %85 = vector.extract_strided_slice %36 {offsets = [0, 48], sizes = [48, 8], strides = [1, 1]} : vector<48x64xf32> to vector<48x8xf32>
    %86 = vector.extract_strided_slice %43 {offsets = [16, 0], sizes = [8, 48], strides = [1, 1]} : vector<32x48xf32> to vector<8x48xf32>
    %87 = arith.truncf %84 : vector<48x8xf32> to vector<48x8xbf16>
    %88 = arith.truncf %86 : vector<8x48xf32> to vector<8x48xbf16>
    %cst_27 = arith.constant dense<0.000000e+00> : vector<48x48xf32>
    %89 = tpu.matmul %87, %88, %cst_27 {dimension_numbers = #tpu.dot_dimension_numbers<[1], [0], [0], [1], [0, 0, 1, 1], [], []>} : vector<48x8xbf16>, vector<8x48xbf16>, vector<48x48xf32> -> vector<48x48xf32>
    %90 = arith.addf %89, %6 : vector<48x48xf32>
    %cst_28 = arith.constant dense<0xFF800000> : vector<48xf32>
    %91 = vector.multi_reduction <maximumf>, %90, %cst_28 [1] : vector<48x48xf32> to vector<48xf32>
    %92 = vector.shape_cast %91 : vector<48xf32> to vector<48x1xf32>
    %93 = vector.broadcast %92 : vector<48x1xf32> to vector<48x48xf32>
    %94 = arith.subf %90, %93 : vector<48x48xf32>
    %95 = math.exp %94 : vector<48x48xf32>
    %cst_29 = arith.constant dense<0.000000e+00> : vector<48xf32>
    %96 = vector.multi_reduction <add>, %95, %cst_29 [1] : vector<48x48xf32> to vector<48xf32>
    %97 = vector.shape_cast %96 : vector<48xf32> to vector<48x1xf32>
    %98 = tpu.reciprocal %97 : vector<48x1xf32> -> vector<48x1xf32>
    %99 = vector.broadcast %98 : vector<48x1xf32> to vector<48x48xf32>
    %100 = arith.mulf %95, %99 : vector<48x48xf32>
    %101 = arith.truncf %100 : vector<48x48xf32> to vector<48x48xbf16>
    %102 = arith.truncf %85 : vector<48x8xf32> to vector<48x8xbf16>
    %cst_30 = arith.constant dense<0.000000e+00> : vector<48x8xf32>
    %103 = tpu.matmul %101, %102, %cst_30 {dimension_numbers = #tpu.dot_dimension_numbers<[1], [0], [0], [1], [0, 0, 1, 1], [], []>} : vector<48x48xbf16>, vector<48x8xbf16>, vector<48x8xf32> -> vector<48x8xf32>
    %104 = vector.extract_strided_slice %36 {offsets = [0, 24], sizes = [48, 8], strides = [1, 1]} : vector<48x64xf32> to vector<48x8xf32>
    %105 = vector.extract_strided_slice %36 {offsets = [0, 56], sizes = [48, 8], strides = [1, 1]} : vector<48x64xf32> to vector<48x8xf32>
    %106 = vector.extract_strided_slice %43 {offsets = [24, 0], sizes = [8, 48], strides = [1, 1]} : vector<32x48xf32> to vector<8x48xf32>
    %107 = arith.truncf %104 : vector<48x8xf32> to vector<48x8xbf16>
    %108 = arith.truncf %106 : vector<8x48xf32> to vector<8x48xbf16>
    %cst_31 = arith.constant dense<0.000000e+00> : vector<48x48xf32>
    %109 = tpu.matmul %107, %108, %cst_31 {dimension_numbers = #tpu.dot_dimension_numbers<[1], [0], [0], [1], [0, 0, 1, 1], [], []>} : vector<48x8xbf16>, vector<8x48xbf16>, vector<48x48xf32> -> vector<48x48xf32>
    %110 = arith.addf %109, %6 : vector<48x48xf32>
    %cst_32 = arith.constant dense<0xFF800000> : vector<48xf32>
    %111 = vector.multi_reduction <maximumf>, %110, %cst_32 [1] : vector<48x48xf32> to vector<48xf32>
    %112 = vector.shape_cast %111 : vector<48xf32> to vector<48x1xf32>
    %113 = vector.broadcast %112 : vector<48x1xf32> to vector<48x48xf32>
    %114 = arith.subf %110, %113 : vector<48x48xf32>
    %115 = math.exp %114 : vector<48x48xf32>
    %cst_33 = arith.constant dense<0.000000e+00> : vector<48xf32>
    %116 = vector.multi_reduction <add>, %115, %cst_33 [1] : vector<48x48xf32> to vector<48xf32>
    %117 = vector.shape_cast %116 : vector<48xf32> to vector<48x1xf32>
    %118 = tpu.reciprocal %117 : vector<48x1xf32> -> vector<48x1xf32>
    %119 = vector.broadcast %118 : vector<48x1xf32> to vector<48x48xf32>
    %120 = arith.mulf %115, %119 : vector<48x48xf32>
    %121 = arith.truncf %120 : vector<48x48xf32> to vector<48x48xbf16>
    %122 = arith.truncf %105 : vector<48x8xf32> to vector<48x8xbf16>
    %cst_34 = arith.constant dense<0.000000e+00> : vector<48x8xf32>
    %123 = tpu.matmul %121, %122, %cst_34 {dimension_numbers = #tpu.dot_dimension_numbers<[1], [0], [0], [1], [0, 0, 1, 1], [], []>} : vector<48x48xbf16>, vector<48x8xbf16>, vector<48x8xf32> -> vector<48x8xf32>
    %124 = tpu.concatenate %63, %83, %103, %123 in 1 : vector<48x8xf32>, vector<48x8xf32>, vector<48x8xf32>, vector<48x8xf32> -> vector<48x32xf32>
    %125 = arith.truncf %124 : vector<48x32xf32> to vector<48x32xbf16>
    %c112_35 = arith.constant 112 : index
    %c0_36 = arith.constant 0 : index
    %126 = vector.load %arg1[%c112_35, %c0_36] : memref<464x128xbf16, #tpu.memory_space<vmem>>, vector<32x32xbf16>
    %cst_37 = arith.constant dense<0.000000e+00> : vector<48x32xf32>
    %127 = tpu.matmul %125, %126, %cst_37 {dimension_numbers = #tpu.dot_dimension_numbers<[1], [0], [0], [1], [0, 0, 1, 1], [], []>} : vector<48x32xbf16>, vector<32x32xbf16>, vector<48x32xf32> -> vector<48x32xf32>
    %c3 = arith.constant 3 : index
    %c0_38 = arith.constant 0 : index
    %128 = vector.load %arg2[%c3, %c0_38] : memref<160x128xf32, #tpu.memory_space<vmem>>, vector<1x32xf32>
    %129 = vector.broadcast %128 : vector<1x32xf32> to vector<48x32xf32>
    %130 = arith.addf %127, %129 : vector<48x32xf32>
    %131 = arith.addf %5, %130 : vector<48x32xf32>
    %c4 = arith.constant 4 : index
    %c0_39 = arith.constant 0 : index
    %132 = vector.load %arg2[%c4, %c0_39] : memref<160x128xf32, #tpu.memory_space<vmem>>, vector<1x32xf32>
    %c5 = arith.constant 5 : index
    %c0_40 = arith.constant 0 : index
    %133 = vector.load %arg2[%c5, %c0_40] : memref<160x128xf32, #tpu.memory_space<vmem>>, vector<1x32xf32>
    %cst_41 = arith.constant dense<0.000000e+00> : vector<48xf32>
    %134 = vector.multi_reduction <add>, %131, %cst_41 [1] : vector<48x32xf32> to vector<48xf32>
    %135 = vector.shape_cast %134 : vector<48xf32> to vector<48x1xf32>
    %cst_42 = arith.constant 3.200000e+01 : f32
    %136 = vector.broadcast %cst_42 : f32 to vector<48x1xf32>
    %137 = arith.divf %135, %136 : vector<48x1xf32>
    %138 = vector.broadcast %137 : vector<48x1xf32> to vector<48x32xf32>
    %139 = arith.subf %131, %138 : vector<48x32xf32>
    %140 = arith.mulf %139, %139 : vector<48x32xf32>
    %cst_43 = arith.constant dense<0.000000e+00> : vector<48xf32>
    %141 = vector.multi_reduction <add>, %140, %cst_43 [1] : vector<48x32xf32> to vector<48xf32>
    %142 = vector.shape_cast %141 : vector<48xf32> to vector<48x1xf32>
    %cst_44 = arith.constant 3.200000e+01 : f32
    %143 = vector.broadcast %cst_44 : f32 to vector<48x1xf32>
    %144 = arith.divf %142, %143 : vector<48x1xf32>
    %145 = vector.broadcast %137 : vector<48x1xf32> to vector<48x32xf32>
    %146 = arith.subf %131, %145 : vector<48x32xf32>
    %cst_45 = arith.constant 9.99999996E-13 : f32
    %147 = vector.broadcast %cst_45 : f32 to vector<48x1xf32>
    %148 = arith.addf %144, %147 : vector<48x1xf32>
    %149 = math.rsqrt %148 : vector<48x1xf32>
    %150 = vector.broadcast %149 : vector<48x1xf32> to vector<48x32xf32>
    %151 = arith.mulf %146, %150 : vector<48x32xf32>
    %152 = vector.broadcast %132 : vector<1x32xf32> to vector<48x32xf32>
    %153 = arith.mulf %151, %152 : vector<48x32xf32>
    %154 = vector.broadcast %133 : vector<1x32xf32> to vector<48x32xf32>
    %155 = arith.addf %153, %154 : vector<48x32xf32>
    %156 = arith.truncf %155 : vector<48x32xf32> to vector<48x32xbf16>
    %c144 = arith.constant 144 : index
    %c0_46 = arith.constant 0 : index
    %157 = vector.load %arg1[%c144, %c0_46] : memref<464x128xbf16, #tpu.memory_space<vmem>>, vector<32x64xbf16>
    %cst_47 = arith.constant dense<0.000000e+00> : vector<48x64xf32>
    %158 = tpu.matmul %156, %157, %cst_47 {dimension_numbers = #tpu.dot_dimension_numbers<[1], [0], [0], [1], [0, 0, 1, 1], [], []>} : vector<48x32xbf16>, vector<32x64xbf16>, vector<48x64xf32> -> vector<48x64xf32>
    %c6 = arith.constant 6 : index
    %c0_48 = arith.constant 0 : index
    %159 = vector.load %arg2[%c6, %c0_48] : memref<160x128xf32, #tpu.memory_space<vmem>>, vector<1x64xf32>
    %160 = vector.broadcast %159 : vector<1x64xf32> to vector<48x64xf32>
    %161 = arith.addf %158, %160 : vector<48x64xf32>
    %162 = arith.mulf %161, %161 : vector<48x64xf32>
    %163 = arith.mulf %161, %162 : vector<48x64xf32>
    %cst_49 = arith.constant 4.471500e-02 : f32
    %164 = vector.broadcast %cst_49 : f32 to vector<48x64xf32>
    %165 = arith.mulf %164, %163 : vector<48x64xf32>
    %166 = arith.addf %161, %165 : vector<48x64xf32>
    %cst_50 = arith.constant 0.797884583 : f32
    %167 = vector.broadcast %cst_50 : f32 to vector<48x64xf32>
    %168 = arith.mulf %167, %166 : vector<48x64xf32>
    %169 = math.tanh %168 : vector<48x64xf32>
    %cst_51 = arith.constant 1.000000e+00 : f32
    %170 = vector.broadcast %cst_51 : f32 to vector<48x64xf32>
    %171 = arith.addf %170, %169 : vector<48x64xf32>
    %cst_52 = arith.constant 5.000000e-01 : f32
    %172 = vector.broadcast %cst_52 : f32 to vector<48x64xf32>
    %173 = arith.mulf %172, %171 : vector<48x64xf32>
    %174 = arith.mulf %161, %173 : vector<48x64xf32>
    %175 = arith.truncf %174 : vector<48x64xf32> to vector<48x64xbf16>
    %c176 = arith.constant 176 : index
    %c0_53 = arith.constant 0 : index
    %176 = vector.load %arg1[%c176, %c0_53] : memref<464x128xbf16, #tpu.memory_space<vmem>>, vector<64x32xbf16>
    %cst_54 = arith.constant dense<0.000000e+00> : vector<48x32xf32>
    %177 = tpu.matmul %175, %176, %cst_54 {dimension_numbers = #tpu.dot_dimension_numbers<[1], [0], [0], [1], [0, 0, 1, 1], [], []>} : vector<48x64xbf16>, vector<64x32xbf16>, vector<48x32xf32> -> vector<48x32xf32>
    %c7 = arith.constant 7 : index
    %c0_55 = arith.constant 0 : index
    %178 = vector.load %arg2[%c7, %c0_55] : memref<160x128xf32, #tpu.memory_space<vmem>>, vector<1x32xf32>
    %179 = vector.broadcast %178 : vector<1x32xf32> to vector<48x32xf32>
    %180 = arith.addf %177, %179 : vector<48x32xf32>
    %181 = arith.addf %131, %180 : vector<48x32xf32>
    %c8 = arith.constant 8 : index
    %c0_56 = arith.constant 0 : index
    %182 = vector.load %arg2[%c8, %c0_56] : memref<160x128xf32, #tpu.memory_space<vmem>>, vector<1x32xf32>
    %c9 = arith.constant 9 : index
    %c0_57 = arith.constant 0 : index
    %183 = vector.load %arg2[%c9, %c0_57] : memref<160x128xf32, #tpu.memory_space<vmem>>, vector<1x32xf32>
    %cst_58 = arith.constant dense<0.000000e+00> : vector<48xf32>
    %184 = vector.multi_reduction <add>, %181, %cst_58 [1] : vector<48x32xf32> to vector<48xf32>
    %185 = vector.shape_cast %184 : vector<48xf32> to vector<48x1xf32>
    %cst_59 = arith.constant 3.200000e+01 : f32
    %186 = vector.broadcast %cst_59 : f32 to vector<48x1xf32>
    %187 = arith.divf %185, %186 : vector<48x1xf32>
    %188 = vector.broadcast %187 : vector<48x1xf32> to vector<48x32xf32>
    %189 = arith.subf %181, %188 : vector<48x32xf32>
    %190 = arith.mulf %189, %189 : vector<48x32xf32>
    %cst_60 = arith.constant dense<0.000000e+00> : vector<48xf32>
    %191 = vector.multi_reduction <add>, %190, %cst_60 [1] : vector<48x32xf32> to vector<48xf32>
    %192 = vector.shape_cast %191 : vector<48xf32> to vector<48x1xf32>
    %cst_61 = arith.constant 3.200000e+01 : f32
    %193 = vector.broadcast %cst_61 : f32 to vector<48x1xf32>
    %194 = arith.divf %192, %193 : vector<48x1xf32>
    %195 = vector.broadcast %187 : vector<48x1xf32> to vector<48x32xf32>
    %196 = arith.subf %181, %195 : vector<48x32xf32>
    %cst_62 = arith.constant 9.99999996E-13 : f32
    %197 = vector.broadcast %cst_62 : f32 to vector<48x1xf32>
    %198 = arith.addf %194, %197 : vector<48x1xf32>
    %199 = math.rsqrt %198 : vector<48x1xf32>
    %200 = vector.broadcast %199 : vector<48x1xf32> to vector<48x32xf32>
    %201 = arith.mulf %196, %200 : vector<48x32xf32>
    %202 = vector.broadcast %182 : vector<1x32xf32> to vector<48x32xf32>
    %203 = arith.mulf %201, %202 : vector<48x32xf32>
    %204 = vector.broadcast %183 : vector<1x32xf32> to vector<48x32xf32>
    %205 = arith.addf %203, %204 : vector<48x32xf32>
    %206 = arith.truncf %205 : vector<48x32xf32> to vector<48x32xbf16>
    %c240 = arith.constant 240 : index
    %c0_63 = arith.constant 0 : index
    %207 = vector.load %arg1[%c240, %c0_63] : memref<464x128xbf16, #tpu.memory_space<vmem>>, vector<32x64xbf16>
    %cst_64 = arith.constant dense<0.000000e+00> : vector<48x64xf32>
    %208 = tpu.matmul %206, %207, %cst_64 {dimension_numbers = #tpu.dot_dimension_numbers<[1], [0], [0], [1], [0, 0, 1, 1], [], []>} : vector<48x32xbf16>, vector<32x64xbf16>, vector<48x64xf32> -> vector<48x64xf32>
    %c10 = arith.constant 10 : index
    %c0_65 = arith.constant 0 : index
    %209 = vector.load %arg2[%c10, %c0_65] : memref<160x128xf32, #tpu.memory_space<vmem>>, vector<1x64xf32>
    %210 = vector.broadcast %209 : vector<1x64xf32> to vector<48x64xf32>
    %211 = arith.addf %208, %210 : vector<48x64xf32>
    %212 = tpu.transpose %205, [1, 0] : vector<48x32xf32> -> vector<32x48xf32>
    %213 = arith.truncf %212 : vector<32x48xf32> to vector<32x48xbf16>
    %c272 = arith.constant 272 : index
    %c0_66 = arith.constant 0 : index
    %214 = vector.load %arg1[%c272, %c0_66] : memref<464x128xbf16, #tpu.memory_space<vmem>>, vector<32x32xbf16>
    %cst_67 = arith.constant dense<0.000000e+00> : vector<32x48xf32>
    %215 = tpu.matmul %214, %213, %cst_67 {dimension_numbers = #tpu.dot_dimension_numbers<[1], [0], [0], [1], [0, 0, 1, 1], [], []>} : vector<32x32xbf16>, vector<32x48xbf16>, vector<32x48xf32> -> vector<32x48xf32>
    %c24_68 = arith.constant 24 : index
    %c1_69 = arith.constant 1 : index
    %216 = vector.load %arg2[%c24_68, %c1_69] : memref<160x128xf32, #tpu.memory_space<vmem>>, vector<32x1xf32>
    %217 = vector.broadcast %216 : vector<32x1xf32> to vector<32x48xf32>
    %218 = arith.addf %215, %217 : vector<32x48xf32>
    %219 = vector.extract_strided_slice %211 {offsets = [0, 0], sizes = [48, 8], strides = [1, 1]} : vector<48x64xf32> to vector<48x8xf32>
    %220 = vector.extract_strided_slice %211 {offsets = [0, 32], sizes = [48, 8], strides = [1, 1]} : vector<48x64xf32> to vector<48x8xf32>
    %221 = vector.extract_strided_slice %218 {offsets = [0, 0], sizes = [8, 48], strides = [1, 1]} : vector<32x48xf32> to vector<8x48xf32>
    %222 = arith.truncf %219 : vector<48x8xf32> to vector<48x8xbf16>
    %223 = arith.truncf %221 : vector<8x48xf32> to vector<8x48xbf16>
    %cst_70 = arith.constant dense<0.000000e+00> : vector<48x48xf32>
    %224 = tpu.matmul %222, %223, %cst_70 {dimension_numbers = #tpu.dot_dimension_numbers<[1], [0], [0], [1], [0, 0, 1, 1], [], []>} : vector<48x8xbf16>, vector<8x48xbf16>, vector<48x48xf32> -> vector<48x48xf32>
    %225 = arith.addf %224, %6 : vector<48x48xf32>
    %cst_71 = arith.constant dense<0xFF800000> : vector<48xf32>
    %226 = vector.multi_reduction <maximumf>, %225, %cst_71 [1] : vector<48x48xf32> to vector<48xf32>
    %227 = vector.shape_cast %226 : vector<48xf32> to vector<48x1xf32>
    %228 = vector.broadcast %227 : vector<48x1xf32> to vector<48x48xf32>
    %229 = arith.subf %225, %228 : vector<48x48xf32>
    %230 = math.exp %229 : vector<48x48xf32>
    %cst_72 = arith.constant dense<0.000000e+00> : vector<48xf32>
    %231 = vector.multi_reduction <add>, %230, %cst_72 [1] : vector<48x48xf32> to vector<48xf32>
    %232 = vector.shape_cast %231 : vector<48xf32> to vector<48x1xf32>
    %233 = tpu.reciprocal %232 : vector<48x1xf32> -> vector<48x1xf32>
    %234 = vector.broadcast %233 : vector<48x1xf32> to vector<48x48xf32>
    %235 = arith.mulf %230, %234 : vector<48x48xf32>
    %236 = arith.truncf %235 : vector<48x48xf32> to vector<48x48xbf16>
    %237 = arith.truncf %220 : vector<48x8xf32> to vector<48x8xbf16>
    %cst_73 = arith.constant dense<0.000000e+00> : vector<48x8xf32>
    %238 = tpu.matmul %236, %237, %cst_73 {dimension_numbers = #tpu.dot_dimension_numbers<[1], [0], [0], [1], [0, 0, 1, 1], [], []>} : vector<48x48xbf16>, vector<48x8xbf16>, vector<48x8xf32> -> vector<48x8xf32>
    %239 = vector.extract_strided_slice %211 {offsets = [0, 8], sizes = [48, 8], strides = [1, 1]} : vector<48x64xf32> to vector<48x8xf32>
    %240 = vector.extract_strided_slice %211 {offsets = [0, 40], sizes = [48, 8], strides = [1, 1]} : vector<48x64xf32> to vector<48x8xf32>
    %241 = vector.extract_strided_slice %218 {offsets = [8, 0], sizes = [8, 48], strides = [1, 1]} : vector<32x48xf32> to vector<8x48xf32>
    %242 = arith.truncf %239 : vector<48x8xf32> to vector<48x8xbf16>
    %243 = arith.truncf %241 : vector<8x48xf32> to vector<8x48xbf16>
    %cst_74 = arith.constant dense<0.000000e+00> : vector<48x48xf32>
    %244 = tpu.matmul %242, %243, %cst_74 {dimension_numbers = #tpu.dot_dimension_numbers<[1], [0], [0], [1], [0, 0, 1, 1], [], []>} : vector<48x8xbf16>, vector<8x48xbf16>, vector<48x48xf32> -> vector<48x48xf32>
    %245 = arith.addf %244, %6 : vector<48x48xf32>
    %cst_75 = arith.constant dense<0xFF800000> : vector<48xf32>
    %246 = vector.multi_reduction <maximumf>, %245, %cst_75 [1] : vector<48x48xf32> to vector<48xf32>
    %247 = vector.shape_cast %246 : vector<48xf32> to vector<48x1xf32>
    %248 = vector.broadcast %247 : vector<48x1xf32> to vector<48x48xf32>
    %249 = arith.subf %245, %248 : vector<48x48xf32>
    %250 = math.exp %249 : vector<48x48xf32>
    %cst_76 = arith.constant dense<0.000000e+00> : vector<48xf32>
    %251 = vector.multi_reduction <add>, %250, %cst_76 [1] : vector<48x48xf32> to vector<48xf32>
    %252 = vector.shape_cast %251 : vector<48xf32> to vector<48x1xf32>
    %253 = tpu.reciprocal %252 : vector<48x1xf32> -> vector<48x1xf32>
    %254 = vector.broadcast %253 : vector<48x1xf32> to vector<48x48xf32>
    %255 = arith.mulf %250, %254 : vector<48x48xf32>
    %256 = arith.truncf %255 : vector<48x48xf32> to vector<48x48xbf16>
    %257 = arith.truncf %240 : vector<48x8xf32> to vector<48x8xbf16>
    %cst_77 = arith.constant dense<0.000000e+00> : vector<48x8xf32>
    %258 = tpu.matmul %256, %257, %cst_77 {dimension_numbers = #tpu.dot_dimension_numbers<[1], [0], [0], [1], [0, 0, 1, 1], [], []>} : vector<48x48xbf16>, vector<48x8xbf16>, vector<48x8xf32> -> vector<48x8xf32>
    %259 = vector.extract_strided_slice %211 {offsets = [0, 16], sizes = [48, 8], strides = [1, 1]} : vector<48x64xf32> to vector<48x8xf32>
    %260 = vector.extract_strided_slice %211 {offsets = [0, 48], sizes = [48, 8], strides = [1, 1]} : vector<48x64xf32> to vector<48x8xf32>
    %261 = vector.extract_strided_slice %218 {offsets = [16, 0], sizes = [8, 48], strides = [1, 1]} : vector<32x48xf32> to vector<8x48xf32>
    %262 = arith.truncf %259 : vector<48x8xf32> to vector<48x8xbf16>
    %263 = arith.truncf %261 : vector<8x48xf32> to vector<8x48xbf16>
    %cst_78 = arith.constant dense<0.000000e+00> : vector<48x48xf32>
    %264 = tpu.matmul %262, %263, %cst_78 {dimension_numbers = #tpu.dot_dimension_numbers<[1], [0], [0], [1], [0, 0, 1, 1], [], []>} : vector<48x8xbf16>, vector<8x48xbf16>, vector<48x48xf32> -> vector<48x48xf32>
    %265 = arith.addf %264, %6 : vector<48x48xf32>
    %cst_79 = arith.constant dense<0xFF800000> : vector<48xf32>
    %266 = vector.multi_reduction <maximumf>, %265, %cst_79 [1] : vector<48x48xf32> to vector<48xf32>
    %267 = vector.shape_cast %266 : vector<48xf32> to vector<48x1xf32>
    %268 = vector.broadcast %267 : vector<48x1xf32> to vector<48x48xf32>
    %269 = arith.subf %265, %268 : vector<48x48xf32>
    %270 = math.exp %269 : vector<48x48xf32>
    %cst_80 = arith.constant dense<0.000000e+00> : vector<48xf32>
    %271 = vector.multi_reduction <add>, %270, %cst_80 [1] : vector<48x48xf32> to vector<48xf32>
    %272 = vector.shape_cast %271 : vector<48xf32> to vector<48x1xf32>
    %273 = tpu.reciprocal %272 : vector<48x1xf32> -> vector<48x1xf32>
    %274 = vector.broadcast %273 : vector<48x1xf32> to vector<48x48xf32>
    %275 = arith.mulf %270, %274 : vector<48x48xf32>
    %276 = arith.truncf %275 : vector<48x48xf32> to vector<48x48xbf16>
    %277 = arith.truncf %260 : vector<48x8xf32> to vector<48x8xbf16>
    %cst_81 = arith.constant dense<0.000000e+00> : vector<48x8xf32>
    %278 = tpu.matmul %276, %277, %cst_81 {dimension_numbers = #tpu.dot_dimension_numbers<[1], [0], [0], [1], [0, 0, 1, 1], [], []>} : vector<48x48xbf16>, vector<48x8xbf16>, vector<48x8xf32> -> vector<48x8xf32>
    %279 = vector.extract_strided_slice %211 {offsets = [0, 24], sizes = [48, 8], strides = [1, 1]} : vector<48x64xf32> to vector<48x8xf32>
    %280 = vector.extract_strided_slice %211 {offsets = [0, 56], sizes = [48, 8], strides = [1, 1]} : vector<48x64xf32> to vector<48x8xf32>
    %281 = vector.extract_strided_slice %218 {offsets = [24, 0], sizes = [8, 48], strides = [1, 1]} : vector<32x48xf32> to vector<8x48xf32>
    %282 = arith.truncf %279 : vector<48x8xf32> to vector<48x8xbf16>
    %283 = arith.truncf %281 : vector<8x48xf32> to vector<8x48xbf16>
    %cst_82 = arith.constant dense<0.000000e+00> : vector<48x48xf32>
    %284 = tpu.matmul %282, %283, %cst_82 {dimension_numbers = #tpu.dot_dimension_numbers<[1], [0], [0], [1], [0, 0, 1, 1], [], []>} : vector<48x8xbf16>, vector<8x48xbf16>, vector<48x48xf32> -> vector<48x48xf32>
    %285 = arith.addf %284, %6 : vector<48x48xf32>
    %cst_83 = arith.constant dense<0xFF800000> : vector<48xf32>
    %286 = vector.multi_reduction <maximumf>, %285, %cst_83 [1] : vector<48x48xf32> to vector<48xf32>
    %287 = vector.shape_cast %286 : vector<48xf32> to vector<48x1xf32>
    %288 = vector.broadcast %287 : vector<48x1xf32> to vector<48x48xf32>
    %289 = arith.subf %285, %288 : vector<48x48xf32>
    %290 = math.exp %289 : vector<48x48xf32>
    %cst_84 = arith.constant dense<0.000000e+00> : vector<48xf32>
    %291 = vector.multi_reduction <add>, %290, %cst_84 [1] : vector<48x48xf32> to vector<48xf32>
    %292 = vector.shape_cast %291 : vector<48xf32> to vector<48x1xf32>
    %293 = tpu.reciprocal %292 : vector<48x1xf32> -> vector<48x1xf32>
    %294 = vector.broadcast %293 : vector<48x1xf32> to vector<48x48xf32>
    %295 = arith.mulf %290, %294 : vector<48x48xf32>
    %296 = arith.truncf %295 : vector<48x48xf32> to vector<48x48xbf16>
    %297 = arith.truncf %280 : vector<48x8xf32> to vector<48x8xbf16>
    %cst_85 = arith.constant dense<0.000000e+00> : vector<48x8xf32>
    %298 = tpu.matmul %296, %297, %cst_85 {dimension_numbers = #tpu.dot_dimension_numbers<[1], [0], [0], [1], [0, 0, 1, 1], [], []>} : vector<48x48xbf16>, vector<48x8xbf16>, vector<48x8xf32> -> vector<48x8xf32>
    %299 = tpu.concatenate %238, %258, %278, %298 in 1 : vector<48x8xf32>, vector<48x8xf32>, vector<48x8xf32>, vector<48x8xf32> -> vector<48x32xf32>
    %300 = arith.truncf %299 : vector<48x32xf32> to vector<48x32xbf16>
    %c304 = arith.constant 304 : index
    %c0_86 = arith.constant 0 : index
    %301 = vector.load %arg1[%c304, %c0_86] : memref<464x128xbf16, #tpu.memory_space<vmem>>, vector<32x32xbf16>
    %cst_87 = arith.constant dense<0.000000e+00> : vector<48x32xf32>
    %302 = tpu.matmul %300, %301, %cst_87 {dimension_numbers = #tpu.dot_dimension_numbers<[1], [0], [0], [1], [0, 0, 1, 1], [], []>} : vector<48x32xbf16>, vector<32x32xbf16>, vector<48x32xf32> -> vector<48x32xf32>
    %c11 = arith.constant 11 : index
    %c0_88 = arith.constant 0 : index
    %303 = vector.load %arg2[%c11, %c0_88] : memref<160x128xf32, #tpu.memory_space<vmem>>, vector<1x32xf32>
    %304 = vector.broadcast %303 : vector<1x32xf32> to vector<48x32xf32>
    %305 = arith.addf %302, %304 : vector<48x32xf32>
    %306 = arith.addf %181, %305 : vector<48x32xf32>
    %c12 = arith.constant 12 : index
    %c0_89 = arith.constant 0 : index
    %307 = vector.load %arg2[%c12, %c0_89] : memref<160x128xf32, #tpu.memory_space<vmem>>, vector<1x32xf32>
    %c13 = arith.constant 13 : index
    %c0_90 = arith.constant 0 : index
    %308 = vector.load %arg2[%c13, %c0_90] : memref<160x128xf32, #tpu.memory_space<vmem>>, vector<1x32xf32>
    %cst_91 = arith.constant dense<0.000000e+00> : vector<48xf32>
    %309 = vector.multi_reduction <add>, %306, %cst_91 [1] : vector<48x32xf32> to vector<48xf32>
    %310 = vector.shape_cast %309 : vector<48xf32> to vector<48x1xf32>
    %cst_92 = arith.constant 3.200000e+01 : f32
    %311 = vector.broadcast %cst_92 : f32 to vector<48x1xf32>
    %312 = arith.divf %310, %311 : vector<48x1xf32>
    %313 = vector.broadcast %312 : vector<48x1xf32> to vector<48x32xf32>
    %314 = arith.subf %306, %313 : vector<48x32xf32>
    %315 = arith.mulf %314, %314 : vector<48x32xf32>
    %cst_93 = arith.constant dense<0.000000e+00> : vector<48xf32>
    %316 = vector.multi_reduction <add>, %315, %cst_93 [1] : vector<48x32xf32> to vector<48xf32>
    %317 = vector.shape_cast %316 : vector<48xf32> to vector<48x1xf32>
    %cst_94 = arith.constant 3.200000e+01 : f32
    %318 = vector.broadcast %cst_94 : f32 to vector<48x1xf32>
    %319 = arith.divf %317, %318 : vector<48x1xf32>
    %320 = vector.broadcast %312 : vector<48x1xf32> to vector<48x32xf32>
    %321 = arith.subf %306, %320 : vector<48x32xf32>
    %cst_95 = arith.constant 9.99999996E-13 : f32
    %322 = vector.broadcast %cst_95 : f32 to vector<48x1xf32>
    %323 = arith.addf %319, %322 : vector<48x1xf32>
    %324 = math.rsqrt %323 : vector<48x1xf32>
    %325 = vector.broadcast %324 : vector<48x1xf32> to vector<48x32xf32>
    %326 = arith.mulf %321, %325 : vector<48x32xf32>
    %327 = vector.broadcast %307 : vector<1x32xf32> to vector<48x32xf32>
    %328 = arith.mulf %326, %327 : vector<48x32xf32>
    %329 = vector.broadcast %308 : vector<1x32xf32> to vector<48x32xf32>
    %330 = arith.addf %328, %329 : vector<48x32xf32>
    %331 = arith.truncf %330 : vector<48x32xf32> to vector<48x32xbf16>
    %c336 = arith.constant 336 : index
    %c0_96 = arith.constant 0 : index
    %332 = vector.load %arg1[%c336, %c0_96] : memref<464x128xbf16, #tpu.memory_space<vmem>>, vector<32x64xbf16>
    %cst_97 = arith.constant dense<0.000000e+00> : vector<48x64xf32>
    %333 = tpu.matmul %331, %332, %cst_97 {dimension_numbers = #tpu.dot_dimension_numbers<[1], [0], [0], [1], [0, 0, 1, 1], [], []>} : vector<48x32xbf16>, vector<32x64xbf16>, vector<48x64xf32> -> vector<48x64xf32>
    %c14 = arith.constant 14 : index
    %c0_98 = arith.constant 0 : index
    %334 = vector.load %arg2[%c14, %c0_98] : memref<160x128xf32, #tpu.memory_space<vmem>>, vector<1x64xf32>
    %335 = vector.broadcast %334 : vector<1x64xf32> to vector<48x64xf32>
    %336 = arith.addf %333, %335 : vector<48x64xf32>
    %337 = arith.mulf %336, %336 : vector<48x64xf32>
    %338 = arith.mulf %336, %337 : vector<48x64xf32>
    %cst_99 = arith.constant 4.471500e-02 : f32
    %339 = vector.broadcast %cst_99 : f32 to vector<48x64xf32>
    %340 = arith.mulf %339, %338 : vector<48x64xf32>
    %341 = arith.addf %336, %340 : vector<48x64xf32>
    %cst_100 = arith.constant 0.797884583 : f32
    %342 = vector.broadcast %cst_100 : f32 to vector<48x64xf32>
    %343 = arith.mulf %342, %341 : vector<48x64xf32>
    %344 = math.tanh %343 : vector<48x64xf32>
    %cst_101 = arith.constant 1.000000e+00 : f32
    %345 = vector.broadcast %cst_101 : f32 to vector<48x64xf32>
    %346 = arith.addf %345, %344 : vector<48x64xf32>
    %cst_102 = arith.constant 5.000000e-01 : f32
    %347 = vector.broadcast %cst_102 : f32 to vector<48x64xf32>
    %348 = arith.mulf %347, %346 : vector<48x64xf32>
    %349 = arith.mulf %336, %348 : vector<48x64xf32>
    %350 = arith.truncf %349 : vector<48x64xf32> to vector<48x64xbf16>
    %c368 = arith.constant 368 : index
    %c0_103 = arith.constant 0 : index
    %351 = vector.load %arg1[%c368, %c0_103] : memref<464x128xbf16, #tpu.memory_space<vmem>>, vector<64x32xbf16>
    %cst_104 = arith.constant dense<0.000000e+00> : vector<48x32xf32>
    %352 = tpu.matmul %350, %351, %cst_104 {dimension_numbers = #tpu.dot_dimension_numbers<[1], [0], [0], [1], [0, 0, 1, 1], [], []>} : vector<48x64xbf16>, vector<64x32xbf16>, vector<48x32xf32> -> vector<48x32xf32>
    %c15 = arith.constant 15 : index
    %c0_105 = arith.constant 0 : index
    %353 = vector.load %arg2[%c15, %c0_105] : memref<160x128xf32, #tpu.memory_space<vmem>>, vector<1x32xf32>
    %354 = vector.broadcast %353 : vector<1x32xf32> to vector<48x32xf32>
    %355 = arith.addf %352, %354 : vector<48x32xf32>
    %356 = arith.addf %306, %355 : vector<48x32xf32>
    %c16 = arith.constant 16 : index
    %c0_106 = arith.constant 0 : index
    %357 = vector.load %arg2[%c16, %c0_106] : memref<160x128xf32, #tpu.memory_space<vmem>>, vector<1x32xf32>
    %c17 = arith.constant 17 : index
    %c0_107 = arith.constant 0 : index
    %358 = vector.load %arg2[%c17, %c0_107] : memref<160x128xf32, #tpu.memory_space<vmem>>, vector<1x32xf32>
    %cst_108 = arith.constant dense<0.000000e+00> : vector<48xf32>
    %359 = vector.multi_reduction <add>, %356, %cst_108 [1] : vector<48x32xf32> to vector<48xf32>
    %360 = vector.shape_cast %359 : vector<48xf32> to vector<48x1xf32>
    %cst_109 = arith.constant 3.200000e+01 : f32
    %361 = vector.broadcast %cst_109 : f32 to vector<48x1xf32>
    %362 = arith.divf %360, %361 : vector<48x1xf32>
    %363 = vector.broadcast %362 : vector<48x1xf32> to vector<48x32xf32>
    %364 = arith.subf %356, %363 : vector<48x32xf32>
    %365 = arith.mulf %364, %364 : vector<48x32xf32>
    %cst_110 = arith.constant dense<0.000000e+00> : vector<48xf32>
    %366 = vector.multi_reduction <add>, %365, %cst_110 [1] : vector<48x32xf32> to vector<48xf32>
    %367 = vector.shape_cast %366 : vector<48xf32> to vector<48x1xf32>
    %cst_111 = arith.constant 3.200000e+01 : f32
    %368 = vector.broadcast %cst_111 : f32 to vector<48x1xf32>
    %369 = arith.divf %367, %368 : vector<48x1xf32>
    %370 = vector.broadcast %362 : vector<48x1xf32> to vector<48x32xf32>
    %371 = arith.subf %356, %370 : vector<48x32xf32>
    %cst_112 = arith.constant 9.99999996E-13 : f32
    %372 = vector.broadcast %cst_112 : f32 to vector<48x1xf32>
    %373 = arith.addf %369, %372 : vector<48x1xf32>
    %374 = math.rsqrt %373 : vector<48x1xf32>
    %375 = vector.broadcast %374 : vector<48x1xf32> to vector<48x32xf32>
    %376 = arith.mulf %371, %375 : vector<48x32xf32>
    %377 = vector.broadcast %357 : vector<1x32xf32> to vector<48x32xf32>
    %378 = arith.mulf %376, %377 : vector<48x32xf32>
    %379 = vector.broadcast %358 : vector<1x32xf32> to vector<48x32xf32>
    %380 = arith.addf %378, %379 : vector<48x32xf32>
    %c56 = arith.constant 56 : index
    %c0_113 = arith.constant 0 : index
    %381 = vector.load %arg2[%c56, %c0_113] : memref<160x128xf32, #tpu.memory_space<vmem>>, vector<2x48xf32>
    %cst_114 = arith.constant dense<0.000000e+00> : vector<2x32xf32>
    %382 = tpu.matmul %381, %380, %cst_114 {dimension_numbers = #tpu.dot_dimension_numbers<[1], [0], [0], [1], [0, 0, 1, 1], [], []>} : vector<2x48xf32>, vector<48x32xf32>, vector<2x32xf32> -> vector<2x32xf32>
    %383 = arith.truncf %382 : vector<2x32xf32> to vector<2x32xbf16>
    %c432 = arith.constant 432 : index
    %c0_115 = arith.constant 0 : index
    %384 = vector.load %arg1[%c432, %c0_115] : memref<464x128xbf16, #tpu.memory_space<vmem>>, vector<32x128xbf16>
    %cst_116 = arith.constant dense<0.000000e+00> : vector<2x128xf32>
    %385 = tpu.matmul %383, %384, %cst_116 {dimension_numbers = #tpu.dot_dimension_numbers<[1], [0], [0], [1], [0, 0, 1, 1], [], []>} : vector<2x32xbf16>, vector<32x128xbf16>, vector<2x128xf32> -> vector<2x128xf32>
    %c18 = arith.constant 18 : index
    %c0_117 = arith.constant 0 : index
    %386 = vector.load %arg2[%c18, %c0_117] : memref<160x128xf32, #tpu.memory_space<vmem>>, vector<1x128xf32>
    %387 = vector.broadcast %386 : vector<1x128xf32> to vector<2x128xf32>
    %388 = arith.addf %385, %387 : vector<2x128xf32>
    %c0_118 = arith.constant 0 : index
    %c0_119 = arith.constant 0 : index
    %389 = vector.load %arg3[%c0_118, %c0_119] : memref<2x128xf32, #tpu.memory_space<vmem>>, vector<2x128xf32>
    tpu.vector_store %arg3[%c0_118, %c0_119], %388 {strides = array<i32>} : memref<2x128xf32, #tpu.memory_space<vmem>>, vector<2x128xf32>,
    return
  }
}

</mosaic_0001>

<llo_original>
// kernel: custom_model_forward.1
$region0: #{custom_model_forward.1}
  #allocation0 [shape = 'u32[]', space=smem, size = 0x4, offset = 0x4, fixed_abs, tag = 'smem constant byte address 0x4 - core index']
  #allocation1 [shape = 'u32[144,128]{1,0:T(1,128)}', space=vmem, size = 0x12000, scoped, tag = 'internal scratch']
  %s0 = inlined_call_operand.vmem [shape: f32[48,48], index: 0, kind: input, shape index: {}]
  %s1 = inlined_call_operand.vmem [shape: bf16[464,128], index: 1, kind: input, shape index: {}]
  %s2 = inlined_call_operand.vmem [shape: f32[160,128], index: 2, kind: input, shape index: {}]
  %s3 = inlined_call_operand.hbm [shape: f32[2,128], index: 3, kind: output, shape index: {}]
  %s4 = sld [smem:[#allocation0]]
  $region22: #{custom_model_forward.1} parent=0
    _
  %s6 = ssub.s32 1, %s4
  %s7 = scalar_select 0, %s6, %s4
  $region1: #{custom_model_forward.1} parent=0
    #allocation2 [shape = 'u8[1024]{0}', space=vmem, size = 0x400, scoped, tag = 'output window, operand 0, single buffered']
    #allocation3 [shape = 's32[1]{0}', space=sflag, size = 0x4, scoped, tag = 'scoped memory for custom_model_forward.1']
    %8 = vsyncpa [#allocation3], 0
    // Predicated region
    $region2: #{custom_model_forward.1} parent=1 // pred_check
      _
    $region3: #{custom_model_forward.1} parent=1 // pred_check_branch
      %10 = sbr.rel (0) target = $region5
    $region4: #{custom_model_forward.1} parent=1 // pred_region
      _
    $region5: #{custom_model_forward.1} parent=1 // pred_fallthru
      _
    // Predicated region
    $region6: #{custom_model_forward.1} parent=1 // pred_check
      _
    $region7: #{custom_model_forward.1} parent=1 // pred_check_branch
      %12 = sbr.rel (0) target = $region9
    $region8: #{custom_model_forward.1} parent=1 // pred_region
      _
    $region9: #{custom_model_forward.1} parent=1 // pred_fallthru
      _
    // Predicated region
    $region10: #{custom_model_forward.1} parent=1 // pred_check
      _
    $region11: #{custom_model_forward.1} parent=1 // pred_check_branch
      %14 = sbr.rel (0) target = $region13
    $region12: #{custom_model_forward.1} parent=1 // pred_region
      _
    $region13: #{custom_model_forward.1} parent=1 // pred_fallthru
      _
    %v16 = vld [vmem:[%s0] sm:$0xff]
    %v17 = vld [vmem:[%s0 + $0x8] sm:$0xff]
    %v18 = vld [vmem:[%s0 + $0x10] sm:$0xff]
    %v19 = vld [vmem:[%s0 + $0x18] sm:$0xff]
    %v20 = vld [vmem:[%s0 + $0x20] sm:$0xff]
    %v21 = vld [vmem:[%s0 + $0x28] sm:$0xff]
    %v22 = vpack.c.bf16 %v17, %v16
    %v23 = vpack.c.bf16 %v19, %v18
    %v24 = vpack.c.bf16 %v21, %v20
    %v25 = vld [vmem:[%s1] sm:$0xf]
    %v26 = vld [vmem:[%s1 + $0x4] sm:$0xf]
    %v27 = vld [vmem:[%s1 + $0x8] sm:$0xf]
    %v28 = vld [vmem:[%s1 + $0xc] sm:$0xf]
    %v29 = vld [vmem:[%s1 + $0x10] sm:$0xf]
    %v30 = vld [vmem:[%s1 + $0x14] sm:$0xf]
    %v31 = vld [vmem:[%s2 + $0x40] sm:$0xff]
    %v32 = vld [vmem:[%s2 + $0x48] sm:$0xff]
    %v33 = vld [vmem:[%s2 + $0x50] sm:$0xff]
    %v34 = vld [vmem:[%s2 + $0x58] sm:$0xff]
    %v35 = vld [vmem:[%s2 + $0x60] sm:$0xff]
    %v36 = vld [vmem:[%s2 + $0x68] sm:$0xff]
    %v43 = vunpack.c.l.b16 %v25
    %v44 = vunpack.c.l.b16 %v26
    %v45 = vunpack.c.l.b16 %v27
    %v46 = vunpack.c.l.b16 %v28
    %v47 = vunpack.c.l.b16 %v29
    %v48 = vunpack.c.l.b16 %v30
    %v49 = vpack.c.b16 %v44, %v43
    %v50 = vpack.c.b16 %v46, %v45
    %v51 = vpack.c.b16 %v48, %v47
    %vm55 = vcmask 392192
    %v57 = vsel %vm55, %v22, 0
    %v60 = vsel %vm55, %v23, 0
    %v63 = vsel %vm55, %v24, 0
    %65 = vmatprep.subr.bf16.mxu0 0
    %66 = vmatpush1.bf16.msra.mxu0 %v49
    %67 = vmatprep.subr.bf16.mxu0 0
    %68 = vmatpush1.bf16.msra.mxu0 %v50
    %69 = vmatprep.subr.bf16.mxu0 0
    %70 = vmatpush1.bf16.msra.mxu0 %v51
    %71 = vmatprep.subr.bf16.mxu0 0
    %72 = vmatpush1.bf16.msra.mxu0 0
    %73 = vmatprep.subr.bf16.mxu0 0
    %74 = vmatpush1.bf16.msra.mxu0 0
    %75 = vmatprep.subr.bf16.mxu0 0
    %76 = vmatpush1.bf16.msra.mxu0 0
    %77 = vmatprep.subr.bf16.mxu0 0
    %78 = vmatpush1.bf16.msra.mxu0 0
    %79 = vmatprep.subr.bf16.mxu0 0
    %80 = vmatpush1.bf16.msra.mxu0 0
    %81 = vmatprep.subr.bf16.mxu0 0
    %82 = vmatpush1.bf16.msra.mxu0 0
    %83 = vmatprep.subr.bf16.mxu0 0
    %84 = vmatpush1.bf16.msra.mxu0 0
    %85 = vmatprep.subr.bf16.mxu0 0
    %86 = vmatpush1.bf16.msra.mxu0 0
    %87 = vmatprep.subr.bf16.mxu0 0
    %88 = vmatpush1.bf16.msra.mxu0 0
    %89 = vmatprep.subr.bf16.mxu0 0
    %90 = vmatpush1.bf16.msra.mxu0 0
    %91 = vmatprep.subr.bf16.mxu0 0
    %92 = vmatpush1.bf16.msra.mxu0 0
    %93 = vmatprep.subr.bf16.mxu0 0
    %94 = vmatpush1.bf16.msra.mxu0 0
    %95 = vmatprep.subr.bf16.mxu0 0
    %96 = vmatpush1.bf16.msra.mxu0 0
    %97 = vmatprep.mubr.bf16.mxu0 0
    %98 = vmatmul.mubr.bf16.gmra.mrb[0].mxu0 %v57
    %v99 = vpop.f32.mrb[0].mxu0
    %v100 = vadd.f32 %v31, %v99
    %v101 = vpop.f32.mrb[0].mxu0
    %v102 = vpop.f32.mrb[0].mxu0
    %v103 = vadd.f32 %v32, %v102
    %v104 = vpop.f32.mrb[0].mxu0
    %105 = vmatprep.mubr.bf16.mxu0 0
    %106 = vmatmul.mubr.bf16.gmra.mrb[0].mxu0 %v60
    %v107 = vpop.f32.mrb[0].mxu0
    %v108 = vadd.f32 %v33, %v107
    %v109 = vpop.f32.mrb[0].mxu0
    %v110 = vpop.f32.mrb[0].mxu0
    %v111 = vadd.f32 %v34, %v110
    %v112 = vpop.f32.mrb[0].mxu0
    %113 = vmatprep.mubr.bf16.mxu0 0
    %114 = vmatmul.mubr.bf16.gmra.mrb[0].mxu0 %v63
    %v115 = vpop.f32.mrb[0].mxu0
    %v116 = vadd.f32 %v35, %v115
    %v117 = vpop.f32.mrb[0].mxu0
    %v118 = vpop.f32.mrb[0].mxu0
    %v119 = vadd.f32 %v36, %v118
    %v120 = vpop.f32.mrb[0].mxu0
    %121 = vdwg.mxu0
    %v122 = vld [vmem:[%s2 + $0x70] sm:$0xff]
    %v123 = vld [vmem:[%s2 + $0x78] sm:$0xff]
    %v124 = vld [vmem:[%s2 + $0x80] sm:$0xff]
    %v125 = vld [vmem:[%s2 + $0x88] sm:$0xff]
    %v126 = vld [vmem:[%s2 + $0x90] sm:$0xff]
    %v127 = vld [vmem:[%s2 + $0x98] sm:$0xff]
    %v128 = vld [vmem:[%s2] sm:$0x1]
    %v129 = vld [vmem:[%s2 + $0x1] sm:$0x1]
    %vm130 = vcmask 261120
    %v131 = vsel %vm130, %v100, 0.0
    %132 = vadd.xlane.f32.xlu0 %v131
    %v133 = vpop.xlane.xlu0 %132
    %v134 = vsel %vm130, %v103, 0.0
    %135 = vadd.xlane.f32.xlu0 %v134
    %v136 = vpop.xlane.xlu0 %135
    %v137 = vsel %vm130, %v108, 0.0
    %138 = vadd.xlane.f32.xlu0 %v137
    %v139 = vpop.xlane.xlu0 %138
    %v140 = vsel %vm130, %v111, 0.0
    %141 = vadd.xlane.f32.xlu0 %v140
    %v142 = vpop.xlane.xlu0 %141
    %v143 = vsel %vm130, %v116, 0.0
    %144 = vadd.xlane.f32.xlu0 %v143
    %v145 = vpop.xlane.xlu0 %144
    %v146 = vsel %vm130, %v119, 0.0
    %147 = vadd.xlane.f32.xlu0 %v146
    %v148 = vpop.xlane.xlu0 %147
    %v149 = vrcp.pop 32.0
    %v150 = vmul.f32 %v133, %v149
    %v151 = vmul.f32 %v136, %v149
    %v152 = vmul.f32 %v139, %v149
    %v153 = vmul.f32 %v142, %v149
    %v154 = vmul.f32 %v145, %v149
    %v155 = vmul.f32 %v148, %v149
    %v156 = vsub.f32 %v100, %v150
    %v157 = vsub.f32 %v103, %v151
    %v158 = vsub.f32 %v108, %v152
    %v159 = vsub.f32 %v111, %v153
    %v160 = vsub.f32 %v116, %v154
    %v161 = vsub.f32 %v119, %v155
    %v162 = vmul.f32 %v156, %v156
    %v163 = vmul.f32 %v157, %v157
    %v164 = vmul.f32 %v158, %v158
    %v165 = vmul.f32 %v159, %v159
    %v166 = vmul.f32 %v160, %v160
    %v167 = vmul.f32 %v161, %v161
    %v168 = vsel %vm130, %v162, 0.0
    %169 = vadd.xlane.f32.xlu0 %v168
    %v170 = vpop.xlane.xlu0 %169
    %v171 = vsel %vm130, %v163, 0.0
    %172 = vadd.xlane.f32.xlu0 %v171
    %v173 = vpop.xlane.xlu0 %172
    %v174 = vsel %vm130, %v164, 0.0
    %175 = vadd.xlane.f32.xlu0 %v174
    %v176 = vpop.xlane.xlu0 %175
    %v177 = vsel %vm130, %v165, 0.0
    %178 = vadd.xlane.f32.xlu0 %v177
    %v179 = vpop.xlane.xlu0 %178
    %v180 = vsel %vm130, %v166, 0.0
    %181 = vadd.xlane.f32.xlu0 %v180
    %v182 = vpop.xlane.xlu0 %181
    %v183 = vsel %vm130, %v167, 0.0
    %184 = vadd.xlane.f32.xlu0 %v183
    %v185 = vpop.xlane.xlu0 %184
    %v186 = vmul.f32 %v170, %v149
    %v187 = vmul.f32 %v173, %v149
    %v188 = vmul.f32 %v176, %v149
    %v189 = vmul.f32 %v179, %v149
    %v190 = vmul.f32 %v182, %v149
    %v191 = vmul.f32 %v185, %v149
    %v192 = vadd.f32 %v186, 1e-12
    %v193 = vadd.f32 %v187, 1e-12
    %v194 = vadd.f32 %v188, 1e-12
    %v195 = vadd.f32 %v189, 1e-12
    %v196 = vadd.f32 %v190, 1e-12
    %v197 = vadd.f32 %v191, 1e-12
    %v198 = vrsqrt.pop %v192
    %v199 = vrsqrt.pop %v193
    %v200 = vrsqrt.pop %v194
    %v201 = vrsqrt.pop %v195
    %v202 = vrsqrt.pop %v196
    %v203 = vrsqrt.pop %v197
    %v204 = vmul.f32 %v156, %v198
    %v205 = vmul.f32 %v157, %v199
    %v206 = vmul.f32 %v158, %v200
    %v207 = vmul.f32 %v159, %v201
    %v208 = vmul.f32 %v160, %v202
    %v209 = vmul.f32 %v161, %v203
    %v210 = vlaneseq
    %v211 = vshrl.u32 %v210, 7
    %v212 = vsub.s32 0, %v211
    %v213 = vrot.slane %v128, %v212
    %v214 = vmul.f32 %v204, %v213
    %v215 = vmul.f32 %v205, %v213
    %v216 = vmul.f32 %v206, %v213
    %v217 = vmul.f32 %v207, %v213
    %v218 = vmul.f32 %v208, %v213
    %v219 = vmul.f32 %v209, %v213
    %v220 = vlaneseq
    %v221 = vshrl.u32 %v220, 7
    %v222 = vsub.s32 0, %v221
    %v223 = vrot.slane %v129, %v222
    %v224 = vadd.f32 %v214, %v223
    %v225 = vadd.f32 %v215, %v223
    %v226 = vadd.f32 %v216, %v223
    %v227 = vadd.f32 %v217, %v223
    %v228 = vadd.f32 %v218, %v223
    %v229 = vadd.f32 %v219, %v223
    %v230 = vpack.c.bf16 %v225, %v224
    %v231 = vpack.c.bf16 %v227, %v226
    %v232 = vpack.c.bf16 %v229, %v228
    %v233 = vld [vmem:[%s1 + $0x18] sm:$0xf]
    %v234 = vld [vmem:[%s1 + $0x1c] sm:$0xf]
    %v235 = vld [vmem:[%s1 + $0x20] sm:$0xf]
    %v236 = vld [vmem:[%s1 + $0x24] sm:$0xf]
    %v237 = vld [vmem:[%s2 + $0x2] sm:$0x1]
    %v238 = vlaneseq
    %v239 = vshrl.u32 %v238, 7
    %v240 = vsub.s32 0, %v239
    %v241 = vrot.slane %v237, %v240
    %v246 = vunpack.c.l.b16 %v233
    %v247 = vunpack.c.l.b16 %v234
    %v248 = vunpack.c.l.b16 %v235
    %v249 = vunpack.c.l.b16 %v236
    %v250 = vpack.c.b16 %v247, %v246
    %v251 = vpack.c.b16 %v249, %v248
    %v255 = vsel %vm130, %v230, 0
    %v258 = vsel %vm130, %v231, 0
    %v261 = vsel %vm130, %v232, 0
    %263 = vmatprep.subr.bf16.mxu0 0
    %264 = vmatpush1.bf16.msra.mxu0 %v250
    %265 = vmatprep.subr.bf16.mxu0 0
    %266 = vmatpush1.bf16.msra.mxu0 %v251
    %267 = vmatprep.subr.bf16.mxu0 0
    %268 = vmatpush1.bf16.msra.mxu0 0
    %269 = vmatprep.subr.bf16.mxu0 0
    %270 = vmatpush1.bf16.msra.mxu0 0
    %271 = vmatprep.subr.bf16.mxu0 0
    %272 = vmatpush1.bf16.msra.mxu0 0
    %273 = vmatprep.subr.bf16.mxu0 0
    %274 = vmatpush1.bf16.msra.mxu0 0
    %275 = vmatprep.subr.bf16.mxu0 0
    %276 = vmatpush1.bf16.msra.mxu0 0
    %277 = vmatprep.subr.bf16.mxu0 0
    %278 = vmatpush1.bf16.msra.mxu0 0
    %279 = vmatprep.subr.bf16.mxu0 0
    %280 = vmatpush1.bf16.msra.mxu0 0
    %281 = vmatprep.subr.bf16.mxu0 0
    %282 = vmatpush1.bf16.msra.mxu0 0
    %283 = vmatprep.subr.bf16.mxu0 0
    %284 = vmatpush1.bf16.msra.mxu0 0
    %285 = vmatprep.subr.bf16.mxu0 0
    %286 = vmatpush1.bf16.msra.mxu0 0
    %287 = vmatprep.subr.bf16.mxu0 0
    %288 = vmatpush1.bf16.msra.mxu0 0
    %289 = vmatprep.subr.bf16.mxu0 0
    %290 = vmatpush1.bf16.msra.mxu0 0
    %291 = vmatprep.subr.bf16.mxu0 0
    %292 = vmatpush1.bf16.msra.mxu0 0
    %293 = vmatprep.subr.bf16.mxu0 0
    %294 = vmatpush1.bf16.msra.mxu0 0
    %295 = vmatprep.mubr.bf16.mxu0 0
    %296 = vmatmul.mubr.bf16.gmra.mrb[0].mxu0 %v255
    %v297 = vpop.f32.mrb[0].mxu0
    %v298 = vadd.f32 %v241, %v297
    %v299 = vpop.f32.mrb[0].mxu0
    %v300 = vpop.f32.mrb[0].mxu0
    %v301 = vadd.f32 %v241, %v300
    %v302 = vpop.f32.mrb[0].mxu0
    %303 = vmatprep.mubr.bf16.mxu0 0
    %304 = vmatmul.mubr.bf16.gmra.mrb[0].mxu0 %v258
    %v305 = vpop.f32.mrb[0].mxu0
    %v306 = vadd.f32 %v241, %v305
    %v307 = vpop.f32.mrb[0].mxu0
    %v308 = vpop.f32.mrb[0].mxu0
    %v309 = vadd.f32 %v241, %v308
    %v310 = vpop.f32.mrb[0].mxu0
    %311 = vmatprep.mubr.bf16.mxu0 0
    %312 = vmatmul.mubr.bf16.gmra.mrb[0].mxu0 %v261
    %v313 = vpop.f32.mrb[0].mxu0
    %v314 = vadd.f32 %v241, %v313
    %v315 = vpop.f32.mrb[0].mxu0
    %v316 = vpop.f32.mrb[0].mxu0
    %v317 = vadd.f32 %v241, %v316
    %v318 = vpop.f32.mrb[0].mxu0
    %319 = vdwg.mxu0
    %320 = vxpose.xlu0.b32.start [1/16] %v224, 128
    %321 = vxpose.xlu0.b32.cont [2/16] %v225, 128
    %322 = vxpose.xlu0.b32.cont [3/16] %v226, 128
    %323 = vxpose.xlu0.b32.cont [4/16] %v227, 128
    %324 = vxpose.xlu0.b32.cont [5/16] %v228, 128
    %325 = vxpose.xlu0.b32.cont [6/16] %v229, 128
    %326 = vxpose.xlu0.b32.cont [7/16] 0.0, 128
    %327 = vxpose.xlu0.b32.cont [8/16] 0.0, 128
    %328 = vxpose.xlu0.b32.cont [9/16] 0.0, 128
    %329 = vxpose.xlu0.b32.cont [10/16] 0.0, 128
    %330 = vxpose.xlu0.b32.cont [11/16] 0.0, 128
    %331 = vxpose.xlu0.b32.cont [12/16] 0.0, 128
    %332 = vxpose.xlu0.b32.cont [13/16] 0.0, 128
    %333 = vxpose.xlu0.b32.cont [14/16] 0.0, 128
    %334 = vxpose.xlu0.b32.cont [15/16] 0.0, 128
    %335 = vxpose.xlu0.b32.end [16/16] 0.0, 128
    %v336 = vpop.trf.xlu0
    %v337 = vpop.trf.xlu0
    %v338 = vpop.trf.xlu0
    %v339 = vpop.trf.xlu0
    %v340 = vpop.trf.xlu0
    %v341 = vpop.trf.xlu0
    %v342 = vpop.trf.xlu0
    %v343 = vpop.trf.xlu0
    %v344 = vpop.trf.xlu0
    %v345 = vpop.trf.xlu0
    %v346 = vpop.trf.xlu0
    %v347 = vpop.trf.xlu0
    %v348 = vpop.trf.xlu0
    %v349 = vpop.trf.xlu0
    %v350 = vpop.trf.xlu0
    %v351 = vpop.trf.xlu0
    %v352 = vpack.c.bf16 %v337, %v336
    %v353 = vpack.c.bf16 %v339, %v338
    %v354 = vld [vmem:[%s1 + $0x28] sm:$0xf]
    %v355 = vld [vmem:[%s1 + $0x2c] sm:$0xf]
    %v356 = vld [vmem:[%s1 + $0x30] sm:$0xf]
    %v357 = vld [vmem:[%s1 + $0x34] sm:$0xf]
    %v358 = vld [vmem:[%s2 + $0x18] sm:$0xff]
    %v359 = vld [vmem:[%s2 + $0x20] sm:$0xff]
    %v360 = vld [vmem:[%s2 + $0x28] sm:$0xff]
    %v361 = vld [vmem:[%s2 + $0x30] sm:$0xff]
    %363 = vset.pattern.permute.xlu0 0
    %364 = vperm.xlu0 %363, %v358
    %v365 = vpop.permute.xlu0 %364
    %368 = vset.pattern.permute.xlu0 0
    %369 = vperm.xlu0 %368, %v359
    %v370 = vpop.permute.xlu0 %369
    %373 = vset.pattern.permute.xlu0 0
    %374 = vperm.xlu0 %373, %v360
    %v375 = vpop.permute.xlu0 %374
    %378 = vset.pattern.permute.xlu0 0
    %379 = vperm.xlu0 %378, %v361
    %v380 = vpop.permute.xlu0 %379
    %v386 = vunpack.c.l.b16 %v354
    %v387 = vunpack.c.l.b16 %v355
    %v388 = vunpack.c.l.b16 %v356
    %v389 = vunpack.c.l.b16 %v357
    %v390 = vpack.c.b16 %v387, %v386
    %v391 = vpack.c.b16 %v389, %v388
    %v393 = vsel %vm130, %v390, 0
    %v396 = vsel %vm130, %v391, 0
    %398 = vmatprep.subr.bf16.mxu0 0
    %399 = vmatpush1.bf16.msra.mxu0 %v352
    %400 = vmatprep.subr.bf16.mxu0 0
    %401 = vmatpush1.bf16.msra.mxu0 %v353
    %402 = vmatprep.subr.bf16.mxu0 0
    %403 = vmatpush1.bf16.msra.mxu0 0
    %404 = vmatprep.subr.bf16.mxu0 0
    %405 = vmatpush1.bf16.msra.mxu0 0
    %406 = vmatprep.subr.bf16.mxu0 0
    %407 = vmatpush1.bf16.msra.mxu0 0
    %408 = vmatprep.subr.bf16.mxu0 0
    %409 = vmatpush1.bf16.msra.mxu0 0
    %410 = vmatprep.subr.bf16.mxu0 0
    %411 = vmatpush1.bf16.msra.mxu0 0
    %412 = vmatprep.subr.bf16.mxu0 0
    %413 = vmatpush1.bf16.msra.mxu0 0
    %414 = vmatprep.subr.bf16.mxu0 0
    %415 = vmatpush1.bf16.msra.mxu0 0
    %416 = vmatprep.subr.bf16.mxu0 0
    %417 = vmatpush1.bf16.msra.mxu0 0
    %418 = vmatprep.subr.bf16.mxu0 0
    %419 = vmatpush1.bf16.msra.mxu0 0
    %420 = vmatprep.subr.bf16.mxu0 0
    %421 = vmatpush1.bf16.msra.mxu0 0
    %422 = vmatprep.subr.bf16.mxu0 0
    %423 = vmatpush1.bf16.msra.mxu0 0
    %424 = vmatprep.subr.bf16.mxu0 0
    %425 = vmatpush1.bf16.msra.mxu0 0
    %426 = vmatprep.subr.bf16.mxu0 0
    %427 = vmatpush1.bf16.msra.mxu0 0
    %428 = vmatprep.subr.bf16.mxu0 0
    %429 = vmatpush1.bf16.msra.mxu0 0
    %430 = vmatprep.mubr.bf16.mxu0 0
    %431 = vmatmul.mubr.bf16.gmra.mrb[0].mxu0 %v393
    %v432 = vpop.f32.mrb[0].mxu0
    %v433 = vadd.f32 %v365, %v432
    %v434 = vpop.f32.mrb[0].mxu0
    %v435 = vpop.f32.mrb[0].mxu0
    %v436 = vadd.f32 %v370, %v435
    %v437 = vpop.f32.mrb[0].mxu0
    %438 = vmatprep.mubr.bf16.mxu0 0
    %439 = vmatmul.mubr.bf16.gmra.mrb[0].mxu0 %v396
    %v440 = vpop.f32.mrb[0].mxu0
    %v441 = vadd.f32 %v375, %v440
    %v442 = vpop.f32.mrb[0].mxu0
    %v443 = vpop.f32.mrb[0].mxu0
    %v444 = vadd.f32 %v380, %v443
    %v445 = vpop.f32.mrb[0].mxu0
    %446 = vdwg.mxu0
    %v447 = vpack.c.bf16 %v301, %v298
    %v448 = vpack.c.bf16 %v309, %v306
    %v449 = vpack.c.bf16 %v317, %v314
    %v450 = vpack.c.bf16 %v433, %v433
    %vm451 = vcmask 64512
    %v453 = vsel %vm451, %v447, 0
    %v456 = vsel %vm451, %v448, 0
    %v459 = vsel %vm451, %v449, 0
    %vm461 = vcmask 1043456
    %v463 = vsel %vm461, %v450, 0
    %465 = vmatprep.subr.bf16.mxu0 0
    %466 = vmatpush1.bf16.msra.mxu0 %v463
    %467 = vmatprep.subr.bf16.mxu0 0
    %468 = vmatpush1.bf16.msra.mxu0 0
    %469 = vmatprep.subr.bf16.mxu0 0
    %470 = vmatpush1.bf16.msra.mxu0 0
    %471 = vmatprep.subr.bf16.mxu0 0
    %472 = vmatpush1.bf16.msra.mxu0 0
    %473 = vmatprep.subr.bf16.mxu0 0
    %474 = vmatpush1.bf16.msra.mxu0 0
    %475 = vmatprep.subr.bf16.mxu0 0
    %476 = vmatpush1.bf16.msra.mxu0 0
    %477 = vmatprep.subr.bf16.mxu0 0
    %478 = vmatpush1.bf16.msra.mxu0 0
    %479 = vmatprep.subr.bf16.mxu0 0
    %480 = vmatpush1.bf16.msra.mxu0 0
    %481 = vmatprep.subr.bf16.mxu0 0
    %482 = vmatpush1.bf16.msra.mxu0 0
    %483 = vmatprep.subr.bf16.mxu0 0
    %484 = vmatpush1.bf16.msra.mxu0 0
    %485 = vmatprep.subr.bf16.mxu0 0
    %486 = vmatpush1.bf16.msra.mxu0 0
    %487 = vmatprep.subr.bf16.mxu0 0
    %488 = vmatpush1.bf16.msra.mxu0 0
    %489 = vmatprep.subr.bf16.mxu0 0
    %490 = vmatpush1.bf16.msra.mxu0 0
    %491 = vmatprep.subr.bf16.mxu0 0
    %492 = vmatpush1.bf16.msra.mxu0 0
    %493 = vmatprep.subr.bf16.mxu0 0
    %494 = vmatpush1.bf16.msra.mxu0 0
    %495 = vmatprep.subr.bf16.mxu0 0
    %496 = vmatpush1.bf16.msra.mxu0 0
    %497 = vmatprep.mubr.bf16.mxu0 0
    %498 = vmatmul.mubr.bf16.gmra.mrb[0].mxu0 %v453
    %v499 = vpop.f32.mrb[0].mxu0
    %v500 = vadd.f32 %v122, %v499
    %v501 = vpop.f32.mrb[0].mxu0
    %v502 = vpop.f32.mrb[0].mxu0
    %v503 = vadd.f32 %v123, %v502
    %v504 = vpop.f32.mrb[0].mxu0
    %505 = vmatprep.mubr.bf16.mxu0 0
    %506 = vmatmul.mubr.bf16.gmra.mrb[0].mxu0 %v456
    %v507 = vpop.f32.mrb[0].mxu0
    %v508 = vadd.f32 %v124, %v507
    %v509 = vpop.f32.mrb[0].mxu0
    %v510 = vpop.f32.mrb[0].mxu0
    %v511 = vadd.f32 %v125, %v510
    %v512 = vpop.f32.mrb[0].mxu0
    %513 = vmatprep.mubr.bf16.mxu0 0
    %514 = vmatmul.mubr.bf16.gmra.mrb[0].mxu0 %v459
    %v515 = vpop.f32.mrb[0].mxu0
    %v516 = vadd.f32 %v126, %v515
    %v517 = vpop.f32.mrb[0].mxu0
    %v518 = vpop.f32.mrb[0].mxu0
    %v519 = vadd.f32 %v127, %v518
    %v520 = vpop.f32.mrb[0].mxu0
    %521 = vdwg.mxu0
    %v522 = vsel %vm55, %v500, -inf
    %523 = vmax.xlane.f32.xlu0 %v522
    %v524 = vpop.xlane.xlu0 %523
    %v525 = vsel %vm55, %v503, -inf
    %526 = vmax.xlane.f32.xlu0 %v525
    %v527 = vpop.xlane.xlu0 %526
    %v528 = vsel %vm55, %v508, -inf
    %529 = vmax.xlane.f32.xlu0 %v528
    %v530 = vpop.xlane.xlu0 %529
    %v531 = vsel %vm55, %v511, -inf
    %532 = vmax.xlane.f32.xlu0 %v531
    %v533 = vpop.xlane.xlu0 %532
    %v534 = vsel %vm55, %v516, -inf
    %535 = vmax.xlane.f32.xlu0 %v534
    %v536 = vpop.xlane.xlu0 %535
    %v537 = vsel %vm55, %v519, -inf
    %538 = vmax.xlane.f32.xlu0 %v537
    %v539 = vpop.xlane.xlu0 %538
    %v540 = vsub.f32 %v500, %v524
    %v541 = vsub.f32 %v503, %v527
    %v542 = vsub.f32 %v508, %v530
    %v543 = vsub.f32 %v511, %v533
    %v544 = vsub.f32 %v516, %v536
    %v545 = vsub.f32 %v519, %v539
    %v546 = vmul.f32 %v540, 1.442695
    %v547 = vpow.pop %v546
    %v548 = vmul.f32 %v541, 1.442695
    %v549 = vpow.pop %v548
    %v550 = vmul.f32 %v542, 1.442695
    %v551 = vpow.pop %v550
    %v552 = vmul.f32 %v543, 1.442695
    %v553 = vpow.pop %v552
    %v554 = vmul.f32 %v544, 1.442695
    %v555 = vpow.pop %v554
    %v556 = vmul.f32 %v545, 1.442695
    %v557 = vpow.pop %v556
    %v558 = vsel %vm55, %v547, 0.0
    %559 = vadd.xlane.f32.xlu0 %v558
    %v560 = vpop.xlane.xlu0 %559
    %v561 = vsel %vm55, %v549, 0.0
    %562 = vadd.xlane.f32.xlu0 %v561
    %v563 = vpop.xlane.xlu0 %562
    %v564 = vsel %vm55, %v551, 0.0
    %565 = vadd.xlane.f32.xlu0 %v564
    %v566 = vpop.xlane.xlu0 %565
    %v567 = vsel %vm55, %v553, 0.0
    %568 = vadd.xlane.f32.xlu0 %v567
    %v569 = vpop.xlane.xlu0 %568
    %v570 = vsel %vm55, %v555, 0.0
    %571 = vadd.xlane.f32.xlu0 %v570
    %v572 = vpop.xlane.xlu0 %571
    %v573 = vsel %vm55, %v557, 0.0
    %574 = vadd.xlane.f32.xlu0 %v573
    %v575 = vpop.xlane.xlu0 %574
    %v576 = vrcp.pop %v560
    %v577 = vrcp.pop %v563
    %v578 = vrcp.pop %v566
    %v579 = vrcp.pop %v569
    %v580 = vrcp.pop %v572
    %v581 = vrcp.pop %v575
    %v582 = vmul.f32 %v547, %v576
    %v583 = vmul.f32 %v549, %v577
    %v584 = vmul.f32 %v551, %v578
    %v585 = vmul.f32 %v553, %v579
    %v586 = vmul.f32 %v555, %v580
    %v587 = vmul.f32 %v557, %v581
    %v588 = vpack.c.bf16 %v583, %v582
    %v589 = vpack.c.bf16 %v585, %v584
    %v590 = vpack.c.bf16 %v587, %v586
    %594 = vrot.lane.b32.xlu0 %v447, 96
    %v595 = vpop.permute.xlu0 %594
    %596 = vrot.lane.b32.xlu0 %v448, 96
    %v597 = vpop.permute.xlu0 %596
    %598 = vrot.lane.b32.xlu0 %v449, 96
    %v599 = vpop.permute.xlu0 %598
    %v604 = vsel %vm55, %v588, 0
    %v607 = vsel %vm55, %v589, 0
    %v610 = vsel %vm55, %v590, 0
    %612 = vmatprep.subr.bf16.mxu0 0
    %613 = vmatpush1.bf16.msra.mxu0 %v595
    %614 = vmatprep.subr.bf16.mxu0 0
    %615 = vmatpush1.bf16.msra.mxu0 %v597
    %616 = vmatprep.subr.bf16.mxu0 0
    %617 = vmatpush1.bf16.msra.mxu0 %v599
    %618 = vmatprep.subr.bf16.mxu0 0
    %619 = vmatpush1.bf16.msra.mxu0 0
    %620 = vmatprep.subr.bf16.mxu0 0
    %621 = vmatpush1.bf16.msra.mxu0 0
    %622 = vmatprep.subr.bf16.mxu0 0
    %623 = vmatpush1.bf16.msra.mxu0 0
    %624 = vmatprep.subr.bf16.mxu0 0
    %625 = vmatpush1.bf16.msra.mxu0 0
    %626 = vmatprep.subr.bf16.mxu0 0
    %627 = vmatpush1.bf16.msra.mxu0 0
    %628 = vmatprep.subr.bf16.mxu0 0
    %629 = vmatpush1.bf16.msra.mxu0 0
    %630 = vmatprep.subr.bf16.mxu0 0
    %631 = vmatpush1.bf16.msra.mxu0 0
    %632 = vmatprep.subr.bf16.mxu0 0
    %633 = vmatpush1.bf16.msra.mxu0 0
    %634 = vmatprep.subr.bf16.mxu0 0
    %635 = vmatpush1.bf16.msra.mxu0 0
    %636 = vmatprep.subr.bf16.mxu0 0
    %637 = vmatpush1.bf16.msra.mxu0 0
    %638 = vmatprep.subr.bf16.mxu0 0
    %639 = vmatpush1.bf16.msra.mxu0 0
    %640 = vmatprep.subr.bf16.mxu0 0
    %641 = vmatpush1.bf16.msra.mxu0 0
    %642 = vmatprep.subr.bf16.mxu0 0
    %643 = vmatpush1.bf16.msra.mxu0 0
    %644 = vmatprep.mubr.bf16.mxu0 0
    %645 = vmatmul.mubr.bf16.gmra.mrb[0].mxu0 %v604
    %v646 = vpop.f32.mrb[0].mxu0
    %v647 = vadd.f32 0.0, %v646
    %v648 = vpop.f32.mrb[0].mxu0
    %v649 = vpop.f32.mrb[0].mxu0
    %v650 = vadd.f32 0.0, %v649
    %v651 = vpop.f32.mrb[0].mxu0
    %652 = vmatprep.mubr.bf16.mxu0 0
    %653 = vmatmul.mubr.bf16.gmra.mrb[0].mxu0 %v607
    %v654 = vpop.f32.mrb[0].mxu0
    %v655 = vadd.f32 0.0, %v654
    %v656 = vpop.f32.mrb[0].mxu0
    %v657 = vpop.f32.mrb[0].mxu0
    %v658 = vadd.f32 0.0, %v657
    %v659 = vpop.f32.mrb[0].mxu0
    %660 = vmatprep.mubr.bf16.mxu0 0
    %661 = vmatmul.mubr.bf16.gmra.mrb[0].mxu0 %v610
    %v662 = vpop.f32.mrb[0].mxu0
    %v663 = vadd.f32 0.0, %v662
    %v664 = vpop.f32.mrb[0].mxu0
    %v665 = vpop.f32.mrb[0].mxu0
    %v666 = vadd.f32 0.0, %v665
    %v667 = vpop.f32.mrb[0].mxu0
    %668 = vdwg.mxu0
    %v669 = vpack.c.bf16 %v436, %v436
    %670 = vrot.lane.b32.xlu0 %v447, 120
    %v671 = vpop.permute.xlu0 %670
    %672 = vrot.lane.b32.xlu0 %v448, 120
    %v673 = vpop.permute.xlu0 %672
    %674 = vrot.lane.b32.xlu0 %v449, 120
    %v675 = vpop.permute.xlu0 %674
    %v677 = vsel %vm451, %v671, 0
    %v680 = vsel %vm451, %v673, 0
    %v683 = vsel %vm451, %v675, 0
    %v686 = vsel %vm461, %v669, 0
    %688 = vmatprep.subr.bf16.mxu0 0
    %689 = vmatpush1.bf16.msra.mxu0 %v686
    %690 = vmatprep.subr.bf16.mxu0 0
    %691 = vmatpush1.bf16.msra.mxu0 0
    %692 = vmatprep.subr.bf16.mxu0 0
    %693 = vmatpush1.bf16.msra.mxu0 0
    %694 = vmatprep.subr.bf16.mxu0 0
    %695 = vmatpush1.bf16.msra.mxu0 0
    %696 = vmatprep.subr.bf16.mxu0 0
    %697 = vmatpush1.bf16.msra.mxu0 0
    %698 = vmatprep.subr.bf16.mxu0 0
    %699 = vmatpush1.bf16.msra.mxu0 0
    %700 = vmatprep.subr.bf16.mxu0 0
    %701 = vmatpush1.bf16.msra.mxu0 0
    %702 = vmatprep.subr.bf16.mxu0 0
    %703 = vmatpush1.bf16.msra.mxu0 0
    %704 = vmatprep.subr.bf16.mxu0 0
    %705 = vmatpush1.bf16.msra.mxu0 0
    %706 = vmatprep.subr.bf16.mxu0 0
    %707 = vmatpush1.bf16.msra.mxu0 0
    %708 = vmatprep.subr.bf16.mxu0 0
    %709 = vmatpush1.bf16.msra.mxu0 0
    %710 = vmatprep.subr.bf16.mxu0 0
    %711 = vmatpush1.bf16.msra.mxu0 0
    %712 = vmatprep.subr.bf16.mxu0 0
    %713 = vmatpush1.bf16.msra.mxu0 0
    %714 = vmatprep.subr.bf16.mxu0 0
    %715 = vmatpush1.bf16.msra.mxu0 0
    %716 = vmatprep.subr.bf16.mxu0 0
    %717 = vmatpush1.bf16.msra.mxu0 0
    %718 = vmatprep.subr.bf16.mxu0 0
    %719 = vmatpush1.bf16.msra.mxu0 0
    %720 = vmatprep.mubr.bf16.mxu0 0
    %721 = vmatmul.mubr.bf16.gmra.mrb[0].mxu0 %v677
    %v722 = vpop.f32.mrb[0].mxu0
    %v723 = vadd.f32 %v122, %v722
    %v724 = vpop.f32.mrb[0].mxu0
    %v725 = vpop.f32.mrb[0].mxu0
    %v726 = vadd.f32 %v123, %v725
    %v727 = vpop.f32.mrb[0].mxu0
    %728 = vmatprep.mubr.bf16.mxu0 0
    %729 = vmatmul.mubr.bf16.gmra.mrb[0].mxu0 %v680
    %v730 = vpop.f32.mrb[0].mxu0
    %v731 = vadd.f32 %v124, %v730
    %v732 = vpop.f32.mrb[0].mxu0
    %v733 = vpop.f32.mrb[0].mxu0
    %v734 = vadd.f32 %v125, %v733
    %v735 = vpop.f32.mrb[0].mxu0
    %736 = vmatprep.mubr.bf16.mxu0 0
    %737 = vmatmul.mubr.bf16.gmra.mrb[0].mxu0 %v683
    %v738 = vpop.f32.mrb[0].mxu0
    %v739 = vadd.f32 %v126, %v738
    %v740 = vpop.f32.mrb[0].mxu0
    %v741 = vpop.f32.mrb[0].mxu0
    %v742 = vadd.f32 %v127, %v741
    %v743 = vpop.f32.mrb[0].mxu0
    %744 = vdwg.mxu0
    %v745 = vsel %vm55, %v723, -inf
    %746 = vmax.xlane.f32.xlu0 %v745
    %v747 = vpop.xlane.xlu0 %746
    %v748 = vsel %vm55, %v726, -inf
    %749 = vmax.xlane.f32.xlu0 %v748
    %v750 = vpop.xlane.xlu0 %749
    %v751 = vsel %vm55, %v731, -inf
    %752 = vmax.xlane.f32.xlu0 %v751
    %v753 = vpop.xlane.xlu0 %752
    %v754 = vsel %vm55, %v734, -inf
    %755 = vmax.xlane.f32.xlu0 %v754
    %v756 = vpop.xlane.xlu0 %755
    %v757 = vsel %vm55, %v739, -inf
    %758 = vmax.xlane.f32.xlu0 %v757
    %v759 = vpop.xlane.xlu0 %758
    %v760 = vsel %vm55, %v742, -inf
    %761 = vmax.xlane.f32.xlu0 %v760
    %v762 = vpop.xlane.xlu0 %761
    %v763 = vsub.f32 %v723, %v747
    %v764 = vsub.f32 %v726, %v750
    %v765 = vsub.f32 %v731, %v753
    %v766 = vsub.f32 %v734, %v756
    %v767 = vsub.f32 %v739, %v759
    %v768 = vsub.f32 %v742, %v762
    %v769 = vmul.f32 %v763, 1.442695
    %v770 = vpow.pop %v769
    %v771 = vmul.f32 %v764, 1.442695
    %v772 = vpow.pop %v771
    %v773 = vmul.f32 %v765, 1.442695
    %v774 = vpow.pop %v773
    %v775 = vmul.f32 %v766, 1.442695
    %v776 = vpow.pop %v775
    %v777 = vmul.f32 %v767, 1.442695
    %v778 = vpow.pop %v777
    %v779 = vmul.f32 %v768, 1.442695
    %v780 = vpow.pop %v779
    %v781 = vsel %vm55, %v770, 0.0
    %782 = vadd.xlane.f32.xlu0 %v781
    %v783 = vpop.xlane.xlu0 %782
    %v784 = vsel %vm55, %v772, 0.0
    %785 = vadd.xlane.f32.xlu0 %v784
    %v786 = vpop.xlane.xlu0 %785
    %v787 = vsel %vm55, %v774, 0.0
    %788 = vadd.xlane.f32.xlu0 %v787
    %v789 = vpop.xlane.xlu0 %788
    %v790 = vsel %vm55, %v776, 0.0
    %791 = vadd.xlane.f32.xlu0 %v790
    %v792 = vpop.xlane.xlu0 %791
    %v793 = vsel %vm55, %v778, 0.0
    %794 = vadd.xlane.f32.xlu0 %v793
    %v795 = vpop.xlane.xlu0 %794
    %v796 = vsel %vm55, %v780, 0.0
    %797 = vadd.xlane.f32.xlu0 %v796
    %v798 = vpop.xlane.xlu0 %797
    %v799 = vrcp.pop %v783
    %v800 = vrcp.pop %v786
    %v801 = vrcp.pop %v789
    %v802 = vrcp.pop %v792
    %v803 = vrcp.pop %v795
    %v804 = vrcp.pop %v798
    %v805 = vmul.f32 %v770, %v799
    %v806 = vmul.f32 %v772, %v800
    %v807 = vmul.f32 %v774, %v801
    %v808 = vmul.f32 %v776, %v802
    %v809 = vmul.f32 %v778, %v803
    %v810 = vmul.f32 %v780, %v804
    %v811 = vpack.c.bf16 %v806, %v805
    %v812 = vpack.c.bf16 %v808, %v807
    %v813 = vpack.c.bf16 %v810, %v809
    %814 = vrot.lane.b32.xlu0 %v447, 88
    %v815 = vpop.permute.xlu0 %814
    %816 = vrot.lane.b32.xlu0 %v448, 88
    %v817 = vpop.permute.xlu0 %816
    %818 = vrot.lane.b32.xlu0 %v449, 88
    %v819 = vpop.permute.xlu0 %818
    %v824 = vsel %vm55, %v811, 0
    %v827 = vsel %vm55, %v812, 0
    %v830 = vsel %vm55, %v813, 0
    %832 = vmatprep.subr.bf16.mxu0 0
    %833 = vmatpush1.bf16.msra.mxu0 %v815
    %834 = vmatprep.subr.bf16.mxu0 0
    %835 = vmatpush1.bf16.msra.mxu0 %v817
    %836 = vmatprep.subr.bf16.mxu0 0
    %837 = vmatpush1.bf16.msra.mxu0 %v819
    %838 = vmatprep.subr.bf16.mxu0 0
    %839 = vmatpush1.bf16.msra.mxu0 0
    %840 = vmatprep.subr.bf16.mxu0 0
    %841 = vmatpush1.bf16.msra.mxu0 0
    %842 = vmatprep.subr.bf16.mxu0 0
    %843 = vmatpush1.bf16.msra.mxu0 0
    %844 = vmatprep.subr.bf16.mxu0 0
    %845 = vmatpush1.bf16.msra.mxu0 0
    %846 = vmatprep.subr.bf16.mxu0 0
    %847 = vmatpush1.bf16.msra.mxu0 0
    %848 = vmatprep.subr.bf16.mxu0 0
    %849 = vmatpush1.bf16.msra.mxu0 0
    %850 = vmatprep.subr.bf16.mxu0 0
    %851 = vmatpush1.bf16.msra.mxu0 0
    %852 = vmatprep.subr.bf16.mxu0 0
    %853 = vmatpush1.bf16.msra.mxu0 0
    %854 = vmatprep.subr.bf16.mxu0 0
    %855 = vmatpush1.bf16.msra.mxu0 0
    %856 = vmatprep.subr.bf16.mxu0 0
    %857 = vmatpush1.bf16.msra.mxu0 0
    %858 = vmatprep.subr.bf16.mxu0 0
    %859 = vmatpush1.bf16.msra.mxu0 0
    %860 = vmatprep.subr.bf16.mxu0 0
    %861 = vmatpush1.bf16.msra.mxu0 0
    %862 = vmatprep.subr.bf16.mxu0 0
    %863 = vmatpush1.bf16.msra.mxu0 0
    %864 = vmatprep.mubr.bf16.mxu0 0
    %865 = vmatmul.mubr.bf16.gmra.mrb[0].mxu0 %v824
    %v866 = vpop.f32.mrb[0].mxu0
    %v867 = vadd.f32 0.0, %v866
    %v868 = vpop.f32.mrb[0].mxu0
    %v869 = vpop.f32.mrb[0].mxu0
    %v870 = vadd.f32 0.0, %v869
    %v871 = vpop.f32.mrb[0].mxu0
    %872 = vmatprep.mubr.bf16.mxu0 0
    %873 = vmatmul.mubr.bf16.gmra.mrb[0].mxu0 %v827
    %v874 = vpop.f32.mrb[0].mxu0
    %v875 = vadd.f32 0.0, %v874
    %v876 = vpop.f32.mrb[0].mxu0
    %v877 = vpop.f32.mrb[0].mxu0
    %v878 = vadd.f32 0.0, %v877
    %v879 = vpop.f32.mrb[0].mxu0
    %880 = vmatprep.mubr.bf16.mxu0 0
    %881 = vmatmul.mubr.bf16.gmra.mrb[0].mxu0 %v830
    %v882 = vpop.f32.mrb[0].mxu0
    %v883 = vadd.f32 0.0, %v882
    %v884 = vpop.f32.mrb[0].mxu0
    %v885 = vpop.f32.mrb[0].mxu0
    %v886 = vadd.f32 0.0, %v885
    %v887 = vpop.f32.mrb[0].mxu0
    %888 = vdwg.mxu0
    %v889 = vpack.c.bf16 %v441, %v441
    %890 = vrot.lane.b32.xlu0 %v447, 112
    %v891 = vpop.permute.xlu0 %890
    %892 = vrot.lane.b32.xlu0 %v448, 112
    %v893 = vpop.permute.xlu0 %892
    %894 = vrot.lane.b32.xlu0 %v449, 112
    %v895 = vpop.permute.xlu0 %894
    %v897 = vsel %vm451, %v891, 0
    %v900 = vsel %vm451, %v893, 0
    %v903 = vsel %vm451, %v895, 0
    %v906 = vsel %vm461, %v889, 0
    %908 = vmatprep.subr.bf16.mxu0 0
    %909 = vmatpush1.bf16.msra.mxu0 %v906
    %910 = vmatprep.subr.bf16.mxu0 0
    %911 = vmatpush1.bf16.msra.mxu0 0
    %912 = vmatprep.subr.bf16.mxu0 0
    %913 = vmatpush1.bf16.msra.mxu0 0
    %914 = vmatprep.subr.bf16.mxu0 0
    %915 = vmatpush1.bf16.msra.mxu0 0
    %916 = vmatprep.subr.bf16.mxu0 0
    %917 = vmatpush1.bf16.msra.mxu0 0
    %918 = vmatprep.subr.bf16.mxu0 0
    %919 = vmatpush1.bf16.msra.mxu0 0
    %920 = vmatprep.subr.bf16.mxu0 0
    %921 = vmatpush1.bf16.msra.mxu0 0
    %922 = vmatprep.subr.bf16.mxu0 0
    %923 = vmatpush1.bf16.msra.mxu0 0
    %924 = vmatprep.subr.bf16.mxu0 0
    %925 = vmatpush1.bf16.msra.mxu0 0
    %926 = vmatprep.subr.bf16.mxu0 0
    %927 = vmatpush1.bf16.msra.mxu0 0
    %928 = vmatprep.subr.bf16.mxu0 0
    %929 = vmatpush1.bf16.msra.mxu0 0
    %930 = vmatprep.subr.bf16.mxu0 0
    %931 = vmatpush1.bf16.msra.mxu0 0
    %932 = vmatprep.subr.bf16.mxu0 0
    %933 = vmatpush1.bf16.msra.mxu0 0
    %934 = vmatprep.subr.bf16.mxu0 0
    %935 = vmatpush1.bf16.msra.mxu0 0
    %936 = vmatprep.subr.bf16.mxu0 0
    %937 = vmatpush1.bf16.msra.mxu0 0
    %938 = vmatprep.subr.bf16.mxu0 0
    %939 = vmatpush1.bf16.msra.mxu0 0
    %940 = vmatprep.mubr.bf16.mxu0 0
    %941 = vmatmul.mubr.bf16.gmra.mrb[0].mxu0 %v897
    %v942 = vpop.f32.mrb[0].mxu0
    %v943 = vadd.f32 %v122, %v942
    %v944 = vpop.f32.mrb[0].mxu0
    %v945 = vpop.f32.mrb[0].mxu0
    %v946 = vadd.f32 %v123, %v945
    %v947 = vpop.f32.mrb[0].mxu0
    %948 = vmatprep.mubr.bf16.mxu0 0
    %949 = vmatmul.mubr.bf16.gmra.mrb[0].mxu0 %v900
    %v950 = vpop.f32.mrb[0].mxu0
    %v951 = vadd.f32 %v124, %v950
    %v952 = vpop.f32.mrb[0].mxu0
    %v953 = vpop.f32.mrb[0].mxu0
    %v954 = vadd.f32 %v125, %v953
    %v955 = vpop.f32.mrb[0].mxu0
    %956 = vmatprep.mubr.bf16.mxu0 0
    %957 = vmatmul.mubr.bf16.gmra.mrb[0].mxu0 %v903
    %v958 = vpop.f32.mrb[0].mxu0
    %v959 = vadd.f32 %v126, %v958
    %v960 = vpop.f32.mrb[0].mxu0
    %v961 = vpop.f32.mrb[0].mxu0
    %v962 = vadd.f32 %v127, %v961
    %v963 = vpop.f32.mrb[0].mxu0
    %964 = vdwg.mxu0
    %v965 = vsel %vm55, %v943, -inf
    %966 = vmax.xlane.f32.xlu0 %v965
    %v967 = vpop.xlane.xlu0 %966
    %v968 = vsel %vm55, %v946, -inf
    %969 = vmax.xlane.f32.xlu0 %v968
    %v970 = vpop.xlane.xlu0 %969
    %v971 = vsel %vm55, %v951, -inf
    %972 = vmax.xlane.f32.xlu0 %v971
    %v973 = vpop.xlane.xlu0 %972
    %v974 = vsel %vm55, %v954, -inf
    %975 = vmax.xlane.f32.xlu0 %v974
    %v976 = vpop.xlane.xlu0 %975
    %v977 = vsel %vm55, %v959, -inf
    %978 = vmax.xlane.f32.xlu0 %v977
    %v979 = vpop.xlane.xlu0 %978
    %v980 = vsel %vm55, %v962, -inf
    %981 = vmax.xlane.f32.xlu0 %v980
    %v982 = vpop.xlane.xlu0 %981
    %v983 = vsub.f32 %v943, %v967
    %v984 = vsub.f32 %v946, %v970
    %v985 = vsub.f32 %v951, %v973
    %v986 = vsub.f32 %v954, %v976
    %v987 = vsub.f32 %v959, %v979
    %v988 = vsub.f32 %v962, %v982
    %v989 = vmul.f32 %v983, 1.442695
    %v990 = vpow.pop %v989
    %v991 = vmul.f32 %v984, 1.442695
    %v992 = vpow.pop %v991
    %v993 = vmul.f32 %v985, 1.442695
    %v994 = vpow.pop %v993
    %v995 = vmul.f32 %v986, 1.442695
    %v996 = vpow.pop %v995
    %v997 = vmul.f32 %v987, 1.442695
    %v998 = vpow.pop %v997
    %v999 = vmul.f32 %v988, 1.442695
    %v1000 = vpow.pop %v999
    %v1001 = vsel %vm55, %v990, 0.0
    %1002 = vadd.xlane.f32.xlu0 %v1001
    %v1003 = vpop.xlane.xlu0 %1002
    %v1004 = vsel %vm55, %v992, 0.0
    %1005 = vadd.xlane.f32.xlu0 %v1004
    %v1006 = vpop.xlane.xlu0 %1005
    %v1007 = vsel %vm55, %v994, 0.0
    %1008 = vadd.xlane.f32.xlu0 %v1007
    %v1009 = vpop.xlane.xlu0 %1008
    %v1010 = vsel %vm55, %v996, 0.0
    %1011 = vadd.xlane.f32.xlu0 %v1010
    %v1012 = vpop.xlane.xlu0 %1011
    %v1013 = vsel %vm55, %v998, 0.0
    %1014 = vadd.xlane.f32.xlu0 %v1013
    %v1015 = vpop.xlane.xlu0 %1014
    %v1016 = vsel %vm55, %v1000, 0.0
    %1017 = vadd.xlane.f32.xlu0 %v1016
    %v1018 = vpop.xlane.xlu0 %1017
    %v1019 = vrcp.pop %v1003
    %v1020 = vrcp.pop %v1006
    %v1021 = vrcp.pop %v1009
    %v1022 = vrcp.pop %v1012
    %v1023 = vrcp.pop %v1015
    %v1024 = vrcp.pop %v1018
    %v1025 = vmul.f32 %v990, %v1019
    %v1026 = vmul.f32 %v992, %v1020
    %v1027 = vmul.f32 %v994, %v1021
    %v1028 = vmul.f32 %v996, %v1022
    %v1029 = vmul.f32 %v998, %v1023
    %v1030 = vmul.f32 %v1000, %v1024
    %v1031 = vpack.c.bf16 %v1026, %v1025
    %v1032 = vpack.c.bf16 %v1028, %v1027
    %v1033 = vpack.c.bf16 %v1030, %v1029
    %1034 = vrot.lane.b32.xlu0 %v447, 80
    %v1035 = vpop.permute.xlu0 %1034
    %1036 = vrot.lane.b32.xlu0 %v448, 80
    %v1037 = vpop.permute.xlu0 %1036
    %1038 = vrot.lane.b32.xlu0 %v449, 80
    %v1039 = vpop.permute.xlu0 %1038
    %v1044 = vsel %vm55, %v1031, 0
    %v1047 = vsel %vm55, %v1032, 0
    %v1050 = vsel %vm55, %v1033, 0
    %1052 = vmatprep.subr.bf16.mxu0 0
    %1053 = vmatpush1.bf16.msra.mxu0 %v1035
    %1054 = vmatprep.subr.bf16.mxu0 0
    %1055 = vmatpush1.bf16.msra.mxu0 %v1037
    %1056 = vmatprep.subr.bf16.mxu0 0
    %1057 = vmatpush1.bf16.msra.mxu0 %v1039
    %1058 = vmatprep.subr.bf16.mxu0 0
    %1059 = vmatpush1.bf16.msra.mxu0 0
    %1060 = vmatprep.subr.bf16.mxu0 0
    %1061 = vmatpush1.bf16.msra.mxu0 0
    %1062 = vmatprep.subr.bf16.mxu0 0
    %1063 = vmatpush1.bf16.msra.mxu0 0
    %1064 = vmatprep.subr.bf16.mxu0 0
    %1065 = vmatpush1.bf16.msra.mxu0 0
    %1066 = vmatprep.subr.bf16.mxu0 0
    %1067 = vmatpush1.bf16.msra.mxu0 0
    %1068 = vmatprep.subr.bf16.mxu0 0
    %1069 = vmatpush1.bf16.msra.mxu0 0
    %1070 = vmatprep.subr.bf16.mxu0 0
    %1071 = vmatpush1.bf16.msra.mxu0 0
    %1072 = vmatprep.subr.bf16.mxu0 0
    %1073 = vmatpush1.bf16.msra.mxu0 0
    %1074 = vmatprep.subr.bf16.mxu0 0
    %1075 = vmatpush1.bf16.msra.mxu0 0
    %1076 = vmatprep.subr.bf16.mxu0 0
    %1077 = vmatpush1.bf16.msra.mxu0 0
    %1078 = vmatprep.subr.bf16.mxu0 0
    %1079 = vmatpush1.bf16.msra.mxu0 0
    %1080 = vmatprep.subr.bf16.mxu0 0
    %1081 = vmatpush1.bf16.msra.mxu0 0
    %1082 = vmatprep.subr.bf16.mxu0 0
    %1083 = vmatpush1.bf16.msra.mxu0 0
    %1084 = vmatprep.mubr.bf16.mxu0 0
    %1085 = vmatmul.mubr.bf16.gmra.mrb[0].mxu0 %v1044
    %v1086 = vpop.f32.mrb[0].mxu0
    %v1087 = vadd.f32 0.0, %v1086
    %v1088 = vpop.f32.mrb[0].mxu0
    %v1089 = vpop.f32.mrb[0].mxu0
    %v1090 = vadd.f32 0.0, %v1089
    %v1091 = vpop.f32.mrb[0].mxu0
    %1092 = vmatprep.mubr.bf16.mxu0 0
    %1093 = vmatmul.mubr.bf16.gmra.mrb[0].mxu0 %v1047
    %v1094 = vpop.f32.mrb[0].mxu0
    %v1095 = vadd.f32 0.0, %v1094
    %v1096 = vpop.f32.mrb[0].mxu0
    %v1097 = vpop.f32.mrb[0].mxu0
    %v1098 = vadd.f32 0.0, %v1097
    %v1099 = vpop.f32.mrb[0].mxu0
    %1100 = vmatprep.mubr.bf16.mxu0 0
    %1101 = vmatmul.mubr.bf16.gmra.mrb[0].mxu0 %v1050
    %v1102 = vpop.f32.mrb[0].mxu0
    %v1103 = vadd.f32 0.0, %v1102
    %v1104 = vpop.f32.mrb[0].mxu0
    %v1105 = vpop.f32.mrb[0].mxu0
    %v1106 = vadd.f32 0.0, %v1105
    %v1107 = vpop.f32.mrb[0].mxu0
    %1108 = vdwg.mxu0
    %v1109 = vpack.c.bf16 %v444, %v444
    %1110 = vrot.lane.b32.xlu0 %v447, 104
    %v1111 = vpop.permute.xlu0 %1110
    %1112 = vrot.lane.b32.xlu0 %v448, 104
    %v1113 = vpop.permute.xlu0 %1112
    %1114 = vrot.lane.b32.xlu0 %v449, 104
    %v1115 = vpop.permute.xlu0 %1114
    %v1117 = vsel %vm451, %v1111, 0
    %v1120 = vsel %vm451, %v1113, 0
    %v1123 = vsel %vm451, %v1115, 0
    %v1126 = vsel %vm461, %v1109, 0
    %1128 = vmatprep.subr.bf16.mxu0 0
    %1129 = vmatpush1.bf16.msra.mxu0 %v1126
    %1130 = vmatprep.subr.bf16.mxu0 0
    %1131 = vmatpush1.bf16.msra.mxu0 0
    %1132 = vmatprep.subr.bf16.mxu0 0
    %1133 = vmatpush1.bf16.msra.mxu0 0
    %1134 = vmatprep.subr.bf16.mxu0 0
    %1135 = vmatpush1.bf16.msra.mxu0 0
    %1136 = vmatprep.subr.bf16.mxu0 0
    %1137 = vmatpush1.bf16.msra.mxu0 0
    %1138 = vmatprep.subr.bf16.mxu0 0
    %1139 = vmatpush1.bf16.msra.mxu0 0
    %1140 = vmatprep.subr.bf16.mxu0 0
    %1141 = vmatpush1.bf16.msra.mxu0 0
    %1142 = vmatprep.subr.bf16.mxu0 0
    %1143 = vmatpush1.bf16.msra.mxu0 0
    %1144 = vmatprep.subr.bf16.mxu0 0
    %1145 = vmatpush1.bf16.msra.mxu0 0
    %1146 = vmatprep.subr.bf16.mxu0 0
    %1147 = vmatpush1.bf16.msra.mxu0 0
    %1148 = vmatprep.subr.bf16.mxu0 0
    %1149 = vmatpush1.bf16.msra.mxu0 0
    %1150 = vmatprep.subr.bf16.mxu0 0
    %1151 = vmatpush1.bf16.msra.mxu0 0
    %1152 = vmatprep.subr.bf16.mxu0 0
    %1153 = vmatpush1.bf16.msra.mxu0 0
    %1154 = vmatprep.subr.bf16.mxu0 0
    %1155 = vmatpush1.bf16.msra.mxu0 0
    %1156 = vmatprep.subr.bf16.mxu0 0
    %1157 = vmatpush1.bf16.msra.mxu0 0
    %1158 = vmatprep.subr.bf16.mxu0 0
    %1159 = vmatpush1.bf16.msra.mxu0 0
    %1160 = vmatprep.mubr.bf16.mxu0 0
    %1161 = vmatmul.mubr.bf16.gmra.mrb[0].mxu0 %v1117
    %v1162 = vpop.f32.mrb[0].mxu0
    %v1163 = vadd.f32 %v122, %v1162
    %v1164 = vpop.f32.mrb[0].mxu0
    %v1165 = vpop.f32.mrb[0].mxu0
    %v1166 = vadd.f32 %v123, %v1165
    %v1167 = vpop.f32.mrb[0].mxu0
    %1168 = vmatprep.mubr.bf16.mxu0 0
    %1169 = vmatmul.mubr.bf16.gmra.mrb[0].mxu0 %v1120
    %v1170 = vpop.f32.mrb[0].mxu0
    %v1171 = vadd.f32 %v124, %v1170
    %v1172 = vpop.f32.mrb[0].mxu0
    %v1173 = vpop.f32.mrb[0].mxu0
    %v1174 = vadd.f32 %v125, %v1173
    %v1175 = vpop.f32.mrb[0].mxu0
    %1176 = vmatprep.mubr.bf16.mxu0 0
    %1177 = vmatmul.mubr.bf16.gmra.mrb[0].mxu0 %v1123
    %v1178 = vpop.f32.mrb[0].mxu0
    %v1179 = vadd.f32 %v126, %v1178
    %v1180 = vpop.f32.mrb[0].mxu0
    %v1181 = vpop.f32.mrb[0].mxu0
    %v1182 = vadd.f32 %v127, %v1181
    %v1183 = vpop.f32.mrb[0].mxu0
    %1184 = vdwg.mxu0
    %v1185 = vsel %vm55, %v1163, -inf
    %1186 = vmax.xlane.f32.xlu0 %v1185
    %v1187 = vpop.xlane.xlu0 %1186
    %v1188 = vsel %vm55, %v1166, -inf
    %1189 = vmax.xlane.f32.xlu0 %v1188
    %v1190 = vpop.xlane.xlu0 %1189
    %v1191 = vsel %vm55, %v1171, -inf
    %1192 = vmax.xlane.f32.xlu0 %v1191
    %v1193 = vpop.xlane.xlu0 %1192
    %v1194 = vsel %vm55, %v1174, -inf
    %1195 = vmax.xlane.f32.xlu0 %v1194
    %v1196 = vpop.xlane.xlu0 %1195
    %v1197 = vsel %vm55, %v1179, -inf
    %1198 = vmax.xlane.f32.xlu0 %v1197
    %v1199 = vpop.xlane.xlu0 %1198
    %v1200 = vsel %vm55, %v1182, -inf
    %1201 = vmax.xlane.f32.xlu0 %v1200
    %v1202 = vpop.xlane.xlu0 %1201
    %v1203 = vsub.f32 %v1163, %v1187
    %v1204 = vsub.f32 %v1166, %v1190
    %v1205 = vsub.f32 %v1171, %v1193
    %v1206 = vsub.f32 %v1174, %v1196
    %v1207 = vsub.f32 %v1179, %v1199
    %v1208 = vsub.f32 %v1182, %v1202
    %v1209 = vmul.f32 %v1203, 1.442695
    %v1210 = vpow.pop %v1209
    %v1211 = vmul.f32 %v1204, 1.442695
    %v1212 = vpow.pop %v1211
    %v1213 = vmul.f32 %v1205, 1.442695
    %v1214 = vpow.pop %v1213
    %v1215 = vmul.f32 %v1206, 1.442695
    %v1216 = vpow.pop %v1215
    %v1217 = vmul.f32 %v1207, 1.442695
    %v1218 = vpow.pop %v1217
    %v1219 = vmul.f32 %v1208, 1.442695
    %v1220 = vpow.pop %v1219
    %v1221 = vsel %vm55, %v1210, 0.0
    %1222 = vadd.xlane.f32.xlu0 %v1221
    %v1223 = vpop.xlane.xlu0 %1222
    %v1224 = vsel %vm55, %v1212, 0.0
    %1225 = vadd.xlane.f32.xlu0 %v1224
    %v1226 = vpop.xlane.xlu0 %1225
    %v1227 = vsel %vm55, %v1214, 0.0
    %1228 = vadd.xlane.f32.xlu0 %v1227
    %v1229 = vpop.xlane.xlu0 %1228
    %v1230 = vsel %vm55, %v1216, 0.0
    %1231 = vadd.xlane.f32.xlu0 %v1230
    %v1232 = vpop.xlane.xlu0 %1231
    %v1233 = vsel %vm55, %v1218, 0.0
    %1234 = vadd.xlane.f32.xlu0 %v1233
    %v1235 = vpop.xlane.xlu0 %1234
    %v1236 = vsel %vm55, %v1220, 0.0
    %1237 = vadd.xlane.f32.xlu0 %v1236
    %v1238 = vpop.xlane.xlu0 %1237
    %v1239 = vrcp.pop %v1223
    %v1240 = vrcp.pop %v1226
    %v1241 = vrcp.pop %v1229
    %v1242 = vrcp.pop %v1232
    %v1243 = vrcp.pop %v1235
    %v1244 = vrcp.pop %v1238
    %v1245 = vmul.f32 %v1210, %v1239
    %v1246 = vmul.f32 %v1212, %v1240
    %v1247 = vmul.f32 %v1214, %v1241
    %v1248 = vmul.f32 %v1216, %v1242
    %v1249 = vmul.f32 %v1218, %v1243
    %v1250 = vmul.f32 %v1220, %v1244
    %v1251 = vpack.c.bf16 %v1246, %v1245
    %v1252 = vpack.c.bf16 %v1248, %v1247
    %v1253 = vpack.c.bf16 %v1250, %v1249
    %1254 = vrot.lane.b32.xlu0 %v447, 72
    %v1255 = vpop.permute.xlu0 %1254
    %1256 = vrot.lane.b32.xlu0 %v448, 72
    %v1257 = vpop.permute.xlu0 %1256
    %1258 = vrot.lane.b32.xlu0 %v449, 72
    %v1259 = vpop.permute.xlu0 %1258
    %v1264 = vsel %vm55, %v1251, 0
    %v1267 = vsel %vm55, %v1252, 0
    %v1270 = vsel %vm55, %v1253, 0
    %1272 = vmatprep.subr.bf16.mxu0 0
    %1273 = vmatpush1.bf16.msra.mxu0 %v1255
    %1274 = vmatprep.subr.bf16.mxu0 0
    %1275 = vmatpush1.bf16.msra.mxu0 %v1257
    %1276 = vmatprep.subr.bf16.mxu0 0
    %1277 = vmatpush1.bf16.msra.mxu0 %v1259
    %1278 = vmatprep.subr.bf16.mxu0 0
    %1279 = vmatpush1.bf16.msra.mxu0 0
    %1280 = vmatprep.subr.bf16.mxu0 0
    %1281 = vmatpush1.bf16.msra.mxu0 0
    %1282 = vmatprep.subr.bf16.mxu0 0
    %1283 = vmatpush1.bf16.msra.mxu0 0
    %1284 = vmatprep.subr.bf16.mxu0 0
    %1285 = vmatpush1.bf16.msra.mxu0 0
    %1286 = vmatprep.subr.bf16.mxu0 0
    %1287 = vmatpush1.bf16.msra.mxu0 0
    %1288 = vmatprep.subr.bf16.mxu0 0
    %1289 = vmatpush1.bf16.msra.mxu0 0
    %1290 = vmatprep.subr.bf16.mxu0 0
    %1291 = vmatpush1.bf16.msra.mxu0 0
    %1292 = vmatprep.subr.bf16.mxu0 0
    %1293 = vmatpush1.bf16.msra.mxu0 0
    %1294 = vmatprep.subr.bf16.mxu0 0
    %1295 = vmatpush1.bf16.msra.mxu0 0
    %1296 = vmatprep.subr.bf16.mxu0 0
    %1297 = vmatpush1.bf16.msra.mxu0 0
    %1298 = vmatprep.subr.bf16.mxu0 0
    %1299 = vmatpush1.bf16.msra.mxu0 0
    %1300 = vmatprep.subr.bf16.mxu0 0
    %1301 = vmatpush1.bf16.msra.mxu0 0
    %1302 = vmatprep.subr.bf16.mxu0 0
    %1303 = vmatpush1.bf16.msra.mxu0 0
    %1304 = vmatprep.mubr.bf16.mxu0 0
    %1305 = vmatmul.mubr.bf16.gmra.mrb[0].mxu0 %v1264
    %v1306 = vpop.f32.mrb[0].mxu0
    %v1307 = vadd.f32 0.0, %v1306
    %v1308 = vpop.f32.mrb[0].mxu0
    %v1309 = vpop.f32.mrb[0].mxu0
    %v1310 = vadd.f32 0.0, %v1309
    %v1311 = vpop.f32.mrb[0].mxu0
    %1312 = vmatprep.mubr.bf16.mxu0 0
    %1313 = vmatmul.mubr.bf16.gmra.mrb[0].mxu0 %v1267
    %v1314 = vpop.f32.mrb[0].mxu0
    %v1315 = vadd.f32 0.0, %v1314
    %v1316 = vpop.f32.mrb[0].mxu0
    %v1317 = vpop.f32.mrb[0].mxu0
    %v1318 = vadd.f32 0.0, %v1317
    %v1319 = vpop.f32.mrb[0].mxu0
    %1320 = vmatprep.mubr.bf16.mxu0 0
    %1321 = vmatmul.mubr.bf16.gmra.mrb[0].mxu0 %v1270
    %v1322 = vpop.f32.mrb[0].mxu0
    %v1323 = vadd.f32 0.0, %v1322
    %v1324 = vpop.f32.mrb[0].mxu0
    %v1325 = vpop.f32.mrb[0].mxu0
    %v1326 = vadd.f32 0.0, %v1325
    %v1327 = vpop.f32.mrb[0].mxu0
    %1328 = vdwg.mxu0
    %1335 = vrot.lane.b32.xlu0 %v867, 8
    %v1336 = vpop.permute.xlu0 %1335
    %1337 = vrot.lane.b32.xlu0 %v870, 8
    %v1338 = vpop.permute.xlu0 %1337
    %1339 = vrot.lane.b32.xlu0 %v875, 8
    %v1340 = vpop.permute.xlu0 %1339
    %1341 = vrot.lane.b32.xlu0 %v878, 8
    %v1342 = vpop.permute.xlu0 %1341
    %1343 = vrot.lane.b32.xlu0 %v883, 8
    %v1344 = vpop.permute.xlu0 %1343
    %1345 = vrot.lane.b32.xlu0 %v886, 8
    %v1346 = vpop.permute.xlu0 %1345
    %1359 = vrot.lane.b32.xlu0 %v1087, 16
    %v1360 = vpop.permute.xlu0 %1359
    %1361 = vrot.lane.b32.xlu0 %v1090, 16
    %v1362 = vpop.permute.xlu0 %1361
    %1363 = vrot.lane.b32.xlu0 %v1095, 16
    %v1364 = vpop.permute.xlu0 %1363
    %1365 = vrot.lane.b32.xlu0 %v1098, 16
    %v1366 = vpop.permute.xlu0 %1365
    %1367 = vrot.lane.b32.xlu0 %v1103, 16
    %v1368 = vpop.permute.xlu0 %1367
    %1369 = vrot.lane.b32.xlu0 %v1106, 16
    %v1370 = vpop.permute.xlu0 %1369
    %1383 = vrot.lane.b32.xlu0 %v1307, 24
    %v1384 = vpop.permute.xlu0 %1383
    %1385 = vrot.lane.b32.xlu0 %v1310, 24
    %v1386 = vpop.permute.xlu0 %1385
    %1387 = vrot.lane.b32.xlu0 %v1315, 24
    %v1388 = vpop.permute.xlu0 %1387
    %1389 = vrot.lane.b32.xlu0 %v1318, 24
    %v1390 = vpop.permute.xlu0 %1389
    %1391 = vrot.lane.b32.xlu0 %v1323, 24
    %v1392 = vpop.permute.xlu0 %1391
    %1393 = vrot.lane.b32.xlu0 %v1326, 24
    %v1394 = vpop.permute.xlu0 %1393
    %v1401 = vsel %vm451, %v647, %v1336
    %v1402 = vsel %vm451, %v650, %v1338
    %v1403 = vsel %vm451, %v655, %v1340
    %v1404 = vsel %vm451, %v658, %v1342
    %v1405 = vsel %vm451, %v663, %v1344
    %v1406 = vsel %vm451, %v666, %v1346
    %vm1407 = vcmask 130048
    %v1408 = vsel %vm1407, %v1401, %v1360
    %v1409 = vsel %vm1407, %v1402, %v1362
    %v1410 = vsel %vm1407, %v1403, %v1364
    %v1411 = vsel %vm1407, %v1404, %v1366
    %v1412 = vsel %vm1407, %v1405, %v1368
    %v1413 = vsel %vm1407, %v1406, %v1370
    %vm1414 = vcmask 195584
    %v1415 = vsel %vm1414, %v1408, %v1384
    %v1416 = vsel %vm1414, %v1409, %v1386
    %v1417 = vsel %vm1414, %v1410, %v1388
    %v1418 = vsel %vm1414, %v1411, %v1390
    %v1419 = vsel %vm1414, %v1412, %v1392
    %v1420 = vsel %vm1414, %v1413, %v1394
    %v1421 = vpack.c.bf16 %v1416, %v1415
    %v1422 = vpack.c.bf16 %v1418, %v1417
    %v1423 = vpack.c.bf16 %v1420, %v1419
    %v1424 = vld [vmem:[%s1 + $0x38] sm:$0xf]
    %v1425 = vld [vmem:[%s1 + $0x3c] sm:$0xf]
    %v1426 = vld [vmem:[%s1 + $0x40] sm:$0xf]
    %v1427 = vld [vmem:[%s1 + $0x44] sm:$0xf]
    %v1428 = vld [vmem:[%s2 + $0x3] sm:$0x1]
    %v1429 = vlaneseq
    %v1430 = vshrl.u32 %v1429, 7
    %v1431 = vsub.s32 0, %v1430
    %v1432 = vrot.slane %v1428, %v1431
    %v1437 = vunpack.c.l.b16 %v1424
    %v1438 = vunpack.c.l.b16 %v1425
    %v1439 = vunpack.c.l.b16 %v1426
    %v1440 = vunpack.c.l.b16 %v1427
    %v1441 = vpack.c.b16 %v1438, %v1437
    %v1442 = vpack.c.b16 %v1440, %v1439
    %v1446 = vsel %vm130, %v1421, 0
    %v1449 = vsel %vm130, %v1422, 0
    %v1452 = vsel %vm130, %v1423, 0
    %1454 = vmatprep.subr.bf16.mxu0 0
    %1455 = vmatpush1.bf16.msra.mxu0 %v1441
    %1456 = vmatprep.subr.bf16.mxu0 0
    %1457 = vmatpush1.bf16.msra.mxu0 %v1442
    %1458 = vmatprep.subr.bf16.mxu0 0
    %1459 = vmatpush1.bf16.msra.mxu0 0
    %1460 = vmatprep.subr.bf16.mxu0 0
    %1461 = vmatpush1.bf16.msra.mxu0 0
    %1462 = vmatprep.subr.bf16.mxu0 0
    %1463 = vmatpush1.bf16.msra.mxu0 0
    %1464 = vmatprep.subr.bf16.mxu0 0
    %1465 = vmatpush1.bf16.msra.mxu0 0
    %1466 = vmatprep.subr.bf16.mxu0 0
    %1467 = vmatpush1.bf16.msra.mxu0 0
    %1468 = vmatprep.subr.bf16.mxu0 0
    %1469 = vmatpush1.bf16.msra.mxu0 0
    %1470 = vmatprep.subr.bf16.mxu0 0
    %1471 = vmatpush1.bf16.msra.mxu0 0
    %1472 = vmatprep.subr.bf16.mxu0 0
    %1473 = vmatpush1.bf16.msra.mxu0 0
    %1474 = vmatprep.subr.bf16.mxu0 0
    %1475 = vmatpush1.bf16.msra.mxu0 0
    %1476 = vmatprep.subr.bf16.mxu0 0
    %1477 = vmatpush1.bf16.msra.mxu0 0
    %1478 = vmatprep.subr.bf16.mxu0 0
    %1479 = vmatpush1.bf16.msra.mxu0 0
    %1480 = vmatprep.subr.bf16.mxu0 0
    %1481 = vmatpush1.bf16.msra.mxu0 0
    %1482 = vmatprep.subr.bf16.mxu0 0
    %1483 = vmatpush1.bf16.msra.mxu0 0
    %1484 = vmatprep.subr.bf16.mxu0 0
    %1485 = vmatpush1.bf16.msra.mxu0 0
    %1486 = vmatprep.mubr.bf16.mxu0 0
    %1487 = vmatmul.mubr.bf16.gmra.mrb[0].mxu0 %v1446
    %v1488 = vpop.f32.mrb[0].mxu0
    %v1489 = vadd.f32 %v1432, %v1488
    %v1490 = vpop.f32.mrb[0].mxu0
    %v1491 = vpop.f32.mrb[0].mxu0
    %v1492 = vadd.f32 %v1432, %v1491
    %v1493 = vpop.f32.mrb[0].mxu0
    %1494 = vmatprep.mubr.bf16.mxu0 0
    %1495 = vmatmul.mubr.bf16.gmra.mrb[0].mxu0 %v1449
    %v1496 = vpop.f32.mrb[0].mxu0
    %v1497 = vadd.f32 %v1432, %v1496
    %v1498 = vpop.f32.mrb[0].mxu0
    %v1499 = vpop.f32.mrb[0].mxu0
    %v1500 = vadd.f32 %v1432, %v1499
    %v1501 = vpop.f32.mrb[0].mxu0
    %1502 = vmatprep.mubr.bf16.mxu0 0
    %1503 = vmatmul.mubr.bf16.gmra.mrb[0].mxu0 %v1452
    %v1504 = vpop.f32.mrb[0].mxu0
    %v1505 = vadd.f32 %v1432, %v1504
    %v1506 = vpop.f32.mrb[0].mxu0
    %v1507 = vpop.f32.mrb[0].mxu0
    %v1508 = vadd.f32 %v1432, %v1507
    %v1509 = vpop.f32.mrb[0].mxu0
    %1510 = vdwg.mxu0
    %v1511 = vadd.f32 %v100, %v1489
    %v1512 = vadd.f32 %v103, %v1492
    %v1513 = vadd.f32 %v108, %v1497
    %v1514 = vadd.f32 %v111, %v1500
    %v1515 = vadd.f32 %v116, %v1505
    %v1516 = vadd.f32 %v119, %v1508
    %v1517 = vld [vmem:[%s2 + $0x4] sm:$0x1]
    %v1518 = vld [vmem:[%s2 + $0x5] sm:$0x1]
    %v1519 = vsel %vm130, %v1511, 0.0
    %1520 = vadd.xlane.f32.xlu0 %v1519
    %v1521 = vpop.xlane.xlu0 %1520
    %v1522 = vsel %vm130, %v1512, 0.0
    %1523 = vadd.xlane.f32.xlu0 %v1522
    %v1524 = vpop.xlane.xlu0 %1523
    %v1525 = vsel %vm130, %v1513, 0.0
    %1526 = vadd.xlane.f32.xlu0 %v1525
    %v1527 = vpop.xlane.xlu0 %1526
    %v1528 = vsel %vm130, %v1514, 0.0
    %1529 = vadd.xlane.f32.xlu0 %v1528
    %v1530 = vpop.xlane.xlu0 %1529
    %v1531 = vsel %vm130, %v1515, 0.0
    %1532 = vadd.xlane.f32.xlu0 %v1531
    %v1533 = vpop.xlane.xlu0 %1532
    %v1534 = vsel %vm130, %v1516, 0.0
    %1535 = vadd.xlane.f32.xlu0 %v1534
    %v1536 = vpop.xlane.xlu0 %1535
    %v1537 = vmul.f32 %v1521, %v149
    %v1538 = vmul.f32 %v1524, %v149
    %v1539 = vmul.f32 %v1527, %v149
    %v1540 = vmul.f32 %v1530, %v149
    %v1541 = vmul.f32 %v1533, %v149
    %v1542 = vmul.f32 %v1536, %v149
    %v1543 = vsub.f32 %v1511, %v1537
    %v1544 = vsub.f32 %v1512, %v1538
    %v1545 = vsub.f32 %v1513, %v1539
    %v1546 = vsub.f32 %v1514, %v1540
    %v1547 = vsub.f32 %v1515, %v1541
    %v1548 = vsub.f32 %v1516, %v1542
    %v1549 = vmul.f32 %v1543, %v1543
    %v1550 = vmul.f32 %v1544, %v1544
    %v1551 = vmul.f32 %v1545, %v1545
    %v1552 = vmul.f32 %v1546, %v1546
    %v1553 = vmul.f32 %v1547, %v1547
    %v1554 = vmul.f32 %v1548, %v1548
    %v1555 = vsel %vm130, %v1549, 0.0
    %1556 = vadd.xlane.f32.xlu0 %v1555
    %v1557 = vpop.xlane.xlu0 %1556
    %v1558 = vsel %vm130, %v1550, 0.0
    %1559 = vadd.xlane.f32.xlu0 %v1558
    %v1560 = vpop.xlane.xlu0 %1559
    %v1561 = vsel %vm130, %v1551, 0.0
    %1562 = vadd.xlane.f32.xlu0 %v1561
    %v1563 = vpop.xlane.xlu0 %1562
    %v1564 = vsel %vm130, %v1552, 0.0
    %1565 = vadd.xlane.f32.xlu0 %v1564
    %v1566 = vpop.xlane.xlu0 %1565
    %v1567 = vsel %vm130, %v1553, 0.0
    %1568 = vadd.xlane.f32.xlu0 %v1567
    %v1569 = vpop.xlane.xlu0 %1568
    %v1570 = vsel %vm130, %v1554, 0.0
    %1571 = vadd.xlane.f32.xlu0 %v1570
    %v1572 = vpop.xlane.xlu0 %1571
    %v1573 = vmul.f32 %v1557, %v149
    %v1574 = vmul.f32 %v1560, %v149
    %v1575 = vmul.f32 %v1563, %v149
    %v1576 = vmul.f32 %v1566, %v149
    %v1577 = vmul.f32 %v1569, %v149
    %v1578 = vmul.f32 %v1572, %v149
    %v1579 = vadd.f32 %v1573, 1e-12
    %v1580 = vadd.f32 %v1574, 1e-12
    %v1581 = vadd.f32 %v1575, 1e-12
    %v1582 = vadd.f32 %v1576, 1e-12
    %v1583 = vadd.f32 %v1577, 1e-12
    %v1584 = vadd.f32 %v1578, 1e-12
    %v1585 = vrsqrt.pop %v1579
    %v1586 = vrsqrt.pop %v1580
    %v1587 = vrsqrt.pop %v1581
    %v1588 = vrsqrt.pop %v1582
    %v1589 = vrsqrt.pop %v1583
    %v1590 = vrsqrt.pop %v1584
    %v1591 = vmul.f32 %v1543, %v1585
    %v1592 = vmul.f32 %v1544, %v1586
    %v1593 = vmul.f32 %v1545, %v1587
    %v1594 = vmul.f32 %v1546, %v1588
    %v1595 = vmul.f32 %v1547, %v1589
    %v1596 = vmul.f32 %v1548, %v1590
    %v1597 = vlaneseq
    %v1598 = vshrl.u32 %v1597, 7
    %v1599 = vsub.s32 0, %v1598
    %v1600 = vrot.slane %v1517, %v1599
    %v1601 = vmul.f32 %v1591, %v1600
    %v1602 = vmul.f32 %v1592, %v1600
    %v1603 = vmul.f32 %v1593, %v1600
    %v1604 = vmul.f32 %v1594, %v1600
    %v1605 = vmul.f32 %v1595, %v1600
    %v1606 = vmul.f32 %v1596, %v1600
    %v1607 = vlaneseq
    %v1608 = vshrl.u32 %v1607, 7
    %v1609 = vsub.s32 0, %v1608
    %v1610 = vrot.slane %v1518, %v1609
    %v1611 = vadd.f32 %v1601, %v1610
    %v1612 = vadd.f32 %v1602, %v1610
    %v1613 = vadd.f32 %v1603, %v1610
    %v1614 = vadd.f32 %v1604, %v1610
    %v1615 = vadd.f32 %v1605, %v1610
    %v1616 = vadd.f32 %v1606, %v1610
    %v1617 = vpack.c.bf16 %v1612, %v1611
    %v1618 = vpack.c.bf16 %v1614, %v1613
    %v1619 = vpack.c.bf16 %v1616, %v1615
    %v1620 = vld [vmem:[%s1 + $0x48] sm:$0xf]
    %v1621 = vld [vmem:[%s1 + $0x4c] sm:$0xf]
    %v1622 = vld [vmem:[%s1 + $0x50] sm:$0xf]
    %v1623 = vld [vmem:[%s1 + $0x54] sm:$0xf]
    %v1624 = vld [vmem:[%s2 + $0x6] sm:$0x1]
    %v1625 = vlaneseq
    %v1626 = vshrl.u32 %v1625, 7
    %v1627 = vsub.s32 0, %v1626
    %v1628 = vrot.slane %v1624, %v1627
    %v1633 = vunpack.c.l.b16 %v1620
    %v1634 = vunpack.c.l.b16 %v1621
    %v1635 = vunpack.c.l.b16 %v1622
    %v1636 = vunpack.c.l.b16 %v1623
    %v1637 = vpack.c.b16 %v1634, %v1633
    %v1638 = vpack.c.b16 %v1636, %v1635
    %v1642 = vsel %vm130, %v1617, 0
    %v1645 = vsel %vm130, %v1618, 0
    %v1648 = vsel %vm130, %v1619, 0
    %1650 = vmatprep.subr.bf16.mxu0 0
    %1651 = vmatpush1.bf16.msra.mxu0 %v1637
    %1652 = vmatprep.subr.bf16.mxu0 0
    %1653 = vmatpush1.bf16.msra.mxu0 %v1638
    %1654 = vmatprep.subr.bf16.mxu0 0
    %1655 = vmatpush1.bf16.msra.mxu0 0
    %1656 = vmatprep.subr.bf16.mxu0 0
    %1657 = vmatpush1.bf16.msra.mxu0 0
    %1658 = vmatprep.subr.bf16.mxu0 0
    %1659 = vmatpush1.bf16.msra.mxu0 0
    %1660 = vmatprep.subr.bf16.mxu0 0
    %1661 = vmatpush1.bf16.msra.mxu0 0
    %1662 = vmatprep.subr.bf16.mxu0 0
    %1663 = vmatpush1.bf16.msra.mxu0 0
    %1664 = vmatprep.subr.bf16.mxu0 0
    %1665 = vmatpush1.bf16.msra.mxu0 0
    %1666 = vmatprep.subr.bf16.mxu0 0
    %1667 = vmatpush1.bf16.msra.mxu0 0
    %1668 = vmatprep.subr.bf16.mxu0 0
    %1669 = vmatpush1.bf16.msra.mxu0 0
    %1670 = vmatprep.subr.bf16.mxu0 0
    %1671 = vmatpush1.bf16.msra.mxu0 0
    %1672 = vmatprep.subr.bf16.mxu0 0
    %1673 = vmatpush1.bf16.msra.mxu0 0
    %1674 = vmatprep.subr.bf16.mxu0 0
    %1675 = vmatpush1.bf16.msra.mxu0 0
    %1676 = vmatprep.subr.bf16.mxu0 0
    %1677 = vmatpush1.bf16.msra.mxu0 0
    %1678 = vmatprep.subr.bf16.mxu0 0
    %1679 = vmatpush1.bf16.msra.mxu0 0
    %1680 = vmatprep.subr.bf16.mxu0 0
    %1681 = vmatpush1.bf16.msra.mxu0 0
    %1682 = vmatprep.mubr.bf16.mxu0 0
    %1683 = vmatmul.mubr.bf16.gmra.mrb[0].mxu0 %v1642
    %v1684 = vpop.f32.mrb[0].mxu0
    %v1685 = vadd.f32 %v1628, %v1684
    %v1686 = vpop.f32.mrb[0].mxu0
    %v1687 = vpop.f32.mrb[0].mxu0
    %v1688 = vadd.f32 %v1628, %v1687
    %v1689 = vpop.f32.mrb[0].mxu0
    %1690 = vmatprep.mubr.bf16.mxu0 0
    %1691 = vmatmul.mubr.bf16.gmra.mrb[0].mxu0 %v1645
    %v1692 = vpop.f32.mrb[0].mxu0
    %v1693 = vadd.f32 %v1628, %v1692
    %v1694 = vpop.f32.mrb[0].mxu0
    %v1695 = vpop.f32.mrb[0].mxu0
    %v1696 = vadd.f32 %v1628, %v1695
    %v1697 = vpop.f32.mrb[0].mxu0
    %1698 = vmatprep.mubr.bf16.mxu0 0
    %1699 = vmatmul.mubr.bf16.gmra.mrb[0].mxu0 %v1648
    %v1700 = vpop.f32.mrb[0].mxu0
    %v1701 = vadd.f32 %v1628, %v1700
    %v1702 = vpop.f32.mrb[0].mxu0
    %v1703 = vpop.f32.mrb[0].mxu0
    %v1704 = vadd.f32 %v1628, %v1703
    %v1705 = vpop.f32.mrb[0].mxu0
    %1706 = vdwg.mxu0
    %v1707 = vmul.f32 %v1685, %v1685
    %v1708 = vmul.f32 %v1688, %v1688
    %v1709 = vmul.f32 %v1693, %v1693
    %v1710 = vmul.f32 %v1696, %v1696
    %v1711 = vmul.f32 %v1701, %v1701
    %v1712 = vmul.f32 %v1704, %v1704
    %v1713 = vmul.f32 %v1685, %v1707
    %v1714 = vmul.f32 %v1688, %v1708
    %v1715 = vmul.f32 %v1693, %v1709
    %v1716 = vmul.f32 %v1696, %v1710
    %v1717 = vmul.f32 %v1701, %v1711
    %v1718 = vmul.f32 %v1704, %v1712
    %v1719 = vmul.f32 %v1713, 0.044715
    %v1720 = vmul.f32 %v1714, 0.044715
    %v1721 = vmul.f32 %v1715, 0.044715
    %v1722 = vmul.f32 %v1716, 0.044715
    %v1723 = vmul.f32 %v1717, 0.044715
    %v1724 = vmul.f32 %v1718, 0.044715
    %v1725 = vadd.f32 %v1685, %v1719
    %v1726 = vadd.f32 %v1688, %v1720
    %v1727 = vadd.f32 %v1693, %v1721
    %v1728 = vadd.f32 %v1696, %v1722
    %v1729 = vadd.f32 %v1701, %v1723
    %v1730 = vadd.f32 %v1704, %v1724
    %v1731 = vmul.f32 %v1725, 0.7978846
    %v1732 = vmul.f32 %v1726, 0.7978846
    %v1733 = vmul.f32 %v1727, 0.7978846
    %v1734 = vmul.f32 %v1728, 0.7978846
    %v1735 = vmul.f32 %v1729, 0.7978846
    %v1736 = vmul.f32 %v1730, 0.7978846
    %v1737 = vtanh.pop %v1731
    %v1738 = vtanh.pop %v1732
    %v1739 = vtanh.pop %v1733
    %v1740 = vtanh.pop %v1734
    %v1741 = vtanh.pop %v1735
    %v1742 = vtanh.pop %v1736
    %v1743 = vadd.f32 %v1737, 1.0
    %v1744 = vadd.f32 %v1738, 1.0
    %v1745 = vadd.f32 %v1739, 1.0
    %v1746 = vadd.f32 %v1740, 1.0
    %v1747 = vadd.f32 %v1741, 1.0
    %v1748 = vadd.f32 %v1742, 1.0
    %v1749 = vmul.f32 %v1743, 0.5
    %v1750 = vmul.f32 %v1744, 0.5
    %v1751 = vmul.f32 %v1745, 0.5
    %v1752 = vmul.f32 %v1746, 0.5
    %v1753 = vmul.f32 %v1747, 0.5
    %v1754 = vmul.f32 %v1748, 0.5
    %v1755 = vmul.f32 %v1685, %v1749
    %v1756 = vmul.f32 %v1688, %v1750
    %v1757 = vmul.f32 %v1693, %v1751
    %v1758 = vmul.f32 %v1696, %v1752
    %v1759 = vmul.f32 %v1701, %v1753
    %v1760 = vmul.f32 %v1704, %v1754
    %v1761 = vpack.c.bf16 %v1756, %v1755
    %v1762 = vpack.c.bf16 %v1758, %v1757
    %v1763 = vpack.c.bf16 %v1760, %v1759
    %v1764 = vld [vmem:[%s1 + $0x58] sm:$0xf]
    %v1765 = vld [vmem:[%s1 + $0x5c] sm:$0xf]
    %v1766 = vld [vmem:[%s1 + $0x60] sm:$0xf]
    %v1767 = vld [vmem:[%s1 + $0x64] sm:$0xf]
    %v1768 = vld [vmem:[%s1 + $0x68] sm:$0xf]
    %v1769 = vld [vmem:[%s1 + $0x6c] sm:$0xf]
    %v1770 = vld [vmem:[%s1 + $0x70] sm:$0xf]
    %v1771 = vld [vmem:[%s1 + $0x74] sm:$0xf]
    %v1772 = vld [vmem:[%s2 + $0x7] sm:$0x1]
    %v1773 = vlaneseq
    %v1774 = vshrl.u32 %v1773, 7
    %v1775 = vsub.s32 0, %v1774
    %v1776 = vrot.slane %v1772, %v1775
    %v1785 = vunpack.c.l.b16 %v1764
    %v1786 = vunpack.c.l.b16 %v1765
    %v1787 = vunpack.c.l.b16 %v1766
    %v1788 = vunpack.c.l.b16 %v1767
    %v1789 = vunpack.c.l.b16 %v1768
    %v1790 = vunpack.c.l.b16 %v1769
    %v1791 = vunpack.c.l.b16 %v1770
    %v1792 = vunpack.c.l.b16 %v1771
    %v1793 = vpack.c.b16 %v1786, %v1785
    %v1794 = vpack.c.b16 %v1788, %v1787
    %v1795 = vpack.c.b16 %v1790, %v1789
    %v1796 = vpack.c.b16 %v1792, %v1791
    %vm1801 = vcmask 523264
    %v1803 = vsel %vm1801, %v1761, 0
    %v1806 = vsel %vm1801, %v1762, 0
    %v1809 = vsel %vm1801, %v1763, 0
    %1811 = vmatprep.subr.bf16.mxu0 0
    %1812 = vmatpush1.bf16.msra.mxu0 %v1793
    %1813 = vmatprep.subr.bf16.mxu0 0
    %1814 = vmatpush1.bf16.msra.mxu0 %v1794
    %1815 = vmatprep.subr.bf16.mxu0 0
    %1816 = vmatpush1.bf16.msra.mxu0 %v1795
    %1817 = vmatprep.subr.bf16.mxu0 0
    %1818 = vmatpush1.bf16.msra.mxu0 %v1796
    %1819 = vmatprep.subr.bf16.mxu0 0
    %1820 = vmatpush1.bf16.msra.mxu0 0
    %1821 = vmatprep.subr.bf16.mxu0 0
    %1822 = vmatpush1.bf16.msra.mxu0 0
    %1823 = vmatprep.subr.bf16.mxu0 0
    %1824 = vmatpush1.bf16.msra.mxu0 0
    %1825 = vmatprep.subr.bf16.mxu0 0
    %1826 = vmatpush1.bf16.msra.mxu0 0
    %1827 = vmatprep.subr.bf16.mxu0 0
    %1828 = vmatpush1.bf16.msra.mxu0 0
    %1829 = vmatprep.subr.bf16.mxu0 0
    %1830 = vmatpush1.bf16.msra.mxu0 0
    %1831 = vmatprep.subr.bf16.mxu0 0
    %1832 = vmatpush1.bf16.msra.mxu0 0
    %1833 = vmatprep.subr.bf16.mxu0 0
    %1834 = vmatpush1.bf16.msra.mxu0 0
    %1835 = vmatprep.subr.bf16.mxu0 0
    %1836 = vmatpush1.bf16.msra.mxu0 0
    %1837 = vmatprep.subr.bf16.mxu0 0
    %1838 = vmatpush1.bf16.msra.mxu0 0
    %1839 = vmatprep.subr.bf16.mxu0 0
    %1840 = vmatpush1.bf16.msra.mxu0 0
    %1841 = vmatprep.subr.bf16.mxu0 0
    %1842 = vmatpush1.bf16.msra.mxu0 0
    %1843 = vmatprep.mubr.bf16.mxu0 0
    %1844 = vmatmul.mubr.bf16.gmra.mrb[0].mxu0 %v1803
    %v1845 = vpop.f32.mrb[0].mxu0
    %v1846 = vadd.f32 %v1776, %v1845
    %v1847 = vpop.f32.mrb[0].mxu0
    %v1848 = vpop.f32.mrb[0].mxu0
    %v1849 = vadd.f32 %v1776, %v1848
    %v1850 = vpop.f32.mrb[0].mxu0
    %1851 = vmatprep.mubr.bf16.mxu0 0
    %1852 = vmatmul.mubr.bf16.gmra.mrb[0].mxu0 %v1806
    %v1853 = vpop.f32.mrb[0].mxu0
    %v1854 = vadd.f32 %v1776, %v1853
    %v1855 = vpop.f32.mrb[0].mxu0
    %v1856 = vpop.f32.mrb[0].mxu0
    %v1857 = vadd.f32 %v1776, %v1856
    %v1858 = vpop.f32.mrb[0].mxu0
    %1859 = vmatprep.mubr.bf16.mxu0 0
    %1860 = vmatmul.mubr.bf16.gmra.mrb[0].mxu0 %v1809
    %v1861 = vpop.f32.mrb[0].mxu0
    %v1862 = vadd.f32 %v1776, %v1861
    %v1863 = vpop.f32.mrb[0].mxu0
    %v1864 = vpop.f32.mrb[0].mxu0
    %v1865 = vadd.f32 %v1776, %v1864
    %v1866 = vpop.f32.mrb[0].mxu0
    %1867 = vdwg.mxu0
    %v1868 = vadd.f32 %v1511, %v1846
    %v1869 = vadd.f32 %v1512, %v1849
    %v1870 = vadd.f32 %v1513, %v1854
    %v1871 = vadd.f32 %v1514, %v1857
    %v1872 = vadd.f32 %v1515, %v1862
    %v1873 = vadd.f32 %v1516, %v1865
    %v1874 = vld [vmem:[%s2 + $0x8] sm:$0x1]
    %v1875 = vld [vmem:[%s2 + $0x9] sm:$0x1]
    %v1876 = vsel %vm130, %v1868, 0.0
    %1877 = vadd.xlane.f32.xlu0 %v1876
    %v1878 = vpop.xlane.xlu0 %1877
    %v1879 = vsel %vm130, %v1869, 0.0
    %1880 = vadd.xlane.f32.xlu0 %v1879
    %v1881 = vpop.xlane.xlu0 %1880
    %v1882 = vsel %vm130, %v1870, 0.0
    %1883 = vadd.xlane.f32.xlu0 %v1882
    %v1884 = vpop.xlane.xlu0 %1883
    %v1885 = vsel %vm130, %v1871, 0.0
    %1886 = vadd.xlane.f32.xlu0 %v1885
    %v1887 = vpop.xlane.xlu0 %1886
    %v1888 = vsel %vm130, %v1872, 0.0
    %1889 = vadd.xlane.f32.xlu0 %v1888
    %v1890 = vpop.xlane.xlu0 %1889
    %v1891 = vsel %vm130, %v1873, 0.0
    %1892 = vadd.xlane.f32.xlu0 %v1891
    %v1893 = vpop.xlane.xlu0 %1892
    %v1894 = vmul.f32 %v1878, %v149
    %v1895 = vmul.f32 %v1881, %v149
    %v1896 = vmul.f32 %v1884, %v149
    %v1897 = vmul.f32 %v1887, %v149
    %v1898 = vmul.f32 %v1890, %v149
    %v1899 = vmul.f32 %v1893, %v149
    %v1900 = vsub.f32 %v1868, %v1894
    %v1901 = vsub.f32 %v1869, %v1895
    %v1902 = vsub.f32 %v1870, %v1896
    %v1903 = vsub.f32 %v1871, %v1897
    %v1904 = vsub.f32 %v1872, %v1898
    %v1905 = vsub.f32 %v1873, %v1899
    %v1906 = vmul.f32 %v1900, %v1900
    %v1907 = vmul.f32 %v1901, %v1901
    %v1908 = vmul.f32 %v1902, %v1902
    %v1909 = vmul.f32 %v1903, %v1903
    %v1910 = vmul.f32 %v1904, %v1904
    %v1911 = vmul.f32 %v1905, %v1905
    %v1912 = vsel %vm130, %v1906, 0.0
    %1913 = vadd.xlane.f32.xlu0 %v1912
    %v1914 = vpop.xlane.xlu0 %1913
    %v1915 = vsel %vm130, %v1907, 0.0
    %1916 = vadd.xlane.f32.xlu0 %v1915
    %v1917 = vpop.xlane.xlu0 %1916
    %v1918 = vsel %vm130, %v1908, 0.0
    %1919 = vadd.xlane.f32.xlu0 %v1918
    %v1920 = vpop.xlane.xlu0 %1919
    %v1921 = vsel %vm130, %v1909, 0.0
    %1922 = vadd.xlane.f32.xlu0 %v1921
    %v1923 = vpop.xlane.xlu0 %1922
    %v1924 = vsel %vm130, %v1910, 0.0
    %1925 = vadd.xlane.f32.xlu0 %v1924
    %v1926 = vpop.xlane.xlu0 %1925
    %v1927 = vsel %vm130, %v1911, 0.0
    %1928 = vadd.xlane.f32.xlu0 %v1927
    %v1929 = vpop.xlane.xlu0 %1928
    %v1930 = vmul.f32 %v1914, %v149
    %v1931 = vmul.f32 %v1917, %v149
    %v1932 = vmul.f32 %v1920, %v149
    %v1933 = vmul.f32 %v1923, %v149
    %v1934 = vmul.f32 %v1926, %v149
    %v1935 = vmul.f32 %v1929, %v149
    %v1936 = vadd.f32 %v1930, 1e-12
    %v1937 = vadd.f32 %v1931, 1e-12
    %v1938 = vadd.f32 %v1932, 1e-12
    %v1939 = vadd.f32 %v1933, 1e-12
    %v1940 = vadd.f32 %v1934, 1e-12
    %v1941 = vadd.f32 %v1935, 1e-12
    %v1942 = vrsqrt.pop %v1936
    %v1943 = vrsqrt.pop %v1937
    %v1944 = vrsqrt.pop %v1938
    %v1945 = vrsqrt.pop %v1939
    %v1946 = vrsqrt.pop %v1940
    %v1947 = vrsqrt.pop %v1941
    %v1948 = vmul.f32 %v1900, %v1942
    %v1949 = vmul.f32 %v1901, %v1943
    %v1950 = vmul.f32 %v1902, %v1944
    %v1951 = vmul.f32 %v1903, %v1945
    %v1952 = vmul.f32 %v1904, %v1946
    %v1953 = vmul.f32 %v1905, %v1947
    %v1954 = vlaneseq
    %v1955 = vshrl.u32 %v1954, 7
    %v1956 = vsub.s32 0, %v1955
    %v1957 = vrot.slane %v1874, %v1956
    %v1958 = vmul.f32 %v1948, %v1957
    %v1959 = vmul.f32 %v1949, %v1957
    %v1960 = vmul.f32 %v1950, %v1957
    %v1961 = vmul.f32 %v1951, %v1957
    %v1962 = vmul.f32 %v1952, %v1957
    %v1963 = vmul.f32 %v1953, %v1957
    %v1964 = vlaneseq
    %v1965 = vshrl.u32 %v1964, 7
    %v1966 = vsub.s32 0, %v1965
    %v1967 = vrot.slane %v1875, %v1966
    %v1968 = vadd.f32 %v1958, %v1967
    %v1969 = vadd.f32 %v1959, %v1967
    %v1970 = vadd.f32 %v1960, %v1967
    %v1971 = vadd.f32 %v1961, %v1967
    %v1972 = vadd.f32 %v1962, %v1967
    %v1973 = vadd.f32 %v1963, %v1967
    %v1974 = vpack.c.bf16 %v1969, %v1968
    %v1975 = vpack.c.bf16 %v1971, %v1970
    %v1976 = vpack.c.bf16 %v1973, %v1972
    %v1977 = vld [vmem:[%s1 + $0x78] sm:$0xf]
    %v1978 = vld [vmem:[%s1 + $0x7c] sm:$0xf]
    %v1979 = vld [vmem:[%s1 + $0x80] sm:$0xf]
    %v1980 = vld [vmem:[%s1 + $0x84] sm:$0xf]
    %v1981 = vld [vmem:[%s2 + $0xa] sm:$0x1]
    %v1982 = vlaneseq
    %v1983 = vshrl.u32 %v1982, 7
    %v1984 = vsub.s32 0, %v1983
    %v1985 = vrot.slane %v1981, %v1984
    %v1990 = vunpack.c.l.b16 %v1977
    %v1991 = vunpack.c.l.b16 %v1978
    %v1992 = vunpack.c.l.b16 %v1979
    %v1993 = vunpack.c.l.b16 %v1980
    %v1994 = vpack.c.b16 %v1991, %v1990
    %v1995 = vpack.c.b16 %v1993, %v1992
    %v1999 = vsel %vm130, %v1974, 0
    %v2002 = vsel %vm130, %v1975, 0
    %v2005 = vsel %vm130, %v1976, 0
    %2007 = vmatprep.subr.bf16.mxu0 0
    %2008 = vmatpush1.bf16.msra.mxu0 %v1994
    %2009 = vmatprep.subr.bf16.mxu0 0
    %2010 = vmatpush1.bf16.msra.mxu0 %v1995
    %2011 = vmatprep.subr.bf16.mxu0 0
    %2012 = vmatpush1.bf16.msra.mxu0 0
    %2013 = vmatprep.subr.bf16.mxu0 0
    %2014 = vmatpush1.bf16.msra.mxu0 0
    %2015 = vmatprep.subr.bf16.mxu0 0
    %2016 = vmatpush1.bf16.msra.mxu0 0
    %2017 = vmatprep.subr.bf16.mxu0 0
    %2018 = vmatpush1.bf16.msra.mxu0 0
    %2019 = vmatprep.subr.bf16.mxu0 0
    %2020 = vmatpush1.bf16.msra.mxu0 0
    %2021 = vmatprep.subr.bf16.mxu0 0
    %2022 = vmatpush1.bf16.msra.mxu0 0
    %2023 = vmatprep.subr.bf16.mxu0 0
    %2024 = vmatpush1.bf16.msra.mxu0 0
    %2025 = vmatprep.subr.bf16.mxu0 0
    %2026 = vmatpush1.bf16.msra.mxu0 0
    %2027 = vmatprep.subr.bf16.mxu0 0
    %2028 = vmatpush1.bf16.msra.mxu0 0
    %2029 = vmatprep.subr.bf16.mxu0 0
    %2030 = vmatpush1.bf16.msra.mxu0 0
    %2031 = vmatprep.subr.bf16.mxu0 0
    %2032 = vmatpush1.bf16.msra.mxu0 0
    %2033 = vmatprep.subr.bf16.mxu0 0
    %2034 = vmatpush1.bf16.msra.mxu0 0
    %2035 = vmatprep.subr.bf16.mxu0 0
    %2036 = vmatpush1.bf16.msra.mxu0 0
    %2037 = vmatprep.subr.bf16.mxu0 0
    %2038 = vmatpush1.bf16.msra.mxu0 0
    %2039 = vmatprep.mubr.bf16.mxu0 0
    %2040 = vmatmul.mubr.bf16.gmra.mrb[0].mxu0 %v1999
    %v2041 = vpop.f32.mrb[0].mxu0
    %v2042 = vadd.f32 %v1985, %v2041
    %v2043 = vpop.f32.mrb[0].mxu0
    %v2044 = vpop.f32.mrb[0].mxu0
    %v2045 = vadd.f32 %v1985, %v2044
    %v2046 = vpop.f32.mrb[0].mxu0
    %2047 = vmatprep.mubr.bf16.mxu0 0
    %2048 = vmatmul.mubr.bf16.gmra.mrb[0].mxu0 %v2002
    %v2049 = vpop.f32.mrb[0].mxu0
    %v2050 = vadd.f32 %v1985, %v2049
    %v2051 = vpop.f32.mrb[0].mxu0
    %v2052 = vpop.f32.mrb[0].mxu0
    %v2053 = vadd.f32 %v1985, %v2052
    %v2054 = vpop.f32.mrb[0].mxu0
    %2055 = vmatprep.mubr.bf16.mxu0 0
    %2056 = vmatmul.mubr.bf16.gmra.mrb[0].mxu0 %v2005
    %v2057 = vpop.f32.mrb[0].mxu0
    %v2058 = vadd.f32 %v1985, %v2057
    %v2059 = vpop.f32.mrb[0].mxu0
    %v2060 = vpop.f32.mrb[0].mxu0
    %v2061 = vadd.f32 %v1985, %v2060
    %v2062 = vpop.f32.mrb[0].mxu0
    %2063 = vdwg.mxu0
    %2064 = vxpose.xlu0.b32.start [1/16] %v1968, 128
    %2065 = vxpose.xlu0.b32.cont [2/16] %v1969, 128
    %2066 = vxpose.xlu0.b32.cont [3/16] %v1970, 128
    %2067 = vxpose.xlu0.b32.cont [4/16] %v1971, 128
    %2068 = vxpose.xlu0.b32.cont [5/16] %v1972, 128
    %2069 = vxpose.xlu0.b32.cont [6/16] %v1973, 128
    %2070 = vxpose.xlu0.b32.cont [7/16] 0.0, 128
    %2071 = vxpose.xlu0.b32.cont [8/16] 0.0, 128
    %2072 = vxpose.xlu0.b32.cont [9/16] 0.0, 128
    %2073 = vxpose.xlu0.b32.cont [10/16] 0.0, 128
    %2074 = vxpose.xlu0.b32.cont [11/16] 0.0, 128
    %2075 = vxpose.xlu0.b32.cont [12/16] 0.0, 128
    %2076 = vxpose.xlu0.b32.cont [13/16] 0.0, 128
    %2077 = vxpose.xlu0.b32.cont [14/16] 0.0, 128
    %2078 = vxpose.xlu0.b32.cont [15/16] 0.0, 128
    %2079 = vxpose.xlu0.b32.end [16/16] 0.0, 128
    %v2080 = vpop.trf.xlu0
    %v2081 = vpop.trf.xlu0
    %v2082 = vpop.trf.xlu0
    %v2083 = vpop.trf.xlu0
    %v2084 = vpop.trf.xlu0
    %v2085 = vpop.trf.xlu0
    %v2086 = vpop.trf.xlu0
    %v2087 = vpop.trf.xlu0
    %v2088 = vpop.trf.xlu0
    %v2089 = vpop.trf.xlu0
    %v2090 = vpop.trf.xlu0
    %v2091 = vpop.trf.xlu0
    %v2092 = vpop.trf.xlu0
    %v2093 = vpop.trf.xlu0
    %v2094 = vpop.trf.xlu0
    %v2095 = vpop.trf.xlu0
    %v2096 = vpack.c.bf16 %v2081, %v2080
    %v2097 = vpack.c.bf16 %v2083, %v2082
    %v2098 = vld [vmem:[%s1 + $0x88] sm:$0xf]
    %v2099 = vld [vmem:[%s1 + $0x8c] sm:$0xf]
    %v2100 = vld [vmem:[%s1 + $0x90] sm:$0xf]
    %v2101 = vld [vmem:[%s1 + $0x94] sm:$0xf]
    %2102 = vset.pattern.permute.xlu0 1
    %2103 = vperm.xlu0 %2102, %v358
    %v2104 = vpop.permute.xlu0 %2103
    %2106 = vset.pattern.permute.xlu0 1
    %2107 = vperm.xlu0 %2106, %v359
    %v2108 = vpop.permute.xlu0 %2107
    %2110 = vset.pattern.permute.xlu0 1
    %2111 = vperm.xlu0 %2110, %v360
    %v2112 = vpop.permute.xlu0 %2111
    %2114 = vset.pattern.permute.xlu0 1
    %2115 = vperm.xlu0 %2114, %v361
    %v2116 = vpop.permute.xlu0 %2115
    %v2122 = vunpack.c.l.b16 %v2098
    %v2123 = vunpack.c.l.b16 %v2099
    %v2124 = vunpack.c.l.b16 %v2100
    %v2125 = vunpack.c.l.b16 %v2101
    %v2126 = vpack.c.b16 %v2123, %v2122
    %v2127 = vpack.c.b16 %v2125, %v2124
    %v2129 = vsel %vm130, %v2126, 0
    %v2132 = vsel %vm130, %v2127, 0
    %2134 = vmatprep.subr.bf16.mxu0 0
    %2135 = vmatpush1.bf16.msra.mxu0 %v2096
    %2136 = vmatprep.subr.bf16.mxu0 0
    %2137 = vmatpush1.bf16.msra.mxu0 %v2097
    %2138 = vmatprep.subr.bf16.mxu0 0
    %2139 = vmatpush1.bf16.msra.mxu0 0
    %2140 = vmatprep.subr.bf16.mxu0 0
    %2141 = vmatpush1.bf16.msra.mxu0 0
    %2142 = vmatprep.subr.bf16.mxu0 0
    %2143 = vmatpush1.bf16.msra.mxu0 0
    %2144 = vmatprep.subr.bf16.mxu0 0
    %2145 = vmatpush1.bf16.msra.mxu0 0
    %2146 = vmatprep.subr.bf16.mxu0 0
    %2147 = vmatpush1.bf16.msra.mxu0 0
    %2148 = vmatprep.subr.bf16.mxu0 0
    %2149 = vmatpush1.bf16.msra.mxu0 0
    %2150 = vmatprep.subr.bf16.mxu0 0
    %2151 = vmatpush1.bf16.msra.mxu0 0
    %2152 = vmatprep.subr.bf16.mxu0 0
    %2153 = vmatpush1.bf16.msra.mxu0 0
    %2154 = vmatprep.subr.bf16.mxu0 0
    %2155 = vmatpush1.bf16.msra.mxu0 0
    %2156 = vmatprep.subr.bf16.mxu0 0
    %2157 = vmatpush1.bf16.msra.mxu0 0
    %2158 = vmatprep.subr.bf16.mxu0 0
    %2159 = vmatpush1.bf16.msra.mxu0 0
    %2160 = vmatprep.subr.bf16.mxu0 0
    %2161 = vmatpush1.bf16.msra.mxu0 0
    %2162 = vmatprep.subr.bf16.mxu0 0
    %2163 = vmatpush1.bf16.msra.mxu0 0
    %2164 = vmatprep.subr.bf16.mxu0 0
    %2165 = vmatpush1.bf16.msra.mxu0 0
    %2166 = vmatprep.mubr.bf16.mxu0 0
    %2167 = vmatmul.mubr.bf16.gmra.mrb[0].mxu0 %v2129
    %v2168 = vpop.f32.mrb[0].mxu0
    %v2169 = vadd.f32 %v2104, %v2168
    %v2170 = vpop.f32.mrb[0].mxu0
    %v2171 = vpop.f32.mrb[0].mxu0
    %v2172 = vadd.f32 %v2108, %v2171
    %v2173 = vpop.f32.mrb[0].mxu0
    %2174 = vmatprep.mubr.bf16.mxu0 0
    %2175 = vmatmul.mubr.bf16.gmra.mrb[0].mxu0 %v2132
    %v2176 = vpop.f32.mrb[0].mxu0
    %v2177 = vadd.f32 %v2112, %v2176
    %v2178 = vpop.f32.mrb[0].mxu0
    %v2179 = vpop.f32.mrb[0].mxu0
    %v2180 = vadd.f32 %v2116, %v2179
    %v2181 = vpop.f32.mrb[0].mxu0
    %2182 = vdwg.mxu0
    %v2183 = vpack.c.bf16 %v2045, %v2042
    %v2184 = vpack.c.bf16 %v2053, %v2050
    %v2185 = vpack.c.bf16 %v2061, %v2058
    %v2186 = vpack.c.bf16 %v2169, %v2169
    %v2188 = vsel %vm451, %v2183, 0
    %v2191 = vsel %vm451, %v2184, 0
    %v2194 = vsel %vm451, %v2185, 0
    %v2197 = vsel %vm461, %v2186, 0
    %2199 = vmatprep.subr.bf16.mxu0 0
    %2200 = vmatpush1.bf16.msra.mxu0 %v2197
    %2201 = vmatprep.subr.bf16.mxu0 0
    %2202 = vmatpush1.bf16.msra.mxu0 0
    %2203 = vmatprep.subr.bf16.mxu0 0
    %2204 = vmatpush1.bf16.msra.mxu0 0
    %2205 = vmatprep.subr.bf16.mxu0 0
    %2206 = vmatpush1.bf16.msra.mxu0 0
    %2207 = vmatprep.subr.bf16.mxu0 0
    %2208 = vmatpush1.bf16.msra.mxu0 0
    %2209 = vmatprep.subr.bf16.mxu0 0
    %2210 = vmatpush1.bf16.msra.mxu0 0
    %2211 = vmatprep.subr.bf16.mxu0 0
    %2212 = vmatpush1.bf16.msra.mxu0 0
    %2213 = vmatprep.subr.bf16.mxu0 0
    %2214 = vmatpush1.bf16.msra.mxu0 0
    %2215 = vmatprep.subr.bf16.mxu0 0
    %2216 = vmatpush1.bf16.msra.mxu0 0
    %2217 = vmatprep.subr.bf16.mxu0 0
    %2218 = vmatpush1.bf16.msra.mxu0 0
    %2219 = vmatprep.subr.bf16.mxu0 0
    %2220 = vmatpush1.bf16.msra.mxu0 0
    %2221 = vmatprep.subr.bf16.mxu0 0
    %2222 = vmatpush1.bf16.msra.mxu0 0
    %2223 = vmatprep.subr.bf16.mxu0 0
    %2224 = vmatpush1.bf16.msra.mxu0 0
    %2225 = vmatprep.subr.bf16.mxu0 0
    %2226 = vmatpush1.bf16.msra.mxu0 0
    %2227 = vmatprep.subr.bf16.mxu0 0
    %2228 = vmatpush1.bf16.msra.mxu0 0
    %2229 = vmatprep.subr.bf16.mxu0 0
    %2230 = vmatpush1.bf16.msra.mxu0 0
    %2231 = vmatprep.mubr.bf16.mxu0 0
    %2232 = vmatmul.mubr.bf16.gmra.mrb[0].mxu0 %v2188
    %v2233 = vpop.f32.mrb[0].mxu0
    %v2234 = vadd.f32 %v122, %v2233
    %v2235 = vpop.f32.mrb[0].mxu0
    %v2236 = vpop.f32.mrb[0].mxu0
    %v2237 = vadd.f32 %v123, %v2236
    %v2238 = vpop.f32.mrb[0].mxu0
    %2239 = vmatprep.mubr.bf16.mxu0 0
    %2240 = vmatmul.mubr.bf16.gmra.mrb[0].mxu0 %v2191
    %v2241 = vpop.f32.mrb[0].mxu0
    %v2242 = vadd.f32 %v124, %v2241
    %v2243 = vpop.f32.mrb[0].mxu0
    %v2244 = vpop.f32.mrb[0].mxu0
    %v2245 = vadd.f32 %v125, %v2244
    %v2246 = vpop.f32.mrb[0].mxu0
    %2247 = vmatprep.mubr.bf16.mxu0 0
    %2248 = vmatmul.mubr.bf16.gmra.mrb[0].mxu0 %v2194
    %v2249 = vpop.f32.mrb[0].mxu0
    %v2250 = vadd.f32 %v126, %v2249
    %v2251 = vpop.f32.mrb[0].mxu0
    %v2252 = vpop.f32.mrb[0].mxu0
    %v2253 = vadd.f32 %v127, %v2252
    %v2254 = vpop.f32.mrb[0].mxu0
    %2255 = vdwg.mxu0
    %v2256 = vsel %vm55, %v2234, -inf
    %2257 = vmax.xlane.f32.xlu0 %v2256
    %v2258 = vpop.xlane.xlu0 %2257
    %v2259 = vsel %vm55, %v2237, -inf
    %2260 = vmax.xlane.f32.xlu0 %v2259
    %v2261 = vpop.xlane.xlu0 %2260
    %v2262 = vsel %vm55, %v2242, -inf
    %2263 = vmax.xlane.f32.xlu0 %v2262
    %v2264 = vpop.xlane.xlu0 %2263
    %v2265 = vsel %vm55, %v2245, -inf
    %2266 = vmax.xlane.f32.xlu0 %v2265
    %v2267 = vpop.xlane.xlu0 %2266
    %v2268 = vsel %vm55, %v2250, -inf
    %2269 = vmax.xlane.f32.xlu0 %v2268
    %v2270 = vpop.xlane.xlu0 %2269
    %v2271 = vsel %vm55, %v2253, -inf
    %2272 = vmax.xlane.f32.xlu0 %v2271
    %v2273 = vpop.xlane.xlu0 %2272
    %v2274 = vsub.f32 %v2234, %v2258
    %v2275 = vsub.f32 %v2237, %v2261
    %v2276 = vsub.f32 %v2242, %v2264
    %v2277 = vsub.f32 %v2245, %v2267
    %v2278 = vsub.f32 %v2250, %v2270
    %v2279 = vsub.f32 %v2253, %v2273
    %v2280 = vmul.f32 %v2274, 1.442695
    %v2281 = vpow.pop %v2280
    %v2282 = vmul.f32 %v2275, 1.442695
    %v2283 = vpow.pop %v2282
    %v2284 = vmul.f32 %v2276, 1.442695
    %v2285 = vpow.pop %v2284
    %v2286 = vmul.f32 %v2277, 1.442695
    %v2287 = vpow.pop %v2286
    %v2288 = vmul.f32 %v2278, 1.442695
    %v2289 = vpow.pop %v2288
    %v2290 = vmul.f32 %v2279, 1.442695
    %v2291 = vpow.pop %v2290
    %v2292 = vsel %vm55, %v2281, 0.0
    %2293 = vadd.xlane.f32.xlu0 %v2292
    %v2294 = vpop.xlane.xlu0 %2293
    %v2295 = vsel %vm55, %v2283, 0.0
    %2296 = vadd.xlane.f32.xlu0 %v2295
    %v2297 = vpop.xlane.xlu0 %2296
    %v2298 = vsel %vm55, %v2285, 0.0
    %2299 = vadd.xlane.f32.xlu0 %v2298
    %v2300 = vpop.xlane.xlu0 %2299
    %v2301 = vsel %vm55, %v2287, 0.0
    %2302 = vadd.xlane.f32.xlu0 %v2301
    %v2303 = vpop.xlane.xlu0 %2302
    %v2304 = vsel %vm55, %v2289, 0.0
    %2305 = vadd.xlane.f32.xlu0 %v2304
    %v2306 = vpop.xlane.xlu0 %2305
    %v2307 = vsel %vm55, %v2291, 0.0
    %2308 = vadd.xlane.f32.xlu0 %v2307
    %v2309 = vpop.xlane.xlu0 %2308
    %v2310 = vrcp.pop %v2294
    %v2311 = vrcp.pop %v2297
    %v2312 = vrcp.pop %v2300
    %v2313 = vrcp.pop %v2303
    %v2314 = vrcp.pop %v2306
    %v2315 = vrcp.pop %v2309
    %v2316 = vmul.f32 %v2281, %v2310
    %v2317 = vmul.f32 %v2283, %v2311
    %v2318 = vmul.f32 %v2285, %v2312
    %v2319 = vmul.f32 %v2287, %v2313
    %v2320 = vmul.f32 %v2289, %v2314
    %v2321 = vmul.f32 %v2291, %v2315
    %v2322 = vpack.c.bf16 %v2317, %v2316
    %v2323 = vpack.c.bf16 %v2319, %v2318
    %v2324 = vpack.c.bf16 %v2321, %v2320
    %2328 = vrot.lane.b32.xlu0 %v2183, 96
    %v2329 = vpop.permute.xlu0 %2328
    %2330 = vrot.lane.b32.xlu0 %v2184, 96
    %v2331 = vpop.permute.xlu0 %2330
    %2332 = vrot.lane.b32.xlu0 %v2185, 96
    %v2333 = vpop.permute.xlu0 %2332
    %v2338 = vsel %vm55, %v2322, 0
    %v2341 = vsel %vm55, %v2323, 0
    %v2344 = vsel %vm55, %v2324, 0
    %2346 = vmatprep.subr.bf16.mxu0 0
    %2347 = vmatpush1.bf16.msra.mxu0 %v2329
    %2348 = vmatprep.subr.bf16.mxu0 0
    %2349 = vmatpush1.bf16.msra.mxu0 %v2331
    %2350 = vmatprep.subr.bf16.mxu0 0
    %2351 = vmatpush1.bf16.msra.mxu0 %v2333
    %2352 = vmatprep.subr.bf16.mxu0 0
    %2353 = vmatpush1.bf16.msra.mxu0 0
    %2354 = vmatprep.subr.bf16.mxu0 0
    %2355 = vmatpush1.bf16.msra.mxu0 0
    %2356 = vmatprep.subr.bf16.mxu0 0
    %2357 = vmatpush1.bf16.msra.mxu0 0
    %2358 = vmatprep.subr.bf16.mxu0 0
    %2359 = vmatpush1.bf16.msra.mxu0 0
    %2360 = vmatprep.subr.bf16.mxu0 0
    %2361 = vmatpush1.bf16.msra.mxu0 0
    %2362 = vmatprep.subr.bf16.mxu0 0
    %2363 = vmatpush1.bf16.msra.mxu0 0
    %2364 = vmatprep.subr.bf16.mxu0 0
    %2365 = vmatpush1.bf16.msra.mxu0 0
    %2366 = vmatprep.subr.bf16.mxu0 0
    %2367 = vmatpush1.bf16.msra.mxu0 0
    %2368 = vmatprep.subr.bf16.mxu0 0
    %2369 = vmatpush1.bf16.msra.mxu0 0
    %2370 = vmatprep.subr.bf16.mxu0 0
    %2371 = vmatpush1.bf16.msra.mxu0 0
    %2372 = vmatprep.subr.bf16.mxu0 0
    %2373 = vmatpush1.bf16.msra.mxu0 0
    %2374 = vmatprep.subr.bf16.mxu0 0
    %2375 = vmatpush1.bf16.msra.mxu0 0
    %2376 = vmatprep.subr.bf16.mxu0 0
    %2377 = vmatpush1.bf16.msra.mxu0 0
    %2378 = vmatprep.mubr.bf16.mxu0 0
    %2379 = vmatmul.mubr.bf16.gmra.mrb[0].mxu0 %v2338
    %v2380 = vpop.f32.mrb[0].mxu0
    %v2381 = vadd.f32 0.0, %v2380
    %v2382 = vpop.f32.mrb[0].mxu0
    %v2383 = vpop.f32.mrb[0].mxu0
    %v2384 = vadd.f32 0.0, %v2383
    %v2385 = vpop.f32.mrb[0].mxu0
    %2386 = vmatprep.mubr.bf16.mxu0 0
    %2387 = vmatmul.mubr.bf16.gmra.mrb[0].mxu0 %v2341
    %v2388 = vpop.f32.mrb[0].mxu0
    %v2389 = vadd.f32 0.0, %v2388
    %v2390 = vpop.f32.mrb[0].mxu0
    %v2391 = vpop.f32.mrb[0].mxu0
    %v2392 = vadd.f32 0.0, %v2391
    %v2393 = vpop.f32.mrb[0].mxu0
    %2394 = vmatprep.mubr.bf16.mxu0 0
    %2395 = vmatmul.mubr.bf16.gmra.mrb[0].mxu0 %v2344
    %v2396 = vpop.f32.mrb[0].mxu0
    %v2397 = vadd.f32 0.0, %v2396
    %v2398 = vpop.f32.mrb[0].mxu0
    %v2399 = vpop.f32.mrb[0].mxu0
    %v2400 = vadd.f32 0.0, %v2399
    %v2401 = vpop.f32.mrb[0].mxu0
    %2402 = vdwg.mxu0
    %v2403 = vpack.c.bf16 %v2172, %v2172
    %2404 = vrot.lane.b32.xlu0 %v2183, 120
    %v2405 = vpop.permute.xlu0 %2404
    %2406 = vrot.lane.b32.xlu0 %v2184, 120
    %v2407 = vpop.permute.xlu0 %2406
    %2408 = vrot.lane.b32.xlu0 %v2185, 120
    %v2409 = vpop.permute.xlu0 %2408
    %v2411 = vsel %vm451, %v2405, 0
    %v2414 = vsel %vm451, %v2407, 0
    %v2417 = vsel %vm451, %v2409, 0
    %v2420 = vsel %vm461, %v2403, 0
    %2422 = vmatprep.subr.bf16.mxu0 0
    %2423 = vmatpush1.bf16.msra.mxu0 %v2420
    %2424 = vmatprep.subr.bf16.mxu0 0
    %2425 = vmatpush1.bf16.msra.mxu0 0
    %2426 = vmatprep.subr.bf16.mxu0 0
    %2427 = vmatpush1.bf16.msra.mxu0 0
    %2428 = vmatprep.subr.bf16.mxu0 0
    %2429 = vmatpush1.bf16.msra.mxu0 0
    %2430 = vmatprep.subr.bf16.mxu0 0
    %2431 = vmatpush1.bf16.msra.mxu0 0
    %2432 = vmatprep.subr.bf16.mxu0 0
    %2433 = vmatpush1.bf16.msra.mxu0 0
    %2434 = vmatprep.subr.bf16.mxu0 0
    %2435 = vmatpush1.bf16.msra.mxu0 0
    %2436 = vmatprep.subr.bf16.mxu0 0
    %2437 = vmatpush1.bf16.msra.mxu0 0
    %2438 = vmatprep.subr.bf16.mxu0 0
    %2439 = vmatpush1.bf16.msra.mxu0 0
    %2440 = vmatprep.subr.bf16.mxu0 0
    %2441 = vmatpush1.bf16.msra.mxu0 0
    %2442 = vmatprep.subr.bf16.mxu0 0
    %2443 = vmatpush1.bf16.msra.mxu0 0
    %2444 = vmatprep.subr.bf16.mxu0 0
    %2445 = vmatpush1.bf16.msra.mxu0 0
    %2446 = vmatprep.subr.bf16.mxu0 0
    %2447 = vmatpush1.bf16.msra.mxu0 0
    %2448 = vmatprep.subr.bf16.mxu0 0
    %2449 = vmatpush1.bf16.msra.mxu0 0
    %2450 = vmatprep.subr.bf16.mxu0 0
    %2451 = vmatpush1.bf16.msra.mxu0 0
    %2452 = vmatprep.subr.bf16.mxu0 0
    %2453 = vmatpush1.bf16.msra.mxu0 0
    %2454 = vmatprep.mubr.bf16.mxu0 0
    %2455 = vmatmul.mubr.bf16.gmra.mrb[0].mxu0 %v2411
    %v2456 = vpop.f32.mrb[0].mxu0
    %v2457 = vadd.f32 %v122, %v2456
    %v2458 = vpop.f32.mrb[0].mxu0
    %v2459 = vpop.f32.mrb[0].mxu0
    %v2460 = vadd.f32 %v123, %v2459
    %v2461 = vpop.f32.mrb[0].mxu0
    %2462 = vmatprep.mubr.bf16.mxu0 0
    %2463 = vmatmul.mubr.bf16.gmra.mrb[0].mxu0 %v2414
    %v2464 = vpop.f32.mrb[0].mxu0
    %v2465 = vadd.f32 %v124, %v2464
    %v2466 = vpop.f32.mrb[0].mxu0
    %v2467 = vpop.f32.mrb[0].mxu0
    %v2468 = vadd.f32 %v125, %v2467
    %v2469 = vpop.f32.mrb[0].mxu0
    %2470 = vmatprep.mubr.bf16.mxu0 0
    %2471 = vmatmul.mubr.bf16.gmra.mrb[0].mxu0 %v2417
    %v2472 = vpop.f32.mrb[0].mxu0
    %v2473 = vadd.f32 %v126, %v2472
    %v2474 = vpop.f32.mrb[0].mxu0
    %v2475 = vpop.f32.mrb[0].mxu0
    %v2476 = vadd.f32 %v127, %v2475
    %v2477 = vpop.f32.mrb[0].mxu0
    %2478 = vdwg.mxu0
    %v2479 = vsel %vm55, %v2457, -inf
    %2480 = vmax.xlane.f32.xlu0 %v2479
    %v2481 = vpop.xlane.xlu0 %2480
    %v2482 = vsel %vm55, %v2460, -inf
    %2483 = vmax.xlane.f32.xlu0 %v2482
    %v2484 = vpop.xlane.xlu0 %2483
    %v2485 = vsel %vm55, %v2465, -inf
    %2486 = vmax.xlane.f32.xlu0 %v2485
    %v2487 = vpop.xlane.xlu0 %2486
    %v2488 = vsel %vm55, %v2468, -inf
    %2489 = vmax.xlane.f32.xlu0 %v2488
    %v2490 = vpop.xlane.xlu0 %2489
    %v2491 = vsel %vm55, %v2473, -inf
    %2492 = vmax.xlane.f32.xlu0 %v2491
    %v2493 = vpop.xlane.xlu0 %2492
    %v2494 = vsel %vm55, %v2476, -inf
    %2495 = vmax.xlane.f32.xlu0 %v2494
    %v2496 = vpop.xlane.xlu0 %2495
    %v2497 = vsub.f32 %v2457, %v2481
    %v2498 = vsub.f32 %v2460, %v2484
    %v2499 = vsub.f32 %v2465, %v2487
    %v2500 = vsub.f32 %v2468, %v2490
    %v2501 = vsub.f32 %v2473, %v2493
    %v2502 = vsub.f32 %v2476, %v2496
    %v2503 = vmul.f32 %v2497, 1.442695
    %v2504 = vpow.pop %v2503
    %v2505 = vmul.f32 %v2498, 1.442695
    %v2506 = vpow.pop %v2505
    %v2507 = vmul.f32 %v2499, 1.442695
    %v2508 = vpow.pop %v2507
    %v2509 = vmul.f32 %v2500, 1.442695
    %v2510 = vpow.pop %v2509
    %v2511 = vmul.f32 %v2501, 1.442695
    %v2512 = vpow.pop %v2511
    %v2513 = vmul.f32 %v2502, 1.442695
    %v2514 = vpow.pop %v2513
    %v2515 = vsel %vm55, %v2504, 0.0
    %2516 = vadd.xlane.f32.xlu0 %v2515
    %v2517 = vpop.xlane.xlu0 %2516
    %v2518 = vsel %vm55, %v2506, 0.0
    %2519 = vadd.xlane.f32.xlu0 %v2518
    %v2520 = vpop.xlane.xlu0 %2519
    %v2521 = vsel %vm55, %v2508, 0.0
    %2522 = vadd.xlane.f32.xlu0 %v2521
    %v2523 = vpop.xlane.xlu0 %2522
    %v2524 = vsel %vm55, %v2510, 0.0
    %2525 = vadd.xlane.f32.xlu0 %v2524
    %v2526 = vpop.xlane.xlu0 %2525
    %v2527 = vsel %vm55, %v2512, 0.0
    %2528 = vadd.xlane.f32.xlu0 %v2527
    %v2529 = vpop.xlane.xlu0 %2528
    %v2530 = vsel %vm55, %v2514, 0.0
    %2531 = vadd.xlane.f32.xlu0 %v2530
    %v2532 = vpop.xlane.xlu0 %2531
    %v2533 = vrcp.pop %v2517
    %v2534 = vrcp.pop %v2520
    %v2535 = vrcp.pop %v2523
    %v2536 = vrcp.pop %v2526
    %v2537 = vrcp.pop %v2529
    %v2538 = vrcp.pop %v2532
    %v2539 = vmul.f32 %v2504, %v2533
    %v2540 = vmul.f32 %v2506, %v2534
    %v2541 = vmul.f32 %v2508, %v2535
    %v2542 = vmul.f32 %v2510, %v2536
    %v2543 = vmul.f32 %v2512, %v2537
    %v2544 = vmul.f32 %v2514, %v2538
    %v2545 = vpack.c.bf16 %v2540, %v2539
    %v2546 = vpack.c.bf16 %v2542, %v2541
    %v2547 = vpack.c.bf16 %v2544, %v2543
    %2548 = vrot.lane.b32.xlu0 %v2183, 88
    %v2549 = vpop.permute.xlu0 %2548
    %2550 = vrot.lane.b32.xlu0 %v2184, 88
    %v2551 = vpop.permute.xlu0 %2550
    %2552 = vrot.lane.b32.xlu0 %v2185, 88
    %v2553 = vpop.permute.xlu0 %2552
    %v2558 = vsel %vm55, %v2545, 0
    %v2561 = vsel %vm55, %v2546, 0
    %v2564 = vsel %vm55, %v2547, 0
    %2566 = vmatprep.subr.bf16.mxu0 0
    %2567 = vmatpush1.bf16.msra.mxu0 %v2549
    %2568 = vmatprep.subr.bf16.mxu0 0
    %2569 = vmatpush1.bf16.msra.mxu0 %v2551
    %2570 = vmatprep.subr.bf16.mxu0 0
    %2571 = vmatpush1.bf16.msra.mxu0 %v2553
    %2572 = vmatprep.subr.bf16.mxu0 0
    %2573 = vmatpush1.bf16.msra.mxu0 0
    %2574 = vmatprep.subr.bf16.mxu0 0
    %2575 = vmatpush1.bf16.msra.mxu0 0
    %2576 = vmatprep.subr.bf16.mxu0 0
    %2577 = vmatpush1.bf16.msra.mxu0 0
    %2578 = vmatprep.subr.bf16.mxu0 0
    %2579 = vmatpush1.bf16.msra.mxu0 0
    %2580 = vmatprep.subr.bf16.mxu0 0
    %2581 = vmatpush1.bf16.msra.mxu0 0
    %2582 = vmatprep.subr.bf16.mxu0 0
    %2583 = vmatpush1.bf16.msra.mxu0 0
    %2584 = vmatprep.subr.bf16.mxu0 0
    %2585 = vmatpush1.bf16.msra.mxu0 0
    %2586 = vmatprep.subr.bf16.mxu0 0
    %2587 = vmatpush1.bf16.msra.mxu0 0
    %2588 = vmatprep.subr.bf16.mxu0 0
    %2589 = vmatpush1.bf16.msra.mxu0 0
    %2590 = vmatprep.subr.bf16.mxu0 0
    %2591 = vmatpush1.bf16.msra.mxu0 0
    %2592 = vmatprep.subr.bf16.mxu0 0
    %2593 = vmatpush1.bf16.msra.mxu0 0
    %2594 = vmatprep.subr.bf16.mxu0 0
    %2595 = vmatpush1.bf16.msra.mxu0 0
    %2596 = vmatprep.subr.bf16.mxu0 0
    %2597 = vmatpush1.bf16.msra.mxu0 0
    %2598 = vmatprep.mubr.bf16.mxu0 0
    %2599 = vmatmul.mubr.bf16.gmra.mrb[0].mxu0 %v2558
    %v2600 = vpop.f32.mrb[0].mxu0
    %v2601 = vadd.f32 0.0, %v2600
    %v2602 = vpop.f32.mrb[0].mxu0
    %v2603 = vpop.f32.mrb[0].mxu0
    %v2604 = vadd.f32 0.0, %v2603
    %v2605 = vpop.f32.mrb[0].mxu0
    %2606 = vmatprep.mubr.bf16.mxu0 0
    %2607 = vmatmul.mubr.bf16.gmra.mrb[0].mxu0 %v2561
    %v2608 = vpop.f32.mrb[0].mxu0
    %v2609 = vadd.f32 0.0, %v2608
    %v2610 = vpop.f32.mrb[0].mxu0
    %v2611 = vpop.f32.mrb[0].mxu0
    %v2612 = vadd.f32 0.0, %v2611
    %v2613 = vpop.f32.mrb[0].mxu0
    %2614 = vmatprep.mubr.bf16.mxu0 0
    %2615 = vmatmul.mubr.bf16.gmra.mrb[0].mxu0 %v2564
    %v2616 = vpop.f32.mrb[0].mxu0
    %v2617 = vadd.f32 0.0, %v2616
    %v2618 = vpop.f32.mrb[0].mxu0
    %v2619 = vpop.f32.mrb[0].mxu0
    %v2620 = vadd.f32 0.0, %v2619
    %v2621 = vpop.f32.mrb[0].mxu0
    %2622 = vdwg.mxu0
    %v2623 = vpack.c.bf16 %v2177, %v2177
    %2624 = vrot.lane.b32.xlu0 %v2183, 112
    %v2625 = vpop.permute.xlu0 %2624
    %2626 = vrot.lane.b32.xlu0 %v2184, 112
    %v2627 = vpop.permute.xlu0 %2626
    %2628 = vrot.lane.b32.xlu0 %v2185, 112
    %v2629 = vpop.permute.xlu0 %2628
    %v2631 = vsel %vm451, %v2625, 0
    %v2634 = vsel %vm451, %v2627, 0
    %v2637 = vsel %vm451, %v2629, 0
    %v2640 = vsel %vm461, %v2623, 0
    %2642 = vmatprep.subr.bf16.mxu0 0
    %2643 = vmatpush1.bf16.msra.mxu0 %v2640
    %2644 = vmatprep.subr.bf16.mxu0 0
    %2645 = vmatpush1.bf16.msra.mxu0 0
    %2646 = vmatprep.subr.bf16.mxu0 0
    %2647 = vmatpush1.bf16.msra.mxu0 0
    %2648 = vmatprep.subr.bf16.mxu0 0
    %2649 = vmatpush1.bf16.msra.mxu0 0
    %2650 = vmatprep.subr.bf16.mxu0 0
    %2651 = vmatpush1.bf16.msra.mxu0 0
    %2652 = vmatprep.subr.bf16.mxu0 0
    %2653 = vmatpush1.bf16.msra.mxu0 0
    %2654 = vmatprep.subr.bf16.mxu0 0
    %2655 = vmatpush1.bf16.msra.mxu0 0
    %2656 = vmatprep.subr.bf16.mxu0 0
    %2657 = vmatpush1.bf16.msra.mxu0 0
    %2658 = vmatprep.subr.bf16.mxu0 0
    %2659 = vmatpush1.bf16.msra.mxu0 0
    %2660 = vmatprep.subr.bf16.mxu0 0
    %2661 = vmatpush1.bf16.msra.mxu0 0
    %2662 = vmatprep.subr.bf16.mxu0 0
    %2663 = vmatpush1.bf16.msra.mxu0 0
    %2664 = vmatprep.subr.bf16.mxu0 0
    %2665 = vmatpush1.bf16.msra.mxu0 0
    %2666 = vmatprep.subr.bf16.mxu0 0
    %2667 = vmatpush1.bf16.msra.mxu0 0
    %2668 = vmatprep.subr.bf16.mxu0 0
    %2669 = vmatpush1.bf16.msra.mxu0 0
    %2670 = vmatprep.subr.bf16.mxu0 0
    %2671 = vmatpush1.bf16.msra.mxu0 0
    %2672 = vmatprep.subr.bf16.mxu0 0
    %2673 = vmatpush1.bf16.msra.mxu0 0
    %2674 = vmatprep.mubr.bf16.mxu0 0
    %2675 = vmatmul.mubr.bf16.gmra.mrb[0].mxu0 %v2631
    %v2676 = vpop.f32.mrb[0].mxu0
    %v2677 = vadd.f32 %v122, %v2676
    %v2678 = vpop.f32.mrb[0].mxu0
    %v2679 = vpop.f32.mrb[0].mxu0
    %v2680 = vadd.f32 %v123, %v2679
    %v2681 = vpop.f32.mrb[0].mxu0
    %2682 = vmatprep.mubr.bf16.mxu0 0
    %2683 = vmatmul.mubr.bf16.gmra.mrb[0].mxu0 %v2634
    %v2684 = vpop.f32.mrb[0].mxu0
    %v2685 = vadd.f32 %v124, %v2684
    %v2686 = vpop.f32.mrb[0].mxu0
    %v2687 = vpop.f32.mrb[0].mxu0
    %v2688 = vadd.f32 %v125, %v2687
    %v2689 = vpop.f32.mrb[0].mxu0
    %2690 = vmatprep.mubr.bf16.mxu0 0
    %2691 = vmatmul.mubr.bf16.gmra.mrb[0].mxu0 %v2637
    %v2692 = vpop.f32.mrb[0].mxu0
    %v2693 = vadd.f32 %v126, %v2692
    %v2694 = vpop.f32.mrb[0].mxu0
    %v2695 = vpop.f32.mrb[0].mxu0
    %v2696 = vadd.f32 %v127, %v2695
    %v2697 = vpop.f32.mrb[0].mxu0
    %2698 = vdwg.mxu0
    %v2699 = vsel %vm55, %v2677, -inf
    %2700 = vmax.xlane.f32.xlu0 %v2699
    %v2701 = vpop.xlane.xlu0 %2700
    %v2702 = vsel %vm55, %v2680, -inf
    %2703 = vmax.xlane.f32.xlu0 %v2702
    %v2704 = vpop.xlane.xlu0 %2703
    %v2705 = vsel %vm55, %v2685, -inf
    %2706 = vmax.xlane.f32.xlu0 %v2705
    %v2707 = vpop.xlane.xlu0 %2706
    %v2708 = vsel %vm55, %v2688, -inf
    %2709 = vmax.xlane.f32.xlu0 %v2708
    %v2710 = vpop.xlane.xlu0 %2709
    %v2711 = vsel %vm55, %v2693, -inf
    %2712 = vmax.xlane.f32.xlu0 %v2711
    %v2713 = vpop.xlane.xlu0 %2712
    %v2714 = vsel %vm55, %v2696, -inf
    %2715 = vmax.xlane.f32.xlu0 %v2714
    %v2716 = vpop.xlane.xlu0 %2715
    %v2717 = vsub.f32 %v2677, %v2701
    %v2718 = vsub.f32 %v2680, %v2704
    %v2719 = vsub.f32 %v2685, %v2707
    %v2720 = vsub.f32 %v2688, %v2710
    %v2721 = vsub.f32 %v2693, %v2713
    %v2722 = vsub.f32 %v2696, %v2716
    %v2723 = vmul.f32 %v2717, 1.442695
    %v2724 = vpow.pop %v2723
    %v2725 = vmul.f32 %v2718, 1.442695
    %v2726 = vpow.pop %v2725
    %v2727 = vmul.f32 %v2719, 1.442695
    %v2728 = vpow.pop %v2727
    %v2729 = vmul.f32 %v2720, 1.442695
    %v2730 = vpow.pop %v2729
    %v2731 = vmul.f32 %v2721, 1.442695
    %v2732 = vpow.pop %v2731
    %v2733 = vmul.f32 %v2722, 1.442695
    %v2734 = vpow.pop %v2733
    %v2735 = vsel %vm55, %v2724, 0.0
    %2736 = vadd.xlane.f32.xlu0 %v2735
    %v2737 = vpop.xlane.xlu0 %2736
    %v2738 = vsel %vm55, %v2726, 0.0
    %2739 = vadd.xlane.f32.xlu0 %v2738
    %v2740 = vpop.xlane.xlu0 %2739
    %v2741 = vsel %vm55, %v2728, 0.0
    %2742 = vadd.xlane.f32.xlu0 %v2741
    %v2743 = vpop.xlane.xlu0 %2742
    %v2744 = vsel %vm55, %v2730, 0.0
    %2745 = vadd.xlane.f32.xlu0 %v2744
    %v2746 = vpop.xlane.xlu0 %2745
    %v2747 = vsel %vm55, %v2732, 0.0
    %2748 = vadd.xlane.f32.xlu0 %v2747
    %v2749 = vpop.xlane.xlu0 %2748
    %v2750 = vsel %vm55, %v2734, 0.0
    %2751 = vadd.xlane.f32.xlu0 %v2750
    %v2752 = vpop.xlane.xlu0 %2751
    %v2753 = vrcp.pop %v2737
    %v2754 = vrcp.pop %v2740
    %v2755 = vrcp.pop %v2743
    %v2756 = vrcp.pop %v2746
    %v2757 = vrcp.pop %v2749
    %v2758 = vrcp.pop %v2752
    %v2759 = vmul.f32 %v2724, %v2753
    %v2760 = vmul.f32 %v2726, %v2754
    %v2761 = vmul.f32 %v2728, %v2755
    %v2762 = vmul.f32 %v2730, %v2756
    %v2763 = vmul.f32 %v2732, %v2757
    %v2764 = vmul.f32 %v2734, %v2758
    %v2765 = vpack.c.bf16 %v2760, %v2759
    %v2766 = vpack.c.bf16 %v2762, %v2761
    %v2767 = vpack.c.bf16 %v2764, %v2763
    %2768 = vrot.lane.b32.xlu0 %v2183, 80
    %v2769 = vpop.permute.xlu0 %2768
    %2770 = vrot.lane.b32.xlu0 %v2184, 80
    %v2771 = vpop.permute.xlu0 %2770
    %2772 = vrot.lane.b32.xlu0 %v2185, 80
    %v2773 = vpop.permute.xlu0 %2772
    %v2778 = vsel %vm55, %v2765, 0
    %v2781 = vsel %vm55, %v2766, 0
    %v2784 = vsel %vm55, %v2767, 0
    %2786 = vmatprep.subr.bf16.mxu0 0
    %2787 = vmatpush1.bf16.msra.mxu0 %v2769
    %2788 = vmatprep.subr.bf16.mxu0 0
    %2789 = vmatpush1.bf16.msra.mxu0 %v2771
    %2790 = vmatprep.subr.bf16.mxu0 0
    %2791 = vmatpush1.bf16.msra.mxu0 %v2773
    %2792 = vmatprep.subr.bf16.mxu0 0
    %2793 = vmatpush1.bf16.msra.mxu0 0
    %2794 = vmatprep.subr.bf16.mxu0 0
    %2795 = vmatpush1.bf16.msra.mxu0 0
    %2796 = vmatprep.subr.bf16.mxu0 0
    %2797 = vmatpush1.bf16.msra.mxu0 0
    %2798 = vmatprep.subr.bf16.mxu0 0
    %2799 = vmatpush1.bf16.msra.mxu0 0
    %2800 = vmatprep.subr.bf16.mxu0 0
    %2801 = vmatpush1.bf16.msra.mxu0 0
    %2802 = vmatprep.subr.bf16.mxu0 0
    %2803 = vmatpush1.bf16.msra.mxu0 0
    %2804 = vmatprep.subr.bf16.mxu0 0
    %2805 = vmatpush1.bf16.msra.mxu0 0
    %2806 = vmatprep.subr.bf16.mxu0 0
    %2807 = vmatpush1.bf16.msra.mxu0 0
    %2808 = vmatprep.subr.bf16.mxu0 0
    %2809 = vmatpush1.bf16.msra.mxu0 0
    %2810 = vmatprep.subr.bf16.mxu0 0
    %2811 = vmatpush1.bf16.msra.mxu0 0
    %2812 = vmatprep.subr.bf16.mxu0 0
    %2813 = vmatpush1.bf16.msra.mxu0 0
    %2814 = vmatprep.subr.bf16.mxu0 0
    %2815 = vmatpush1.bf16.msra.mxu0 0
    %2816 = vmatprep.subr.bf16.mxu0 0
    %2817 = vmatpush1.bf16.msra.mxu0 0
    %2818 = vmatprep.mubr.bf16.mxu0 0
    %2819 = vmatmul.mubr.bf16.gmra.mrb[0].mxu0 %v2778
    %v2820 = vpop.f32.mrb[0].mxu0
    %v2821 = vadd.f32 0.0, %v2820
    %v2822 = vpop.f32.mrb[0].mxu0
    %v2823 = vpop.f32.mrb[0].mxu0
    %v2824 = vadd.f32 0.0, %v2823
    %v2825 = vpop.f32.mrb[0].mxu0
    %2826 = vmatprep.mubr.bf16.mxu0 0
    %2827 = vmatmul.mubr.bf16.gmra.mrb[0].mxu0 %v2781
    %v2828 = vpop.f32.mrb[0].mxu0
    %v2829 = vadd.f32 0.0, %v2828
    %v2830 = vpop.f32.mrb[0].mxu0
    %v2831 = vpop.f32.mrb[0].mxu0
    %v2832 = vadd.f32 0.0, %v2831
    %v2833 = vpop.f32.mrb[0].mxu0
    %2834 = vmatprep.mubr.bf16.mxu0 0
    %2835 = vmatmul.mubr.bf16.gmra.mrb[0].mxu0 %v2784
    %v2836 = vpop.f32.mrb[0].mxu0
    %v2837 = vadd.f32 0.0, %v2836
    %v2838 = vpop.f32.mrb[0].mxu0
    %v2839 = vpop.f32.mrb[0].mxu0
    %v2840 = vadd.f32 0.0, %v2839
    %v2841 = vpop.f32.mrb[0].mxu0
    %2842 = vdwg.mxu0
    %v2843 = vpack.c.bf16 %v2180, %v2180
    %2844 = vrot.lane.b32.xlu0 %v2183, 104
    %v2845 = vpop.permute.xlu0 %2844
    %2846 = vrot.lane.b32.xlu0 %v2184, 104
    %v2847 = vpop.permute.xlu0 %2846
    %2848 = vrot.lane.b32.xlu0 %v2185, 104
    %v2849 = vpop.permute.xlu0 %2848
    %v2851 = vsel %vm451, %v2845, 0
    %v2854 = vsel %vm451, %v2847, 0
    %v2857 = vsel %vm451, %v2849, 0
    %v2860 = vsel %vm461, %v2843, 0
    %2862 = vmatprep.subr.bf16.mxu0 0
    %2863 = vmatpush1.bf16.msra.mxu0 %v2860
    %2864 = vmatprep.subr.bf16.mxu0 0
    %2865 = vmatpush1.bf16.msra.mxu0 0
    %2866 = vmatprep.subr.bf16.mxu0 0
    %2867 = vmatpush1.bf16.msra.mxu0 0
    %2868 = vmatprep.subr.bf16.mxu0 0
    %2869 = vmatpush1.bf16.msra.mxu0 0
    %2870 = vmatprep.subr.bf16.mxu0 0
    %2871 = vmatpush1.bf16.msra.mxu0 0
    %2872 = vmatprep.subr.bf16.mxu0 0
    %2873 = vmatpush1.bf16.msra.mxu0 0
    %2874 = vmatprep.subr.bf16.mxu0 0
    %2875 = vmatpush1.bf16.msra.mxu0 0
    %2876 = vmatprep.subr.bf16.mxu0 0
    %2877 = vmatpush1.bf16.msra.mxu0 0
    %2878 = vmatprep.subr.bf16.mxu0 0
    %2879 = vmatpush1.bf16.msra.mxu0 0
    %2880 = vmatprep.subr.bf16.mxu0 0
    %2881 = vmatpush1.bf16.msra.mxu0 0
    %2882 = vmatprep.subr.bf16.mxu0 0
    %2883 = vmatpush1.bf16.msra.mxu0 0
    %2884 = vmatprep.subr.bf16.mxu0 0
    %2885 = vmatpush1.bf16.msra.mxu0 0
    %2886 = vmatprep.subr.bf16.mxu0 0
    %2887 = vmatpush1.bf16.msra.mxu0 0
    %2888 = vmatprep.subr.bf16.mxu0 0
    %2889 = vmatpush1.bf16.msra.mxu0 0
    %2890 = vmatprep.subr.bf16.mxu0 0
    %2891 = vmatpush1.bf16.msra.mxu0 0
    %2892 = vmatprep.subr.bf16.mxu0 0
    %2893 = vmatpush1.bf16.msra.mxu0 0
    %2894 = vmatprep.mubr.bf16.mxu0 0
    %2895 = vmatmul.mubr.bf16.gmra.mrb[0].mxu0 %v2851
    %v2896 = vpop.f32.mrb[0].mxu0
    %v2897 = vadd.f32 %v122, %v2896
    %v2898 = vpop.f32.mrb[0].mxu0
    %v2899 = vpop.f32.mrb[0].mxu0
    %v2900 = vadd.f32 %v123, %v2899
    %v2901 = vpop.f32.mrb[0].mxu0
    %2902 = vmatprep.mubr.bf16.mxu0 0
    %2903 = vmatmul.mubr.bf16.gmra.mrb[0].mxu0 %v2854
    %v2904 = vpop.f32.mrb[0].mxu0
    %v2905 = vadd.f32 %v124, %v2904
    %v2906 = vpop.f32.mrb[0].mxu0
    %v2907 = vpop.f32.mrb[0].mxu0
    %v2908 = vadd.f32 %v125, %v2907
    %v2909 = vpop.f32.mrb[0].mxu0
    %2910 = vmatprep.mubr.bf16.mxu0 0
    %2911 = vmatmul.mubr.bf16.gmra.mrb[0].mxu0 %v2857
    %v2912 = vpop.f32.mrb[0].mxu0
    %v2913 = vadd.f32 %v126, %v2912
    %v2914 = vpop.f32.mrb[0].mxu0
    %v2915 = vpop.f32.mrb[0].mxu0
    %v2916 = vadd.f32 %v127, %v2915
    %v2917 = vpop.f32.mrb[0].mxu0
    %2918 = vdwg.mxu0
    %v2919 = vsel %vm55, %v2897, -inf
    %2920 = vmax.xlane.f32.xlu0 %v2919
    %v2921 = vpop.xlane.xlu0 %2920
    %v2922 = vsel %vm55, %v2900, -inf
    %2923 = vmax.xlane.f32.xlu0 %v2922
    %v2924 = vpop.xlane.xlu0 %2923
    %v2925 = vsel %vm55, %v2905, -inf
    %2926 = vmax.xlane.f32.xlu0 %v2925
    %v2927 = vpop.xlane.xlu0 %2926
    %v2928 = vsel %vm55, %v2908, -inf
    %2929 = vmax.xlane.f32.xlu0 %v2928
    %v2930 = vpop.xlane.xlu0 %2929
    %v2931 = vsel %vm55, %v2913, -inf
    %2932 = vmax.xlane.f32.xlu0 %v2931
    %v2933 = vpop.xlane.xlu0 %2932
    %v2934 = vsel %vm55, %v2916, -inf
    %2935 = vmax.xlane.f32.xlu0 %v2934
    %v2936 = vpop.xlane.xlu0 %2935
    %v2937 = vsub.f32 %v2897, %v2921
    %v2938 = vsub.f32 %v2900, %v2924
    %v2939 = vsub.f32 %v2905, %v2927
    %v2940 = vsub.f32 %v2908, %v2930
    %v2941 = vsub.f32 %v2913, %v2933
    %v2942 = vsub.f32 %v2916, %v2936
    %v2943 = vmul.f32 %v2937, 1.442695
    %v2944 = vpow.pop %v2943
    %v2945 = vmul.f32 %v2938, 1.442695
    %v2946 = vpow.pop %v2945
    %v2947 = vmul.f32 %v2939, 1.442695
    %v2948 = vpow.pop %v2947
    %v2949 = vmul.f32 %v2940, 1.442695
    %v2950 = vpow.pop %v2949
    %v2951 = vmul.f32 %v2941, 1.442695
    %v2952 = vpow.pop %v2951
    %v2953 = vmul.f32 %v2942, 1.442695
    %v2954 = vpow.pop %v2953
    %v2955 = vsel %vm55, %v2944, 0.0
    %2956 = vadd.xlane.f32.xlu0 %v2955
    %v2957 = vpop.xlane.xlu0 %2956
    %v2958 = vsel %vm55, %v2946, 0.0
    %2959 = vadd.xlane.f32.xlu0 %v2958
    %v2960 = vpop.xlane.xlu0 %2959
    %v2961 = vsel %vm55, %v2948, 0.0
    %2962 = vadd.xlane.f32.xlu0 %v2961
    %v2963 = vpop.xlane.xlu0 %2962
    %v2964 = vsel %vm55, %v2950, 0.0
    %2965 = vadd.xlane.f32.xlu0 %v2964
    %v2966 = vpop.xlane.xlu0 %2965
    %v2967 = vsel %vm55, %v2952, 0.0
    %2968 = vadd.xlane.f32.xlu0 %v2967
    %v2969 = vpop.xlane.xlu0 %2968
    %v2970 = vsel %vm55, %v2954, 0.0
    %2971 = vadd.xlane.f32.xlu0 %v2970
    %v2972 = vpop.xlane.xlu0 %2971
    %v2973 = vrcp.pop %v2957
    %v2974 = vrcp.pop %v2960
    %v2975 = vrcp.pop %v2963
    %v2976 = vrcp.pop %v2966
    %v2977 = vrcp.pop %v2969
    %v2978 = vrcp.pop %v2972
    %v2979 = vmul.f32 %v2944, %v2973
    %v2980 = vmul.f32 %v2946, %v2974
    %v2981 = vmul.f32 %v2948, %v2975
    %v2982 = vmul.f32 %v2950, %v2976
    %v2983 = vmul.f32 %v2952, %v2977
    %v2984 = vmul.f32 %v2954, %v2978
    %v2985 = vpack.c.bf16 %v2980, %v2979
    %v2986 = vpack.c.bf16 %v2982, %v2981
    %v2987 = vpack.c.bf16 %v2984, %v2983
    %2988 = vrot.lane.b32.xlu0 %v2183, 72
    %v2989 = vpop.permute.xlu0 %2988
    %2990 = vrot.lane.b32.xlu0 %v2184, 72
    %v2991 = vpop.permute.xlu0 %2990
    %2992 = vrot.lane.b32.xlu0 %v2185, 72
    %v2993 = vpop.permute.xlu0 %2992
    %v2998 = vsel %vm55, %v2985, 0
    %v3001 = vsel %vm55, %v2986, 0
    %v3004 = vsel %vm55, %v2987, 0
    %3006 = vmatprep.subr.bf16.mxu0 0
    %3007 = vmatpush1.bf16.msra.mxu0 %v2989
    %3008 = vmatprep.subr.bf16.mxu0 0
    %3009 = vmatpush1.bf16.msra.mxu0 %v2991
    %3010 = vmatprep.subr.bf16.mxu0 0
    %3011 = vmatpush1.bf16.msra.mxu0 %v2993
    %3012 = vmatprep.subr.bf16.mxu0 0
    %3013 = vmatpush1.bf16.msra.mxu0 0
    %3014 = vmatprep.subr.bf16.mxu0 0
    %3015 = vmatpush1.bf16.msra.mxu0 0
    %3016 = vmatprep.subr.bf16.mxu0 0
    %3017 = vmatpush1.bf16.msra.mxu0 0
    %3018 = vmatprep.subr.bf16.mxu0 0
    %3019 = vmatpush1.bf16.msra.mxu0 0
    %3020 = vmatprep.subr.bf16.mxu0 0
    %3021 = vmatpush1.bf16.msra.mxu0 0
    %3022 = vmatprep.subr.bf16.mxu0 0
    %3023 = vmatpush1.bf16.msra.mxu0 0
    %3024 = vmatprep.subr.bf16.mxu0 0
    %3025 = vmatpush1.bf16.msra.mxu0 0
    %3026 = vmatprep.subr.bf16.mxu0 0
    %3027 = vmatpush1.bf16.msra.mxu0 0
    %3028 = vmatprep.subr.bf16.mxu0 0
    %3029 = vmatpush1.bf16.msra.mxu0 0
    %3030 = vmatprep.subr.bf16.mxu0 0
    %3031 = vmatpush1.bf16.msra.mxu0 0
    %3032 = vmatprep.subr.bf16.mxu0 0
    %3033 = vmatpush1.bf16.msra.mxu0 0
    %3034 = vmatprep.subr.bf16.mxu0 0
    %3035 = vmatpush1.bf16.msra.mxu0 0
    %3036 = vmatprep.subr.bf16.mxu0 0
    %3037 = vmatpush1.bf16.msra.mxu0 0
    %3038 = vmatprep.mubr.bf16.mxu0 0
    %3039 = vmatmul.mubr.bf16.gmra.mrb[0].mxu0 %v2998
    %v3040 = vpop.f32.mrb[0].mxu0
    %v3041 = vadd.f32 0.0, %v3040
    %v3042 = vpop.f32.mrb[0].mxu0
    %v3043 = vpop.f32.mrb[0].mxu0
    %v3044 = vadd.f32 0.0, %v3043
    %v3045 = vpop.f32.mrb[0].mxu0
    %3046 = vmatprep.mubr.bf16.mxu0 0
    %3047 = vmatmul.mubr.bf16.gmra.mrb[0].mxu0 %v3001
    %v3048 = vpop.f32.mrb[0].mxu0
    %v3049 = vadd.f32 0.0, %v3048
    %v3050 = vpop.f32.mrb[0].mxu0
    %v3051 = vpop.f32.mrb[0].mxu0
    %v3052 = vadd.f32 0.0, %v3051
    %v3053 = vpop.f32.mrb[0].mxu0
    %3054 = vmatprep.mubr.bf16.mxu0 0
    %3055 = vmatmul.mubr.bf16.gmra.mrb[0].mxu0 %v3004
    %v3056 = vpop.f32.mrb[0].mxu0
    %v3057 = vadd.f32 0.0, %v3056
    %v3058 = vpop.f32.mrb[0].mxu0
    %v3059 = vpop.f32.mrb[0].mxu0
    %v3060 = vadd.f32 0.0, %v3059
    %v3061 = vpop.f32.mrb[0].mxu0
    %3062 = vdwg.mxu0
    %3069 = vrot.lane.b32.xlu0 %v2601, 8
    %v3070 = vpop.permute.xlu0 %3069
    %3071 = vrot.lane.b32.xlu0 %v2604, 8
    %v3072 = vpop.permute.xlu0 %3071
    %3073 = vrot.lane.b32.xlu0 %v2609, 8
    %v3074 = vpop.permute.xlu0 %3073
    %3075 = vrot.lane.b32.xlu0 %v2612, 8
    %v3076 = vpop.permute.xlu0 %3075
    %3077 = vrot.lane.b32.xlu0 %v2617, 8
    %v3078 = vpop.permute.xlu0 %3077
    %3079 = vrot.lane.b32.xlu0 %v2620, 8
    %v3080 = vpop.permute.xlu0 %3079
    %3093 = vrot.lane.b32.xlu0 %v2821, 16
    %v3094 = vpop.permute.xlu0 %3093
    %3095 = vrot.lane.b32.xlu0 %v2824, 16
    %v3096 = vpop.permute.xlu0 %3095
    %3097 = vrot.lane.b32.xlu0 %v2829, 16
    %v3098 = vpop.permute.xlu0 %3097
    %3099 = vrot.lane.b32.xlu0 %v2832, 16
    %v3100 = vpop.permute.xlu0 %3099
    %3101 = vrot.lane.b32.xlu0 %v2837, 16
    %v3102 = vpop.permute.xlu0 %3101
    %3103 = vrot.lane.b32.xlu0 %v2840, 16
    %v3104 = vpop.permute.xlu0 %3103
    %3117 = vrot.lane.b32.xlu0 %v3041, 24
    %v3118 = vpop.permute.xlu0 %3117
    %3119 = vrot.lane.b32.xlu0 %v3044, 24
    %v3120 = vpop.permute.xlu0 %3119
    %3121 = vrot.lane.b32.xlu0 %v3049, 24
    %v3122 = vpop.permute.xlu0 %3121
    %3123 = vrot.lane.b32.xlu0 %v3052, 24
    %v3124 = vpop.permute.xlu0 %3123
    %3125 = vrot.lane.b32.xlu0 %v3057, 24
    %v3126 = vpop.permute.xlu0 %3125
    %3127 = vrot.lane.b32.xlu0 %v3060, 24
    %v3128 = vpop.permute.xlu0 %3127
    %v3135 = vsel %vm451, %v2381, %v3070
    %v3136 = vsel %vm451, %v2384, %v3072
    %v3137 = vsel %vm451, %v2389, %v3074
    %v3138 = vsel %vm451, %v2392, %v3076
    %v3139 = vsel %vm451, %v2397, %v3078
    %v3140 = vsel %vm451, %v2400, %v3080
    %v3141 = vsel %vm1407, %v3135, %v3094
    %v3142 = vsel %vm1407, %v3136, %v3096
    %v3143 = vsel %vm1407, %v3137, %v3098
    %v3144 = vsel %vm1407, %v3138, %v3100
    %v3145 = vsel %vm1407, %v3139, %v3102
    %v3146 = vsel %vm1407, %v3140, %v3104
    %v3147 = vsel %vm1414, %v3141, %v3118
    %v3148 = vsel %vm1414, %v3142, %v3120
    %v3149 = vsel %vm1414, %v3143, %v3122
    %v3150 = vsel %vm1414, %v3144, %v3124
    %v3151 = vsel %vm1414, %v3145, %v3126
    %v3152 = vsel %vm1414, %v3146, %v3128
    %v3153 = vpack.c.bf16 %v3148, %v3147
    %v3154 = vpack.c.bf16 %v3150, %v3149
    %v3155 = vpack.c.bf16 %v3152, %v3151
    %v3156 = vld [vmem:[%s1 + $0x98] sm:$0xf]
    %v3157 = vld [vmem:[%s1 + $0x9c] sm:$0xf]
    %v3158 = vld [vmem:[%s1 + $0xa0] sm:$0xf]
    %v3159 = vld [vmem:[%s1 + $0xa4] sm:$0xf]
    %v3160 = vld [vmem:[%s2 + $0xb] sm:$0x1]
    %v3161 = vlaneseq
    %v3162 = vshrl.u32 %v3161, 7
    %v3163 = vsub.s32 0, %v3162
    %v3164 = vrot.slane %v3160, %v3163
    %v3169 = vunpack.c.l.b16 %v3156
    %v3170 = vunpack.c.l.b16 %v3157
    %v3171 = vunpack.c.l.b16 %v3158
    %v3172 = vunpack.c.l.b16 %v3159
    %v3173 = vpack.c.b16 %v3170, %v3169
    %v3174 = vpack.c.b16 %v3172, %v3171
    %v3178 = vsel %vm130, %v3153, 0
    %v3181 = vsel %vm130, %v3154, 0
    %v3184 = vsel %vm130, %v3155, 0
    %3186 = vmatprep.subr.bf16.mxu0 0
    %3187 = vmatpush1.bf16.msra.mxu0 %v3173
    %3188 = vmatprep.subr.bf16.mxu0 0
    %3189 = vmatpush1.bf16.msra.mxu0 %v3174
    %3190 = vmatprep.subr.bf16.mxu0 0
    %3191 = vmatpush1.bf16.msra.mxu0 0
    %3192 = vmatprep.subr.bf16.mxu0 0
    %3193 = vmatpush1.bf16.msra.mxu0 0
    %3194 = vmatprep.subr.bf16.mxu0 0
    %3195 = vmatpush1.bf16.msra.mxu0 0
    %3196 = vmatprep.subr.bf16.mxu0 0
    %3197 = vmatpush1.bf16.msra.mxu0 0
    %3198 = vmatprep.subr.bf16.mxu0 0
    %3199 = vmatpush1.bf16.msra.mxu0 0
    %3200 = vmatprep.subr.bf16.mxu0 0
    %3201 = vmatpush1.bf16.msra.mxu0 0
    %3202 = vmatprep.subr.bf16.mxu0 0
    %3203 = vmatpush1.bf16.msra.mxu0 0
    %3204 = vmatprep.subr.bf16.mxu0 0
    %3205 = vmatpush1.bf16.msra.mxu0 0
    %3206 = vmatprep.subr.bf16.mxu0 0
    %3207 = vmatpush1.bf16.msra.mxu0 0
    %3208 = vmatprep.subr.bf16.mxu0 0
    %3209 = vmatpush1.bf16.msra.mxu0 0
    %3210 = vmatprep.subr.bf16.mxu0 0
    %3211 = vmatpush1.bf16.msra.mxu0 0
    %3212 = vmatprep.subr.bf16.mxu0 0
    %3213 = vmatpush1.bf16.msra.mxu0 0
    %3214 = vmatprep.subr.bf16.mxu0 0
    %3215 = vmatpush1.bf16.msra.mxu0 0
    %3216 = vmatprep.subr.bf16.mxu0 0
    %3217 = vmatpush1.bf16.msra.mxu0 0
    %3218 = vmatprep.mubr.bf16.mxu0 0
    %3219 = vmatmul.mubr.bf16.gmra.mrb[0].mxu0 %v3178
    %v3220 = vpop.f32.mrb[0].mxu0
    %v3221 = vadd.f32 %v3164, %v3220
    %v3222 = vpop.f32.mrb[0].mxu0
    %v3223 = vpop.f32.mrb[0].mxu0
    %v3224 = vadd.f32 %v3164, %v3223
    %v3225 = vpop.f32.mrb[0].mxu0
    %3226 = vmatprep.mubr.bf16.mxu0 0
    %3227 = vmatmul.mubr.bf16.gmra.mrb[0].mxu0 %v3181
    %v3228 = vpop.f32.mrb[0].mxu0
    %v3229 = vadd.f32 %v3164, %v3228
    %v3230 = vpop.f32.mrb[0].mxu0
    %v3231 = vpop.f32.mrb[0].mxu0
    %v3232 = vadd.f32 %v3164, %v3231
    %v3233 = vpop.f32.mrb[0].mxu0
    %3234 = vmatprep.mubr.bf16.mxu0 0
    %3235 = vmatmul.mubr.bf16.gmra.mrb[0].mxu0 %v3184
    %v3236 = vpop.f32.mrb[0].mxu0
    %v3237 = vadd.f32 %v3164, %v3236
    %v3238 = vpop.f32.mrb[0].mxu0
    %v3239 = vpop.f32.mrb[0].mxu0
    %v3240 = vadd.f32 %v3164, %v3239
    %v3241 = vpop.f32.mrb[0].mxu0
    %3242 = vdwg.mxu0
    %v3243 = vadd.f32 %v1868, %v3221
    %v3244 = vadd.f32 %v1869, %v3224
    %v3245 = vadd.f32 %v1870, %v3229
    %v3246 = vadd.f32 %v1871, %v3232
    %v3247 = vadd.f32 %v1872, %v3237
    %v3248 = vadd.f32 %v1873, %v3240
    %v3249 = vld [vmem:[%s2 + $0xc] sm:$0x1]
    %v3250 = vld [vmem:[%s2 + $0xd] sm:$0x1]
    %v3251 = vsel %vm130, %v3243, 0.0
    %3252 = vadd.xlane.f32.xlu0 %v3251
    %v3253 = vpop.xlane.xlu0 %3252
    %v3254 = vsel %vm130, %v3244, 0.0
    %3255 = vadd.xlane.f32.xlu0 %v3254
    %v3256 = vpop.xlane.xlu0 %3255
    %v3257 = vsel %vm130, %v3245, 0.0
    %3258 = vadd.xlane.f32.xlu0 %v3257
    %v3259 = vpop.xlane.xlu0 %3258
    %v3260 = vsel %vm130, %v3246, 0.0
    %3261 = vadd.xlane.f32.xlu0 %v3260
    %v3262 = vpop.xlane.xlu0 %3261
    %v3263 = vsel %vm130, %v3247, 0.0
    %3264 = vadd.xlane.f32.xlu0 %v3263
    %v3265 = vpop.xlane.xlu0 %3264
    %v3266 = vsel %vm130, %v3248, 0.0
    %3267 = vadd.xlane.f32.xlu0 %v3266
    %v3268 = vpop.xlane.xlu0 %3267
    %v3269 = vmul.f32 %v3253, %v149
    %v3270 = vmul.f32 %v3256, %v149
    %v3271 = vmul.f32 %v3259, %v149
    %v3272 = vmul.f32 %v3262, %v149
    %v3273 = vmul.f32 %v3265, %v149
    %v3274 = vmul.f32 %v3268, %v149
    %v3275 = vsub.f32 %v3243, %v3269
    %v3276 = vsub.f32 %v3244, %v3270
    %v3277 = vsub.f32 %v3245, %v3271
    %v3278 = vsub.f32 %v3246, %v3272
    %v3279 = vsub.f32 %v3247, %v3273
    %v3280 = vsub.f32 %v3248, %v3274
    %v3281 = vmul.f32 %v3275, %v3275
    %v3282 = vmul.f32 %v3276, %v3276
    %v3283 = vmul.f32 %v3277, %v3277
    %v3284 = vmul.f32 %v3278, %v3278
    %v3285 = vmul.f32 %v3279, %v3279
    %v3286 = vmul.f32 %v3280, %v3280
    %v3287 = vsel %vm130, %v3281, 0.0
    %3288 = vadd.xlane.f32.xlu0 %v3287
    %v3289 = vpop.xlane.xlu0 %3288
    %v3290 = vsel %vm130, %v3282, 0.0
    %3291 = vadd.xlane.f32.xlu0 %v3290
    %v3292 = vpop.xlane.xlu0 %3291
    %v3293 = vsel %vm130, %v3283, 0.0
    %3294 = vadd.xlane.f32.xlu0 %v3293
    %v3295 = vpop.xlane.xlu0 %3294
    %v3296 = vsel %vm130, %v3284, 0.0
    %3297 = vadd.xlane.f32.xlu0 %v3296
    %v3298 = vpop.xlane.xlu0 %3297
    %v3299 = vsel %vm130, %v3285, 0.0
    %3300 = vadd.xlane.f32.xlu0 %v3299
    %v3301 = vpop.xlane.xlu0 %3300
    %v3302 = vsel %vm130, %v3286, 0.0
    %3303 = vadd.xlane.f32.xlu0 %v3302
    %v3304 = vpop.xlane.xlu0 %3303
    %v3305 = vmul.f32 %v3289, %v149
    %v3306 = vmul.f32 %v3292, %v149
    %v3307 = vmul.f32 %v3295, %v149
    %v3308 = vmul.f32 %v3298, %v149
    %v3309 = vmul.f32 %v3301, %v149
    %v3310 = vmul.f32 %v3304, %v149
    %v3311 = vadd.f32 %v3305, 1e-12
    %v3312 = vadd.f32 %v3306, 1e-12
    %v3313 = vadd.f32 %v3307, 1e-12
    %v3314 = vadd.f32 %v3308, 1e-12
    %v3315 = vadd.f32 %v3309, 1e-12
    %v3316 = vadd.f32 %v3310, 1e-12
    %v3317 = vrsqrt.pop %v3311
    %v3318 = vrsqrt.pop %v3312
    %v3319 = vrsqrt.pop %v3313
    %v3320 = vrsqrt.pop %v3314
    %v3321 = vrsqrt.pop %v3315
    %v3322 = vrsqrt.pop %v3316
    %v3323 = vmul.f32 %v3275, %v3317
    %v3324 = vmul.f32 %v3276, %v3318
    %v3325 = vmul.f32 %v3277, %v3319
    %v3326 = vmul.f32 %v3278, %v3320
    %v3327 = vmul.f32 %v3279, %v3321
    %v3328 = vmul.f32 %v3280, %v3322
    %v3329 = vlaneseq
    %v3330 = vshrl.u32 %v3329, 7
    %v3331 = vsub.s32 0, %v3330
    %v3332 = vrot.slane %v3249, %v3331
    %v3333 = vmul.f32 %v3323, %v3332
    %v3334 = vmul.f32 %v3324, %v3332
    %v3335 = vmul.f32 %v3325, %v3332
    %v3336 = vmul.f32 %v3326, %v3332
    %v3337 = vmul.f32 %v3327, %v3332
    %v3338 = vmul.f32 %v3328, %v3332
    %v3339 = vlaneseq
    %v3340 = vshrl.u32 %v3339, 7
    %v3341 = vsub.s32 0, %v3340
    %v3342 = vrot.slane %v3250, %v3341
    %v3343 = vadd.f32 %v3333, %v3342
    %v3344 = vadd.f32 %v3334, %v3342
    %v3345 = vadd.f32 %v3335, %v3342
    %v3346 = vadd.f32 %v3336, %v3342
    %v3347 = vadd.f32 %v3337, %v3342
    %v3348 = vadd.f32 %v3338, %v3342
    %v3349 = vpack.c.bf16 %v3344, %v3343
    %v3350 = vpack.c.bf16 %v3346, %v3345
    %v3351 = vpack.c.bf16 %v3348, %v3347
    %v3352 = vld [vmem:[%s1 + $0xa8] sm:$0xf]
    %v3353 = vld [vmem:[%s1 + $0xac] sm:$0xf]
    %v3354 = vld [vmem:[%s1 + $0xb0] sm:$0xf]
    %v3355 = vld [vmem:[%s1 + $0xb4] sm:$0xf]
    %v3356 = vld [vmem:[%s2 + $0xe] sm:$0x1]
    %v3357 = vlaneseq
    %v3358 = vshrl.u32 %v3357, 7
    %v3359 = vsub.s32 0, %v3358
    %v3360 = vrot.slane %v3356, %v3359
    %v3365 = vunpack.c.l.b16 %v3352
    %v3366 = vunpack.c.l.b16 %v3353
    %v3367 = vunpack.c.l.b16 %v3354
    %v3368 = vunpack.c.l.b16 %v3355
    %v3369 = vpack.c.b16 %v3366, %v3365
    %v3370 = vpack.c.b16 %v3368, %v3367
    %v3374 = vsel %vm130, %v3349, 0
    %v3377 = vsel %vm130, %v3350, 0
    %v3380 = vsel %vm130, %v3351, 0
    %3382 = vmatprep.subr.bf16.mxu0 0
    %3383 = vmatpush1.bf16.msra.mxu0 %v3369
    %3384 = vmatprep.subr.bf16.mxu0 0
    %3385 = vmatpush1.bf16.msra.mxu0 %v3370
    %3386 = vmatprep.subr.bf16.mxu0 0
    %3387 = vmatpush1.bf16.msra.mxu0 0
    %3388 = vmatprep.subr.bf16.mxu0 0
    %3389 = vmatpush1.bf16.msra.mxu0 0
    %3390 = vmatprep.subr.bf16.mxu0 0
    %3391 = vmatpush1.bf16.msra.mxu0 0
    %3392 = vmatprep.subr.bf16.mxu0 0
    %3393 = vmatpush1.bf16.msra.mxu0 0
    %3394 = vmatprep.subr.bf16.mxu0 0
    %3395 = vmatpush1.bf16.msra.mxu0 0
    %3396 = vmatprep.subr.bf16.mxu0 0
    %3397 = vmatpush1.bf16.msra.mxu0 0
    %3398 = vmatprep.subr.bf16.mxu0 0
    %3399 = vmatpush1.bf16.msra.mxu0 0
    %3400 = vmatprep.subr.bf16.mxu0 0
    %3401 = vmatpush1.bf16.msra.mxu0 0
    %3402 = vmatprep.subr.bf16.mxu0 0
    %3403 = vmatpush1.bf16.msra.mxu0 0
    %3404 = vmatprep.subr.bf16.mxu0 0
    %3405 = vmatpush1.bf16.msra.mxu0 0
    %3406 = vmatprep.subr.bf16.mxu0 0
    %3407 = vmatpush1.bf16.msra.mxu0 0
    %3408 = vmatprep.subr.bf16.mxu0 0
    %3409 = vmatpush1.bf16.msra.mxu0 0
    %3410 = vmatprep.subr.bf16.mxu0 0
    %3411 = vmatpush1.bf16.msra.mxu0 0
    %3412 = vmatprep.subr.bf16.mxu0 0
    %3413 = vmatpush1.bf16.msra.mxu0 0
    %3414 = vmatprep.mubr.bf16.mxu0 0
    %3415 = vmatmul.mubr.bf16.gmra.mrb[0].mxu0 %v3374
    %v3416 = vpop.f32.mrb[0].mxu0
    %v3417 = vadd.f32 %v3360, %v3416
    %v3418 = vpop.f32.mrb[0].mxu0
    %v3419 = vpop.f32.mrb[0].mxu0
    %v3420 = vadd.f32 %v3360, %v3419
    %v3421 = vpop.f32.mrb[0].mxu0
    %3422 = vmatprep.mubr.bf16.mxu0 0
    %3423 = vmatmul.mubr.bf16.gmra.mrb[0].mxu0 %v3377
    %v3424 = vpop.f32.mrb[0].mxu0
    %v3425 = vadd.f32 %v3360, %v3424
    %v3426 = vpop.f32.mrb[0].mxu0
    %v3427 = vpop.f32.mrb[0].mxu0
    %v3428 = vadd.f32 %v3360, %v3427
    %v3429 = vpop.f32.mrb[0].mxu0
    %3430 = vmatprep.mubr.bf16.mxu0 0
    %3431 = vmatmul.mubr.bf16.gmra.mrb[0].mxu0 %v3380
    %v3432 = vpop.f32.mrb[0].mxu0
    %v3433 = vadd.f32 %v3360, %v3432
    %v3434 = vpop.f32.mrb[0].mxu0
    %v3435 = vpop.f32.mrb[0].mxu0
    %v3436 = vadd.f32 %v3360, %v3435
    %v3437 = vpop.f32.mrb[0].mxu0
    %3438 = vdwg.mxu0
    %v3439 = vmul.f32 %v3417, %v3417
    %v3440 = vmul.f32 %v3420, %v3420
    %v3441 = vmul.f32 %v3425, %v3425
    %v3442 = vmul.f32 %v3428, %v3428
    %v3443 = vmul.f32 %v3433, %v3433
    %v3444 = vmul.f32 %v3436, %v3436
    %v3445 = vmul.f32 %v3417, %v3439
    %v3446 = vmul.f32 %v3420, %v3440
    %v3447 = vmul.f32 %v3425, %v3441
    %v3448 = vmul.f32 %v3428, %v3442
    %v3449 = vmul.f32 %v3433, %v3443
    %v3450 = vmul.f32 %v3436, %v3444
    %v3451 = vmul.f32 %v3445, 0.044715
    %v3452 = vmul.f32 %v3446, 0.044715
    %v3453 = vmul.f32 %v3447, 0.044715
    %v3454 = vmul.f32 %v3448, 0.044715
    %v3455 = vmul.f32 %v3449, 0.044715
    %v3456 = vmul.f32 %v3450, 0.044715
    %v3457 = vadd.f32 %v3417, %v3451
    %v3458 = vadd.f32 %v3420, %v3452
    %v3459 = vadd.f32 %v3425, %v3453
    %v3460 = vadd.f32 %v3428, %v3454
    %v3461 = vadd.f32 %v3433, %v3455
    %v3462 = vadd.f32 %v3436, %v3456
    %v3463 = vmul.f32 %v3457, 0.7978846
    %v3464 = vmul.f32 %v3458, 0.7978846
    %v3465 = vmul.f32 %v3459, 0.7978846
    %v3466 = vmul.f32 %v3460, 0.7978846
    %v3467 = vmul.f32 %v3461, 0.7978846
    %v3468 = vmul.f32 %v3462, 0.7978846
    %v3469 = vtanh.pop %v3463
    %v3470 = vtanh.pop %v3464
    %v3471 = vtanh.pop %v3465
    %v3472 = vtanh.pop %v3466
    %v3473 = vtanh.pop %v3467
    %v3474 = vtanh.pop %v3468
    %v3475 = vadd.f32 %v3469, 1.0
    %v3476 = vadd.f32 %v3470, 1.0
    %v3477 = vadd.f32 %v3471, 1.0
    %v3478 = vadd.f32 %v3472, 1.0
    %v3479 = vadd.f32 %v3473, 1.0
    %v3480 = vadd.f32 %v3474, 1.0
    %v3481 = vmul.f32 %v3475, 0.5
    %v3482 = vmul.f32 %v3476, 0.5
    %v3483 = vmul.f32 %v3477, 0.5
    %v3484 = vmul.f32 %v3478, 0.5
    %v3485 = vmul.f32 %v3479, 0.5
    %v3486 = vmul.f32 %v3480, 0.5
    %v3487 = vmul.f32 %v3417, %v3481
    %v3488 = vmul.f32 %v3420, %v3482
    %v3489 = vmul.f32 %v3425, %v3483
    %v3490 = vmul.f32 %v3428, %v3484
    %v3491 = vmul.f32 %v3433, %v3485
    %v3492 = vmul.f32 %v3436, %v3486
    %v3493 = vpack.c.bf16 %v3488, %v3487
    %v3494 = vpack.c.bf16 %v3490, %v3489
    %v3495 = vpack.c.bf16 %v3492, %v3491
    %v3496 = vld [vmem:[%s1 + $0xb8] sm:$0xf]
    %v3497 = vld [vmem:[%s1 + $0xbc] sm:$0xf]
    %v3498 = vld [vmem:[%s1 + $0xc0] sm:$0xf]
    %v3499 = vld [vmem:[%s1 + $0xc4] sm:$0xf]
    %v3500 = vld [vmem:[%s1 + $0xc8] sm:$0xf]
    %v3501 = vld [vmem:[%s1 + $0xcc] sm:$0xf]
    %v3502 = vld [vmem:[%s1 + $0xd0] sm:$0xf]
    %v3503 = vld [vmem:[%s1 + $0xd4] sm:$0xf]
    %v3504 = vld [vmem:[%s2 + $0xf] sm:$0x1]
    %v3505 = vlaneseq
    %v3506 = vshrl.u32 %v3505, 7
    %v3507 = vsub.s32 0, %v3506
    %v3508 = vrot.slane %v3504, %v3507
    %v3517 = vunpack.c.l.b16 %v3496
    %v3518 = vunpack.c.l.b16 %v3497
    %v3519 = vunpack.c.l.b16 %v3498
    %v3520 = vunpack.c.l.b16 %v3499
    %v3521 = vunpack.c.l.b16 %v3500
    %v3522 = vunpack.c.l.b16 %v3501
    %v3523 = vunpack.c.l.b16 %v3502
    %v3524 = vunpack.c.l.b16 %v3503
    %v3525 = vpack.c.b16 %v3518, %v3517
    %v3526 = vpack.c.b16 %v3520, %v3519
    %v3527 = vpack.c.b16 %v3522, %v3521
    %v3528 = vpack.c.b16 %v3524, %v3523
    %v3534 = vsel %vm1801, %v3493, 0
    %v3537 = vsel %vm1801, %v3494, 0
    %v3540 = vsel %vm1801, %v3495, 0
    %3542 = vmatprep.subr.bf16.mxu0 0
    %3543 = vmatpush1.bf16.msra.mxu0 %v3525
    %3544 = vmatprep.subr.bf16.mxu0 0
    %3545 = vmatpush1.bf16.msra.mxu0 %v3526
    %3546 = vmatprep.subr.bf16.mxu0 0
    %3547 = vmatpush1.bf16.msra.mxu0 %v3527
    %3548 = vmatprep.subr.bf16.mxu0 0
    %3549 = vmatpush1.bf16.msra.mxu0 %v3528
    %3550 = vmatprep.subr.bf16.mxu0 0
    %3551 = vmatpush1.bf16.msra.mxu0 0
    %3552 = vmatprep.subr.bf16.mxu0 0
    %3553 = vmatpush1.bf16.msra.mxu0 0
    %3554 = vmatprep.subr.bf16.mxu0 0
    %3555 = vmatpush1.bf16.msra.mxu0 0
    %3556 = vmatprep.subr.bf16.mxu0 0
    %3557 = vmatpush1.bf16.msra.mxu0 0
    %3558 = vmatprep.subr.bf16.mxu0 0
    %3559 = vmatpush1.bf16.msra.mxu0 0
    %3560 = vmatprep.subr.bf16.mxu0 0
    %3561 = vmatpush1.bf16.msra.mxu0 0
    %3562 = vmatprep.subr.bf16.mxu0 0
    %3563 = vmatpush1.bf16.msra.mxu0 0
    %3564 = vmatprep.subr.bf16.mxu0 0
    %3565 = vmatpush1.bf16.msra.mxu0 0
    %3566 = vmatprep.subr.bf16.mxu0 0
    %3567 = vmatpush1.bf16.msra.mxu0 0
    %3568 = vmatprep.subr.bf16.mxu0 0
    %3569 = vmatpush1.bf16.msra.mxu0 0
    %3570 = vmatprep.subr.bf16.mxu0 0
    %3571 = vmatpush1.bf16.msra.mxu0 0
    %3572 = vmatprep.subr.bf16.mxu0 0
    %3573 = vmatpush1.bf16.msra.mxu0 0
    %3574 = vmatprep.mubr.bf16.mxu0 0
    %3575 = vmatmul.mubr.bf16.gmra.mrb[0].mxu0 %v3534
    %v3576 = vpop.f32.mrb[0].mxu0
    %v3577 = vadd.f32 %v3508, %v3576
    %v3578 = vpop.f32.mrb[0].mxu0
    %v3579 = vpop.f32.mrb[0].mxu0
    %v3580 = vadd.f32 %v3508, %v3579
    %v3581 = vpop.f32.mrb[0].mxu0
    %3582 = vmatprep.mubr.bf16.mxu0 0
    %3583 = vmatmul.mubr.bf16.gmra.mrb[0].mxu0 %v3537
    %v3584 = vpop.f32.mrb[0].mxu0
    %v3585 = vadd.f32 %v3508, %v3584
    %v3586 = vpop.f32.mrb[0].mxu0
    %v3587 = vpop.f32.mrb[0].mxu0
    %v3588 = vadd.f32 %v3508, %v3587
    %v3589 = vpop.f32.mrb[0].mxu0
    %3590 = vmatprep.mubr.bf16.mxu0 0
    %3591 = vmatmul.mubr.bf16.gmra.mrb[0].mxu0 %v3540
    %v3592 = vpop.f32.mrb[0].mxu0
    %v3593 = vadd.f32 %v3508, %v3592
    %v3594 = vpop.f32.mrb[0].mxu0
    %v3595 = vpop.f32.mrb[0].mxu0
    %v3596 = vadd.f32 %v3508, %v3595
    %v3597 = vpop.f32.mrb[0].mxu0
    %3598 = vdwg.mxu0
    %v3599 = vadd.f32 %v3243, %v3577
    %v3600 = vadd.f32 %v3244, %v3580
    %v3601 = vadd.f32 %v3245, %v3585
    %v3602 = vadd.f32 %v3246, %v3588
    %v3603 = vadd.f32 %v3247, %v3593
    %v3604 = vadd.f32 %v3248, %v3596
    %v3605 = vld [vmem:[%s2 + $0x10] sm:$0x1]
    %v3606 = vld [vmem:[%s2 + $0x11] sm:$0x1]
    %v3607 = vsel %vm130, %v3599, 0.0
    %3608 = vadd.xlane.f32.xlu0 %v3607
    %v3609 = vpop.xlane.xlu0 %3608
    %v3610 = vsel %vm130, %v3600, 0.0
    %3611 = vadd.xlane.f32.xlu0 %v3610
    %v3612 = vpop.xlane.xlu0 %3611
    %v3613 = vsel %vm130, %v3601, 0.0
    %3614 = vadd.xlane.f32.xlu0 %v3613
    %v3615 = vpop.xlane.xlu0 %3614
    %v3616 = vsel %vm130, %v3602, 0.0
    %3617 = vadd.xlane.f32.xlu0 %v3616
    %v3618 = vpop.xlane.xlu0 %3617
    %v3619 = vsel %vm130, %v3603, 0.0
    %3620 = vadd.xlane.f32.xlu0 %v3619
    %v3621 = vpop.xlane.xlu0 %3620
    %v3622 = vsel %vm130, %v3604, 0.0
    %3623 = vadd.xlane.f32.xlu0 %v3622
    %v3624 = vpop.xlane.xlu0 %3623
    %v3625 = vmul.f32 %v3609, %v149
    %v3626 = vmul.f32 %v3612, %v149
    %v3627 = vmul.f32 %v3615, %v149
    %v3628 = vmul.f32 %v3618, %v149
    %v3629 = vmul.f32 %v3621, %v149
    %v3630 = vmul.f32 %v3624, %v149
    %v3631 = vsub.f32 %v3599, %v3625
    %v3632 = vsub.f32 %v3600, %v3626
    %v3633 = vsub.f32 %v3601, %v3627
    %v3634 = vsub.f32 %v3602, %v3628
    %v3635 = vsub.f32 %v3603, %v3629
    %v3636 = vsub.f32 %v3604, %v3630
    %v3637 = vmul.f32 %v3631, %v3631
    %v3638 = vmul.f32 %v3632, %v3632
    %v3639 = vmul.f32 %v3633, %v3633
    %v3640 = vmul.f32 %v3634, %v3634
    %v3641 = vmul.f32 %v3635, %v3635
    %v3642 = vmul.f32 %v3636, %v3636
    %v3643 = vsel %vm130, %v3637, 0.0
    %3644 = vadd.xlane.f32.xlu0 %v3643
    %v3645 = vpop.xlane.xlu0 %3644
    %v3646 = vsel %vm130, %v3638, 0.0
    %3647 = vadd.xlane.f32.xlu0 %v3646
    %v3648 = vpop.xlane.xlu0 %3647
    %v3649 = vsel %vm130, %v3639, 0.0
    %3650 = vadd.xlane.f32.xlu0 %v3649
    %v3651 = vpop.xlane.xlu0 %3650
    %v3652 = vsel %vm130, %v3640, 0.0
    %3653 = vadd.xlane.f32.xlu0 %v3652
    %v3654 = vpop.xlane.xlu0 %3653
    %v3655 = vsel %vm130, %v3641, 0.0
    %3656 = vadd.xlane.f32.xlu0 %v3655
    %v3657 = vpop.xlane.xlu0 %3656
    %v3658 = vsel %vm130, %v3642, 0.0
    %3659 = vadd.xlane.f32.xlu0 %v3658
    %v3660 = vpop.xlane.xlu0 %3659
    %v3661 = vmul.f32 %v3645, %v149
    %v3662 = vmul.f32 %v3648, %v149
    %v3663 = vmul.f32 %v3651, %v149
    %v3664 = vmul.f32 %v3654, %v149
    %v3665 = vmul.f32 %v3657, %v149
    %v3666 = vmul.f32 %v3660, %v149
    %v3667 = vadd.f32 %v3661, 1e-12
    %v3668 = vadd.f32 %v3662, 1e-12
    %v3669 = vadd.f32 %v3663, 1e-12
    %v3670 = vadd.f32 %v3664, 1e-12
    %v3671 = vadd.f32 %v3665, 1e-12
    %v3672 = vadd.f32 %v3666, 1e-12
    %v3673 = vrsqrt.pop %v3667
    %v3674 = vrsqrt.pop %v3668
    %v3675 = vrsqrt.pop %v3669
    %v3676 = vrsqrt.pop %v3670
    %v3677 = vrsqrt.pop %v3671
    %v3678 = vrsqrt.pop %v3672
    %v3679 = vmul.f32 %v3631, %v3673
    %v3680 = vmul.f32 %v3632, %v3674
    %v3681 = vmul.f32 %v3633, %v3675
    %v3682 = vmul.f32 %v3634, %v3676
    %v3683 = vmul.f32 %v3635, %v3677
    %v3684 = vmul.f32 %v3636, %v3678
    %v3685 = vlaneseq
    %v3686 = vshrl.u32 %v3685, 7
    %v3687 = vsub.s32 0, %v3686
    %v3688 = vrot.slane %v3605, %v3687
    %v3689 = vmul.f32 %v3679, %v3688
    %v3690 = vmul.f32 %v3680, %v3688
    %v3691 = vmul.f32 %v3681, %v3688
    %v3692 = vmul.f32 %v3682, %v3688
    %v3693 = vmul.f32 %v3683, %v3688
    %v3694 = vmul.f32 %v3684, %v3688
    %v3695 = vlaneseq
    %v3696 = vshrl.u32 %v3695, 7
    %v3697 = vsub.s32 0, %v3696
    %v3698 = vrot.slane %v3606, %v3697
    %v3699 = vadd.f32 %v3689, %v3698
    %v3700 = vadd.f32 %v3690, %v3698
    %v3701 = vadd.f32 %v3691, %v3698
    %v3702 = vadd.f32 %v3692, %v3698
    %v3703 = vadd.f32 %v3693, %v3698
    %v3704 = vadd.f32 %v3694, %v3698
    %v3705 = vld [vmem:[%s2 + $0x38] sm:$0x3]
    %v3707 = vsel %vm55, %v3705, 0
    %3709 = vmatprep.subr.mxu0 0.0
    %3710 = vmatpush1.msra.mxu0 %v3699
    %3711 = vmatprep.subr.mxu0 0.0
    %3712 = vmatpush1.msra.mxu0 %v3700
    %3713 = vmatprep.subr.mxu0 0.0
    %3714 = vmatpush1.msra.mxu0 %v3701
    %3715 = vmatprep.subr.mxu0 0.0
    %3716 = vmatpush1.msra.mxu0 %v3702
    %3717 = vmatprep.subr.mxu0 0.0
    %3718 = vmatpush1.msra.mxu0 %v3703
    %3719 = vmatprep.subr.mxu0 0.0
    %3720 = vmatpush1.msra.mxu0 %v3704
    %3721 = vmatprep.subr.mxu0 0.0
    %3722 = vmatpush1.msra.mxu0 0.0
    %3723 = vmatprep.subr.mxu0 0.0
    %3724 = vmatpush1.msra.mxu0 0.0
    %3725 = vmatprep.subr.mxu0 0.0
    %3726 = vmatpush1.msra.mxu0 0.0
    %3727 = vmatprep.subr.mxu0 0.0
    %3728 = vmatpush1.msra.mxu0 0.0
    %3729 = vmatprep.subr.mxu0 0.0
    %3730 = vmatpush1.msra.mxu0 0.0
    %3731 = vmatprep.subr.mxu0 0.0
    %3732 = vmatpush1.msra.mxu0 0.0
    %3733 = vmatprep.subr.mxu0 0.0
    %3734 = vmatpush1.msra.mxu0 0.0
    %3735 = vmatprep.subr.mxu0 0.0
    %3736 = vmatpush1.msra.mxu0 0.0
    %3737 = vmatprep.subr.mxu0 0.0
    %3738 = vmatpush1.msra.mxu0 0.0
    %3739 = vmatprep.subr.mxu0 0.0
    %3740 = vmatpush1.msra.mxu0 0.0
    %3741 = vmatprep.subr.mxu0 0.0
    %3742 = vmatpush1.msra.mxu0 0.0
    %3743 = vmatprep.subr.mxu0 0.0
    %3744 = vmatpush1.msra.mxu0 0.0
    %3745 = vmatprep.subr.mxu0 0.0
    %3746 = vmatpush1.msra.mxu0 0.0
    %3747 = vmatprep.subr.mxu0 0.0
    %3748 = vmatpush1.msra.mxu0 0.0
    %3749 = vmatprep.subr.mxu0 0.0
    %3750 = vmatpush1.msra.mxu0 0.0
    %3751 = vmatprep.subr.mxu0 0.0
    %3752 = vmatpush1.msra.mxu0 0.0
    %3753 = vmatprep.subr.mxu0 0.0
    %3754 = vmatpush1.msra.mxu0 0.0
    %3755 = vmatprep.subr.mxu0 0.0
    %3756 = vmatpush1.msra.mxu0 0.0
    %3757 = vmatprep.subr.mxu0 0.0
    %3758 = vmatpush1.msra.mxu0 0.0
    %3759 = vmatprep.subr.mxu0 0.0
    %3760 = vmatpush1.msra.mxu0 0.0
    %3761 = vmatprep.subr.mxu0 0.0
    %3762 = vmatpush1.msra.mxu0 0.0
    %3763 = vmatprep.subr.mxu0 0.0
    %3764 = vmatpush1.msra.mxu0 0.0
    %3765 = vmatprep.subr.mxu0 0.0
    %3766 = vmatpush1.msra.mxu0 0.0
    %3767 = vmatprep.subr.mxu0 0.0
    %3768 = vmatpush1.msra.mxu0 0.0
    %3769 = vmatprep.subr.mxu0 0.0
    %3770 = vmatpush1.msra.mxu0 0.0
    %3771 = vmatprep.subr.mxu0 0.0
    %3772 = vmatpush1.msra.mxu0 0.0
    %3773 = vmatprep.mubr.f32.mxu0 0.0
    %3774 = vmatmul.mubr.f32.gmra.mrb[0].mxu0 %v3707
    %v3775 = vpop.f32.mrb[0].mxu0
    %v3776 = vadd.f32 0.0, %v3775
    %v3777 = vpop.f32.mrb[0].mxu0
    %3778 = vdwg.mxu0
    %v3779 = vpack.c.bf16 %v3776, %v3776
    %v3780 = vld [vmem:[%s1 + $0xd8] sm:$0xf]
    %v3781 = vld [vmem:[%s1 + $0xdc] sm:$0xf]
    %v3782 = vld [vmem:[%s1 + $0xe0] sm:$0xf]
    %v3783 = vld [vmem:[%s1 + $0xe4] sm:$0xf]
    %v3784 = vld [vmem:[%s2 + $0x12] sm:$0x1]
    %v3785 = vlaneseq
    %v3786 = vshrl.u32 %v3785, 7
    %v3787 = vsub.s32 0, %v3786
    %v3788 = vrot.slane %v3784, %v3787
    %v3793 = vunpack.c.l.b16 %v3780
    %v3794 = vunpack.c.l.b16 %v3781
    %v3795 = vunpack.c.l.b16 %v3782
    %v3796 = vunpack.c.l.b16 %v3783
    %v3797 = vpack.c.b16 %v3794, %v3793
    %v3798 = vpack.c.b16 %v3796, %v3795
    %v3802 = vsel %vm130, %v3779, 0
    %3804 = vmatprep.subr.bf16.mxu0 0
    %3805 = vmatpush1.bf16.msra.mxu0 %v3797
    %3806 = vmatprep.subr.bf16.mxu0 0
    %3807 = vmatpush1.bf16.msra.mxu0 %v3798
    %3808 = vmatprep.subr.bf16.mxu0 0
    %3809 = vmatpush1.bf16.msra.mxu0 0
    %3810 = vmatprep.subr.bf16.mxu0 0
    %3811 = vmatpush1.bf16.msra.mxu0 0
    %3812 = vmatprep.subr.bf16.mxu0 0
    %3813 = vmatpush1.bf16.msra.mxu0 0
    %3814 = vmatprep.subr.bf16.mxu0 0
    %3815 = vmatpush1.bf16.msra.mxu0 0
    %3816 = vmatprep.subr.bf16.mxu0 0
    %3817 = vmatpush1.bf16.msra.mxu0 0
    %3818 = vmatprep.subr.bf16.mxu0 0
    %3819 = vmatpush1.bf16.msra.mxu0 0
    %3820 = vmatprep.subr.bf16.mxu0 0
    %3821 = vmatpush1.bf16.msra.mxu0 0
    %3822 = vmatprep.subr.bf16.mxu0 0
    %3823 = vmatpush1.bf16.msra.mxu0 0
    %3824 = vmatprep.subr.bf16.mxu0 0
    %3825 = vmatpush1.bf16.msra.mxu0 0
    %3826 = vmatprep.subr.bf16.mxu0 0
    %3827 = vmatpush1.bf16.msra.mxu0 0
    %3828 = vmatprep.subr.bf16.mxu0 0
    %3829 = vmatpush1.bf16.msra.mxu0 0
    %3830 = vmatprep.subr.bf16.mxu0 0
    %3831 = vmatpush1.bf16.msra.mxu0 0
    %3832 = vmatprep.subr.bf16.mxu0 0
    %3833 = vmatpush1.bf16.msra.mxu0 0
    %3834 = vmatprep.subr.bf16.mxu0 0
    %3835 = vmatpush1.bf16.msra.mxu0 0
    %3836 = vmatprep.mubr.bf16.mxu0 0
    %3837 = vmatmul.mubr.bf16.gmra.mrb[0].mxu0 %v3802
    %v3838 = vpop.f32.mrb[0].mxu0
    %v3839 = vadd.f32 %v3788, %v3838
    %v3840 = vpop.f32.mrb[0].mxu0
    %v3841 = vpop.f32.mrb[0].mxu0
    %v3842 = vpop.f32.mrb[0].mxu0
    %3843 = vdwg.mxu0
    %3844 = vst [vmem:[#allocation2] sm:$0x3] %v3839
    // Predicated region
    $region14: #{custom_model_forward.1} parent=1 // pred_check
      _
    $region15: #{custom_model_forward.1} parent=1 // pred_check_branch
      %3846 = sbr.rel (0) target = $region17
    $region16: #{custom_model_forward.1} parent=1 // pred_region
      %s3848 = ssub.s32 32, 32
      %3849 = vsyncadd [#allocation3], %s3848
      %s3851 = sshll.u32 [#allocation2], 4
      %s3852 = int_to_ptr.vmem [resolvable:$true] %s3851
      %3854 = dma.vmem_to_hbm [thread:$0]  %s3852, 32, %s3, [#allocation3]
    $region17: #{custom_model_forward.1} parent=1 // pred_fallthru
      _
    // Predicated region
    $region18: #{custom_model_forward.1} parent=1 // pred_check
      _
    $region19: #{custom_model_forward.1} parent=1 // pred_check_branch
      %3856 = sbr.rel (0) target = $region21
    $region20: #{custom_model_forward.1} parent=1 // pred_region
      %3857 = dma.done [#allocation3], 32
    $region21: #{custom_model_forward.1} parent=1 // pred_fallthru
      _
    %3858 = vsyncpa [#allocation3], 1

</llo_original>
